<compile_context>
chip_gen: v7x
topology: tpu7x:2x2x1
jax: 0.10.0
libtpu: 0.0.40
codegen_flags: <defaults>
</compile_context>

<pallas_src>
import functools

import jax
import jax.numpy as jnp
from jax.experimental import pallas as pl
from jax.experimental.pallas import tpu as pltpu


def _mlp_kernel(x_ref, wg_ref, wu_ref, wd_ref, o_ref, acc_ref, *, n_mt):
    """One grid step: (T-tile i, m-tile j).

    x_ref  : [tt, hd]   activation tile (resident across the inner m axis)
    wg_ref : [hd, tm]   gate_proj weight tile (transposed, block-contiguous)
    wu_ref : [hd, tm]   up_proj weight tile (transposed, block-contiguous)
    wd_ref : [tm, hd]   down_proj weight tile (transposed)
    o_ref  : [tt, hd]   output tile (written on the last m step)
    acc_ref: VMEM f32 [tt, hd] accumulator over m tiles
    """
    j = pl.program_id(1)
    x = x_ref[...]

    # Two separate MXU contractions (instead of one fused [hd, 2*tm] weight +
    # lane slices): identical vmatmul count, no [tt, 2*tm] f32 intermediate.
    g = jnp.dot(x, wg_ref[...], preferred_element_type=jnp.float32)   # [tt, tm]
    u = jnp.dot(x, wu_ref[...], preferred_element_type=jnp.float32)   # [tt, tm]

    # SiLU(g) * u  -- elementwise on VPU, sigmoid on EUP.
    h = (g * jax.nn.sigmoid(g)) * u                                   # [tt, tm] f32

    # Partial down-projection for this m tile.
    partial = jnp.dot(h.astype(wd_ref.dtype), wd_ref[...],
                      preferred_element_type=jnp.float32)             # [tt, hd] f32

    if n_mt == 1:
        o_ref[...] = partial.astype(o_ref.dtype)
    else:
        @pl.when(j == 0)
        def _():
            acc_ref[...] = partial

        @pl.when(jnp.logical_and(j > 0, j < n_mt - 1))
        def _():
            acc_ref[...] += partial

        @pl.when(j == n_mt - 1)
        def _():
            # Fold the last partial into the output store directly; avoids one
            # full [tt, hd] f32 accumulator write + re-read on the epilogue.
            o_ref[...] = (acc_ref[...] + partial).astype(o_ref.dtype)


def pack_weights(w_gate, w_up, w_down, *, tm):
    """Pack PyTorch-layout (out, in) weights into the kernel layout.

    Returns:
      wg_p: [n_mt, hd, tm]  gate_proj.T, one contiguous HBM block per m-tile
      wu_p: [n_mt, hd, tm]  up_proj.T, same layout
      wd_t: [m, hd]         down_proj.T (its m-tile row blocks are already contiguous)
    """
    m, hd = w_gate.shape
    assert m % tm == 0, "m must be divisible by the m-tile size"

    def to_blocks(w):   # (m, hd) -> (n_mt, hd, tm), block j = w.T[:, j*tm:(j+1)*tm]
        return jnp.transpose(w.T.reshape(hd, m // tm, tm), (1, 0, 2))

    return to_blocks(w_gate), to_blocks(w_up), w_down.T


def _largest_divisor_tile(n, target, granule):
    """Largest multiple of `granule` that divides n and is <= target (else n)."""
    target = max(granule, min(int(target), n))
    for d in range(target - target % granule, granule - 1, -granule):
        if n % d == 0:
            return d
    return n   # full extent is always a legal block size


def _vmem_bytes(tt, tm, hd, itemsize, weight_buffers=2):
    """Upper-bound VMEM footprint of one pipelined grid step."""
    act = 2 * tt * hd * itemsize                      # x tiles (double-buffered)
    out = 2 * tt * hd * itemsize                      # out tiles (double-buffered)
    wgt = weight_buffers * 3 * hd * tm * itemsize     # gate + up + down weight tiles
    acc = tt * hd * 4                                 # f32 accumulator scratch
    inter = 3 * tt * tm * 4 + tt * hd * 4             # f32 g/u/h + partial intermediates
    headroom = 4 << 20                                # compiler scratch / spill slack
    return act + out + wgt + acc + inter + headroom


def choose_config(T, hd, m, itemsize=2):
    """Generation-aware (tt, tm, vmem_limit_bytes) selection."""
    try:
        phys_vmem = int(pltpu.get_tpu_info().vmem_capacity_bytes)
    except Exception:
        phys_vmem = 64 << 20                          # conservative (v7x-sized) fallback
    big_vmem = phys_vmem >= (100 << 20)               # v5e / v6e: 128 MiB physical

    # Scoped-VMEM ceiling: ~110 MiB on 128-MiB parts; well below the 64 MiB
    # physical per-TC capacity on v7x so the compiler keeps headroom.
    vmem_cap = (110 << 20) if big_vmem else (54 << 20)

    # m-tile: 512 on 128-MiB parts; 256 on v7x to free VMEM for a larger tt.
    tm = _largest_divisor_tile(m, 512 if big_vmem else 256, 128)

    # Token tile = arithmetic-intensity knob (weights re-streamed once per
    # T-tile): aim for 1024 on 128-MiB parts / 512 on v7x, but keep n_tt >= 2
    # so the parallel T axis can feed both v7x TensorCores on small batches.
    tt_target = 1024 if big_vmem else 512
    if T >= 16:
        tt_target = min(tt_target, T // 2)
    tt = _largest_divisor_tile(T, tt_target, 8)

    # Shrink until the buffer estimate fits under the cap.
    while _vmem_bytes(tt, tm, hd, itemsize) > vmem_cap:
        if tt > 64:
            new_tt = _largest_divisor_tile(T, tt // 2, 8)
            if new_tt < tt:
                tt = new_tt
                continue
        if tm > 128:
            new_tm = _largest_divisor_tile(m, tm // 2, 128)
            if new_tm < tm:
                tm = new_tm
                continue
        break

    vmem_limit = int(min(max(_vmem_bytes(tt, tm, hd, itemsize), 32 << 20), vmem_cap))
    return tt, tm, vmem_limit


def _weight_spec(block_shape, index_map, buffers):
    if buffers > 2:
        try:   # deeper weight-stream buffering (v6e knob); fall back if unsupported
            return pl.BlockSpec(block_shape, index_map,
                                pipeline_mode=pl.Buffered(buffers))
        except TypeError:
            pass
    return pl.BlockSpec(block_shape, index_map)


@functools.partial(
    jax.jit, static_argnames=("tt", "tm", "vmem_limit_bytes", "weight_buffers"))
def mlp_forward(x, wg_p, wu_p, wd_t, *, tt, tm, vmem_limit_bytes, weight_buffers=2):
    """x: [T, hd]; wg_p/wu_p: [n_mt, hd, tm] (packed); wd_t: [m, hd]  ->  [T, hd]."""
    T, hd = x.shape
    m = wd_t.shape[0]
    n_mt = m // tm
    assert m % tm == 0 and tm % 128 == 0, "tm must divide m and be 128-aligned"
    assert T % tt == 0 and (tt % 8 == 0 or tt == T), "tt must divide T and be 8-aligned"
    assert wg_p.shape == (n_mt, hd, tm) and wu_p.shape == (n_mt, hd, tm)
    assert wd_t.shape == (m, hd)

    n_tt = T // tt
    kernel = functools.partial(_mlp_kernel, n_mt=n_mt)

    xbytes = jnp.dtype(x.dtype).itemsize
    wbytes = jnp.dtype(wd_t.dtype).itemsize

    # Advisory cost: 6*T*hd*m matmul flops, T*m sigmoids; weights are
    # re-streamed once per T-tile, activations in+out once.
    cost = pl.CostEstimate(
        flops=6 * T * hd * m,
        transcendentals=T * m,
        bytes_accessed=n_tt * (3 * hd * m) * wbytes + 2 * T * hd * xbytes,
    )

    w_gu_block = (None, hd, tm)   # leading n_mt axis squeezed out in-kernel

    return pl.pallas_call(
        kernel,
        out_shape=jax.ShapeDtypeStruct((T, hd), x.dtype),
        grid_spec=pltpu.PrefetchScalarGridSpec(
            num_scalar_prefetch=0,
            grid=(n_tt, n_mt),
            in_specs=[
                pl.BlockSpec((tt, hd), lambda i, j: (i, 0)),   # x tile (resident over j)
                _weight_spec(w_gu_block, lambda i, j: (j, 0, 0), weight_buffers),  # gate
                _weight_spec(w_gu_block, lambda i, j: (j, 0, 0), weight_buffers),  # up
                _weight_spec((tm, hd), lambda i, j: (j, 0), weight_buffers),       # down
            ],
            out_specs=pl.BlockSpec((tt, hd), lambda i, j: (i, 0)),
            scratch_shapes=[pltpu.VMEM((tt, hd), jnp.float32)],
        ),
        compiler_params=pltpu.CompilerParams(
            dimension_semantics=("parallel", "arbitrary"),
            vmem_limit_bytes=vmem_limit_bytes,
        ),
        cost_estimate=cost,
    )(x, wg_p, wu_p, wd_t)


def reference_mlp(x, w_gate, w_up, w_down):
    """Pure-JAX reference using PyTorch (out, in) weight layout, f32 math."""
    xf = x.astype(jnp.float32)
    g = xf @ w_gate.astype(jnp.float32).T
    u = xf @ w_up.astype(jnp.float32).T
    h = (g * jax.nn.sigmoid(g)) * u
    return (h @ w_down.astype(jnp.float32).T).astype(x.dtype)


if __name__ == "__main__":
    # Small shapes consistent with the module (hd=hidden, m=intermediate),
    # scaled down from hd=4096 / m=14336 for the demo.
    T, hd, m = 256, 512, 1024
    dtype = jnp.bfloat16

    key = jax.random.PRNGKey(0)
    kx, kg, ku, kd = jax.random.split(key, 4)

    x = jax.random.normal(kx, (T, hd), dtype=jnp.float32).astype(dtype)
    # PyTorch Linear weights are (out, in).
    w_gate = (jax.random.normal(kg, (m, hd), dtype=jnp.float32) * 0.02).astype(dtype)
    w_up   = (jax.random.normal(ku, (m, hd), dtype=jnp.float32) * 0.02).astype(dtype)
    w_down = (jax.random.normal(kd, (hd, m), dtype=jnp.float32) * 0.02).astype(dtype)

    tt, tm, vmem_limit = choose_config(T, hd, m, itemsize=jnp.dtype(dtype).itemsize)
    wg_p, wu_p, wd_t = pack_weights(w_gate, w_up, w_down, tm=tm)

    out = mlp_forward(x, wg_p, wu_p, wd_t, tt=tt, tm=tm,
                      vmem_limit_bytes=vmem_limit)
    out = jax.block_until_ready(out)

    ref = reference_mlp(x, w_gate, w_up, w_down)
    err = jnp.max(jnp.abs(out.astype(jnp.float32) - ref.astype(jnp.float32)))
    assert out.shape == (T, hd) and out.dtype == dtype
    assert float(err) < 5e-2, f"max abs error too large: {err}"

    print("KERNEL_OK")
</pallas_src>

<mosaic_0001>
module attributes {stable_mosaic.version = 11 : i64} {
  func.func @_mlp_kernel(%arg0: i32, %arg1: i32, %arg2: memref<128x512xbf16, #tpu.memory_space<vmem>>, %arg3: memref<1x512x256xbf16, #tpu.memory_space<vmem>>, %arg4: memref<1x512x256xbf16, #tpu.memory_space<vmem>>, %arg5: memref<256x512xbf16, #tpu.memory_space<vmem>>, %arg6: memref<128x512xbf16, #tpu.memory_space<vmem>>, %arg7: memref<128x512xf32, #tpu.memory_space<vmem>>) attributes {dimension_semantics = [#tpu.dimension_semantics<parallel>, #tpu.dimension_semantics<arbitrary>], iteration_bounds = array<i64: 2, 4>, scalar_prefetch = 0 : i64, scratch_operands = 1 : i64, tpu.core_type = #tpu.core_type<tc>, window_params = [{transform_indices = @transform_0, window_bounds = array<i64: 128, 512>}, {transform_indices = @transform_1, window_bounds = array<i64: 1, 512, 256>}, {transform_indices = @transform_2, window_bounds = array<i64: 1, 512, 256>}, {transform_indices = @transform_3, window_bounds = array<i64: 256, 512>}, {transform_indices = @transform_4, window_bounds = array<i64: 128, 512>}]} {
    %c0 = arith.constant 0 : index
    %c0_0 = arith.constant 0 : index
    %0 = vector.load %arg2[%c0, %c0_0] : memref<128x512xbf16, #tpu.memory_space<vmem>>, vector<128x512xbf16>
    %c0_1 = arith.constant 0 : index
    %c0_2 = arith.constant 0 : index
    %c0_3 = arith.constant 0 : index
    %1 = vector.load %arg3[%c0_1, %c0_2, %c0_3] : memref<1x512x256xbf16, #tpu.memory_space<vmem>>, vector<1x512x256xbf16>
    %2 = vector.shape_cast %1 : vector<1x512x256xbf16> to vector<512x256xbf16>
    %cst = arith.constant dense<0.000000e+00> : vector<128x256xf32>
    %3 = tpu.matmul %0, %2, %cst {dimension_numbers = #tpu.dot_dimension_numbers<[1], [0], [0], [1], [0, 0, 1, 1], [], []>} : vector<128x512xbf16>, vector<512x256xbf16>, vector<128x256xf32> -> vector<128x256xf32>
    %c0_4 = arith.constant 0 : index
    %c0_5 = arith.constant 0 : index
    %c0_6 = arith.constant 0 : index
    %4 = vector.load %arg4[%c0_4, %c0_5, %c0_6] : memref<1x512x256xbf16, #tpu.memory_space<vmem>>, vector<1x512x256xbf16>
    %5 = vector.shape_cast %4 : vector<1x512x256xbf16> to vector<512x256xbf16>
    %cst_7 = arith.constant dense<0.000000e+00> : vector<128x256xf32>
    %6 = tpu.matmul %0, %5, %cst_7 {dimension_numbers = #tpu.dot_dimension_numbers<[1], [0], [0], [1], [0, 0, 1, 1], [], []>} : vector<128x512xbf16>, vector<512x256xbf16>, vector<128x256xf32> -> vector<128x256xf32>
    %7 = arith.negf %3 : vector<128x256xf32>
    %8 = math.exp %7 : vector<128x256xf32>
    %cst_8 = arith.constant 1.000000e+00 : f32
    %9 = vector.broadcast %cst_8 : f32 to vector<128x256xf32>
    %10 = arith.addf %9, %8 : vector<128x256xf32>
    %11 = arith.divf %9, %10 : vector<128x256xf32>
    %12 = arith.mulf %3, %11 : vector<128x256xf32>
    %13 = arith.mulf %12, %6 : vector<128x256xf32>
    %14 = arith.truncf %13 : vector<128x256xf32> to vector<128x256xbf16>
    %c0_9 = arith.constant 0 : index
    %c0_10 = arith.constant 0 : index
    %15 = vector.load %arg5[%c0_9, %c0_10] : memref<256x512xbf16, #tpu.memory_space<vmem>>, vector<256x512xbf16>
    %cst_11 = arith.constant dense<0.000000e+00> : vector<128x512xf32>
    %16 = tpu.matmul %14, %15, %cst_11 {dimension_numbers = #tpu.dot_dimension_numbers<[1], [0], [0], [1], [0, 0, 1, 1], [], []>} : vector<128x256xbf16>, vector<256x512xbf16>, vector<128x512xf32> -> vector<128x512xf32>
    %c0_i32 = arith.constant 0 : i32
    %17 = arith.cmpi eq, %arg1, %c0_i32 : i32
    %18 = arith.extui %17 : i1 to i32
    %c0_i32_12 = arith.constant 0 : i32
    %19 = arith.cmpi ne, %18, %c0_i32_12 : i32
    scf.if %19 {
      %c0_17 = arith.constant 0 : index
      %c0_18 = arith.constant 0 : index
      %28 = vector.load %arg7[%c0_17, %c0_18] : memref<128x512xf32, #tpu.memory_space<vmem>>, vector<128x512xf32>
      tpu.vector_store %arg7[%c0_17, %c0_18], %16 {strides = array<i32>} : memref<128x512xf32, #tpu.memory_space<vmem>>, vector<128x512xf32>,
    } else {
    }
    %c0_i32_13 = arith.constant 0 : i32
    %20 = arith.cmpi sgt, %arg1, %c0_i32_13 : i32
    %c3_i32 = arith.constant 3 : i32
    %21 = arith.cmpi slt, %arg1, %c3_i32 : i32
    %22 = arith.andi %20, %21 : i1
    %23 = arith.extui %22 : i1 to i32
    %c0_i32_14 = arith.constant 0 : i32
    %24 = arith.cmpi ne, %23, %c0_i32_14 : i32
    scf.if %24 {
      %c0_17 = arith.constant 0 : index
      %c0_18 = arith.constant 0 : index
      %28 = vector.load %arg7[%c0_17, %c0_18] : memref<128x512xf32, #tpu.memory_space<vmem>>, vector<128x512xf32>
      %29 = arith.addf %28, %16 : vector<128x512xf32>
      %c0_19 = arith.constant 0 : index
      %c0_20 = arith.constant 0 : index
      %30 = vector.load %arg7[%c0_19, %c0_20] : memref<128x512xf32, #tpu.memory_space<vmem>>, vector<128x512xf32>
      tpu.vector_store %arg7[%c0_19, %c0_20], %29 {strides = array<i32>} : memref<128x512xf32, #tpu.memory_space<vmem>>, vector<128x512xf32>,
    } else {
    }
    %c3_i32_15 = arith.constant 3 : i32
    %25 = arith.cmpi eq, %arg1, %c3_i32_15 : i32
    %26 = arith.extui %25 : i1 to i32
    %c0_i32_16 = arith.constant 0 : i32
    %27 = arith.cmpi ne, %26, %c0_i32_16 : i32
    scf.if %27 {
      %c0_17 = arith.constant 0 : index
      %c0_18 = arith.constant 0 : index
      %28 = vector.load %arg7[%c0_17, %c0_18] : memref<128x512xf32, #tpu.memory_space<vmem>>, vector<128x512xf32>
      %29 = arith.addf %28, %16 : vector<128x512xf32>
      %30 = arith.truncf %29 : vector<128x512xf32> to vector<128x512xbf16>
      %c0_19 = arith.constant 0 : index
      %c0_20 = arith.constant 0 : index
      %31 = vector.load %arg6[%c0_19, %c0_20] : memref<128x512xbf16, #tpu.memory_space<vmem>>, vector<128x512xbf16>
      tpu.vector_store %arg6[%c0_19, %c0_20], %30 {strides = array<i32>} : memref<128x512xbf16, #tpu.memory_space<vmem>>, vector<128x512xbf16>,
    } else {
    }
    return
  }
  func.func @transform_0(%arg0: i32, %arg1: i32) -> (i32, i32) {
    %c0_i32 = arith.constant 0 : i32
    %c0_i32_0 = arith.constant 0 : i32
    return %arg0, %c0_i32 : i32, i32
  }
  func.func @transform_1(%arg0: i32, %arg1: i32) -> (i32, i32, i32) {
    %c0_i32 = arith.constant 0 : i32
    %c0_i32_0 = arith.constant 0 : i32
    %c0_i32_1 = arith.constant 0 : i32
    return %arg1, %c0_i32, %c0_i32_0 : i32, i32, i32
  }
  func.func @transform_2(%arg0: i32, %arg1: i32) -> (i32, i32, i32) {
    %c0_i32 = arith.constant 0 : i32
    %c0_i32_0 = arith.constant 0 : i32
    %c0_i32_1 = arith.constant 0 : i32
    return %arg1, %c0_i32, %c0_i32_0 : i32, i32, i32
  }
  func.func @transform_3(%arg0: i32, %arg1: i32) -> (i32, i32) {
    %c0_i32 = arith.constant 0 : i32
    %c0_i32_0 = arith.constant 0 : i32
    return %arg1, %c0_i32 : i32, i32
  }
  func.func @transform_4(%arg0: i32, %arg1: i32) -> (i32, i32) {
    %c0_i32 = arith.constant 0 : i32
    %c0_i32_0 = arith.constant 0 : i32
    return %arg0, %c0_i32 : i32, i32
  }
}

</mosaic_0001>

<llo_original>
// kernel: mlp_forward.1
$region0: #{mlp_forward.1}
  #allocation0 [shape = 'u32[]', space=smem, size = 0x4, offset = 0x4, fixed_abs, tag = 'smem constant byte address 0x4 - core index']
  #allocation1 [shape = 'u32[144,128]{1,0:T(1,128)}', space=vmem, size = 0x12000, scoped, tag = 'internal scratch']
  #allocation2 [shape = 'f32[128,512]{1,0:T(8,128)}', space=vmem, size = 0x40000, scoped, tag = 'scratch operand']
  %s0 = inlined_call_operand.hbm [shape: bf16[256,512], index: 0, kind: input, shape index: {}]
  %s1 = inlined_call_operand.hbm [shape: bf16[4,512,256], index: 1, kind: input, shape index: {}]
  %s2 = inlined_call_operand.hbm [shape: bf16[4,512,256], index: 2, kind: input, shape index: {}]
  %s3 = inlined_call_operand.hbm [shape: bf16[1024,512], index: 3, kind: input, shape index: {}]
  %s4 = inlined_call_operand.hbm [shape: bf16[256,512], index: 4, kind: output, shape index: {}]
  %s5 = sld [smem:[#allocation0]]
  $region77: #{mlp_forward.1} parent=0
    _
  %s7 = ssub.s32 1, %s5
  %s8 = scalar_select 0, %s7, %s5
  $region1: #{mlp_forward.1} parent=0
    #allocation3 [shape = 'u8[262144]{0}', space=vmem, size = 0x40000, scoped, tag = 'input window, operand 0']
    #allocation4 [shape = 's32[2]{0}', space=sflag, size = 0x8, scoped, tag = 'scoped memory for mlp_forward.1']
    #allocation5 [shape = 's32[2]{0}', space=sflag, size = 0x8, scoped, tag = 'scoped memory for mlp_forward.1']
    #allocation6 [shape = 'u8[524288]{0}', space=vmem, size = 0x80000, scoped, tag = 'input window, operand 1']
    #allocation7 [shape = 's32[2]{0}', space=sflag, size = 0x8, scoped, tag = 'scoped memory for mlp_forward.1']
    #allocation8 [shape = 'u8[524288]{0}', space=vmem, size = 0x80000, scoped, tag = 'input window, operand 2']
    #allocation9 [shape = 'u8[524288]{0}', space=vmem, size = 0x80000, scoped, tag = 'input window, operand 3']
    #allocation10 [shape = 's32[2]{0}', space=sflag, size = 0x8, scoped, tag = 'scoped memory for mlp_forward.1']
    #allocation11 [shape = 'u8[262144]{0}', space=vmem, size = 0x40000, scoped, tag = 'output window, operand 0']
    %9 = vsyncpa [#allocation4], 0
    %s10 = scalar_lea.sflag [#allocation4], 1
    %11 = vsyncpa %s10, 0
    %12 = vsyncpa [#allocation7], 0
    %s13 = scalar_lea.sflag [#allocation7], 1
    %14 = vsyncpa %s13, 0
    %15 = vsyncpa [#allocation10], 0
    %s16 = scalar_lea.sflag [#allocation10], 1
    %17 = vsyncpa %s16, 0
    %18 = vsyncpa [#allocation5], 0
    %s19 = scalar_lea.sflag [#allocation5], 1
    %20 = vsyncpa %s19, 0
    loop: start=0, step=1, limit=10
    $region2: #{mlp_forward.1} parent=1 // loop_pre_header
      _
    $region3: #{mlp_forward.1} parent=1 // loop_header
      %s22 = sphi 0, %s26
      %p23 = scmp.ge.s32.totalorder %s22, 10
      %s29 = sphi 0, %s41
      %s30 = sphi 0, %s37
      %s31 = sphi 0, %s29
      %s32 = sphi 0, %s30
      %s33 = sphi 0, %s31
      %s34 = sphi 0, %s32
      %s44 = sphi 0, %s46
      %s47 = sphi 0, %s44
      %s48 = sphi 0, %s47
      %s64 = sphi 0, %s48
      %s70 = sphi 0, %s72
      %s73 = sphi 0, %s70
      %s74 = sphi 0, %s73
      %s90 = sphi 0, %s74
      %s96 = sphi 0, %s98
      %s99 = sphi 0, %s96
      %s100 = sphi 0, %s99
      %s116 = sphi 0, %s100
      %s122 = sphi 0, %s124
      %s125 = sphi 0, %s122
      %s126 = sphi 0, %s125
      %s142 = sphi 0, %s126
      %s148 = sphi 0, %s150
      %s151 = sphi 0, %s148
      %s152 = sphi 0, %s151
      %s168 = sphi 0, %s152
    $region4: #{mlp_forward.1} parent=1 // loop_header_branch
      %25 = sbr.rel (%p23) target = $region8
    $region5: #{mlp_forward.1} parent=1 // loop_body
      %s27 = ssub.s32 %s22, 1
      %s28 = ssub.s32 %s22, 2
      %s35 = sadd.s32 1, %s30
      %p36 = scmp.ge.s32.totalorder %s35, 4
      %s37 = scalar_select %p36, 0, %s35
      %s38 = sadd.s32 1, %s29
      %s39 = scalar_select %p36, %s38, %s29
      %p40 = scmp.ge.s32.totalorder %s39, 2
      %s41 = scalar_select %p40, 0, %s39
      %s42 = ssub.s32 %s29, %s41
      %p43 = scmp.eq.s32.totalorder %s42, 0
      %s45 = sadd.s32 %s44, 1
      %s46 = scalar_select %p43, %s44, %s45
      %p49 = pneg %p43
      %p50 = scmp.eq.s32.totalorder %s22, 7
      %p51 = por %p49, %p50
      %p52 = scmp.ne.s32.totalorder %s44, %s47
      %p53 = scmp.eq.s32.totalorder %s22, 0
      %p54 = por %p52, %p53
      %p55 = scmp.ne.s32.totalorder %s44, %s47
      %p56 = scmp.eq.s32.totalorder %s27, 7
      %p57 = por %p55, %p56
      %p58 = scmp.ne.s32.totalorder %s47, %s48
      %p59 = scmp.eq.s32.totalorder %s27, 0
      %p60 = por %p58, %p59
      %p61 = scmp.ne.s32.totalorder %s47, %s48
      %p62 = scmp.eq.s32.totalorder %s28, 7
      %p63 = por %p61, %p62
      %p65 = scmp.ne.s32.totalorder %s48, %s64
      %p66 = scmp.eq.s32.totalorder %s28, 0
      %p67 = por %p65, %p66
      %s68 = ssub.s32 %s30, %s37
      %p69 = scmp.eq.s32.totalorder %s68, 0
      %s71 = sadd.s32 %s70, 1
      %s72 = scalar_select %p69, %s70, %s71
      %p75 = pneg %p69
      %p76 = scmp.eq.s32.totalorder %s22, 7
      %p77 = por %p75, %p76
      %p78 = scmp.ne.s32.totalorder %s70, %s73
      %p79 = scmp.eq.s32.totalorder %s22, 0
      %p80 = por %p78, %p79
      %p81 = scmp.ne.s32.totalorder %s70, %s73
      %p82 = scmp.eq.s32.totalorder %s27, 7
      %p83 = por %p81, %p82
      %p84 = scmp.ne.s32.totalorder %s73, %s74
      %p85 = scmp.eq.s32.totalorder %s27, 0
      %p86 = por %p84, %p85
      %p87 = scmp.ne.s32.totalorder %s73, %s74
      %p88 = scmp.eq.s32.totalorder %s28, 7
      %p89 = por %p87, %p88
      %p91 = scmp.ne.s32.totalorder %s74, %s90
      %p92 = scmp.eq.s32.totalorder %s28, 0
      %p93 = por %p91, %p92
      %s94 = ssub.s32 %s30, %s37
      %p95 = scmp.eq.s32.totalorder %s94, 0
      %s97 = sadd.s32 %s96, 1
      %s98 = scalar_select %p95, %s96, %s97
      %p101 = pneg %p95
      %p102 = scmp.eq.s32.totalorder %s22, 7
      %p103 = por %p101, %p102
      %p104 = scmp.ne.s32.totalorder %s96, %s99
      %p105 = scmp.eq.s32.totalorder %s22, 0
      %p106 = por %p104, %p105
      %p107 = scmp.ne.s32.totalorder %s96, %s99
      %p108 = scmp.eq.s32.totalorder %s27, 7
      %p109 = por %p107, %p108
      %p110 = scmp.ne.s32.totalorder %s99, %s100
      %p111 = scmp.eq.s32.totalorder %s27, 0
      %p112 = por %p110, %p111
      %p113 = scmp.ne.s32.totalorder %s99, %s100
      %p114 = scmp.eq.s32.totalorder %s28, 7
      %p115 = por %p113, %p114
      %p117 = scmp.ne.s32.totalorder %s100, %s116
      %p118 = scmp.eq.s32.totalorder %s28, 0
      %p119 = por %p117, %p118
      %s120 = ssub.s32 %s30, %s37
      %p121 = scmp.eq.s32.totalorder %s120, 0
      %s123 = sadd.s32 %s122, 1
      %s124 = scalar_select %p121, %s122, %s123
      %p127 = pneg %p121
      %p128 = scmp.eq.s32.totalorder %s22, 7
      %p129 = por %p127, %p128
      %p130 = scmp.ne.s32.totalorder %s122, %s125
      %p131 = scmp.eq.s32.totalorder %s22, 0
      %p132 = por %p130, %p131
      %p133 = scmp.ne.s32.totalorder %s122, %s125
      %p134 = scmp.eq.s32.totalorder %s27, 7
      %p135 = por %p133, %p134
      %p136 = scmp.ne.s32.totalorder %s125, %s126
      %p137 = scmp.eq.s32.totalorder %s27, 0
      %p138 = por %p136, %p137
      %p139 = scmp.ne.s32.totalorder %s125, %s126
      %p140 = scmp.eq.s32.totalorder %s28, 7
      %p141 = por %p139, %p140
      %p143 = scmp.ne.s32.totalorder %s126, %s142
      %p144 = scmp.eq.s32.totalorder %s28, 0
      %p145 = por %p143, %p144
      %s146 = ssub.s32 %s29, %s41
      %p147 = scmp.eq.s32.totalorder %s146, 0
      %s149 = sadd.s32 %s148, 1
      %s150 = scalar_select %p147, %s148, %s149
      %p153 = pneg %p147
      %p154 = scmp.eq.s32.totalorder %s22, 7
      %p155 = por %p153, %p154
      %p156 = scmp.ne.s32.totalorder %s148, %s151
      %p157 = scmp.eq.s32.totalorder %s22, 0
      %p158 = por %p156, %p157
      %p159 = scmp.ne.s32.totalorder %s148, %s151
      %p160 = scmp.eq.s32.totalorder %s27, 7
      %p161 = por %p159, %p160
      %p162 = scmp.ne.s32.totalorder %s151, %s152
      %p163 = scmp.eq.s32.totalorder %s27, 0
      %p164 = por %p162, %p163
      %p165 = scmp.ne.s32.totalorder %s151, %s152
      %p166 = scmp.eq.s32.totalorder %s28, 7
      %p167 = por %p165, %p166
      %p169 = scmp.ne.s32.totalorder %s152, %s168
      %p170 = scmp.eq.s32.totalorder %s28, 0
      %p171 = por %p169, %p170
      %p172 = scmp.le.s32.totalorder 1, %s22
      %p173 = scmp.lt.s32.totalorder %s22, 9
      %p174 = pnand %p172, %p173
      %p175 = pneg %p174
      // Predicated region
      $region9: #{mlp_forward.1} parent=5 // pred_check
        _
      $region10: #{mlp_forward.1} parent=5 // pred_check_branch
        %177 = sbr.rel (%p174) target = $region12
      $region11: #{mlp_forward.1} parent=5 // pred_region
        %s178 = ssub.s32 %s22, 1
      $region12: #{mlp_forward.1} parent=5 // pred_fallthru
        _
      %p179 = scmp.lt.s32.totalorder %s22, 8
      // Predicated region
      $region13: #{mlp_forward.1} parent=5 // pred_check
        %p180 = pneg %p179
      $region14: #{mlp_forward.1} parent=5 // pred_check_branch
        %182 = sbr.rel (%p180) target = $region16
      $region15: #{mlp_forward.1} parent=5 // pred_region
        // Predicated region
        $region17: #{mlp_forward.1} parent=15 // pred_check
          %p183 = pneg %p54
        $region18: #{mlp_forward.1} parent=15 // pred_check_branch
          %185 = sbr.rel (%p183) target = $region20
        $region19: #{mlp_forward.1} parent=15 // pred_region
          %s186 = sand.u32 %s44, 1
          %s187 = scalar_lea.sflag [#allocation4], %s186
          %s188 = sand.u32 %s44, 1
          %s189 = smul.addr %s188, 256
          %s190 = scalar_lea.vmem [#allocation3], %s189
          %s191 = smul.u32 16, %s29
          %s193 = ssub.s32 4096, 4096
          %194 = vsyncadd %s187, %s193
          %s195 = smul.addr %s191, 4
          %s196 = smul.addr %s195, 64
          %s197 = scalar_lea.hbm %s0, %s196
          %s198 = sshll.u32 %s190, 4
          %s199 = int_to_ptr.vmem [resolvable:$true] %s198
          %204 = dma.hbm_to_vmem [thread:$0]  %s197, 4096, %s199, %s187, 256, 256, 16
        $region20: #{mlp_forward.1} parent=15 // pred_fallthru
          _
        // Predicated region
        $region21: #{mlp_forward.1} parent=15 // pred_check
          %p205 = pneg %p80
        $region22: #{mlp_forward.1} parent=15 // pred_check_branch
          %207 = sbr.rel (%p205) target = $region24
        $region23: #{mlp_forward.1} parent=15 // pred_region
          %s208 = sand.u32 %s22, 1
          %s209 = scalar_lea.sflag [#allocation7], %s208
          %s210 = sand.u32 %s70, 1
          %s211 = smul.addr %s210, 512
          %s212 = scalar_lea.vmem [#allocation6], %s211
          %s214 = ssub.s32 8192, 8192
          %215 = vsyncadd %s209, %s214
          %s216 = smul.addr %s30, 128
          %s217 = smul.addr %s216, 64
          %s218 = scalar_lea.hbm %s1, %s217
          %s219 = sshll.u32 %s212, 4
          %s220 = int_to_ptr.vmem [resolvable:$true] %s219
          %225 = dma.hbm_to_vmem [thread:$0]  %s218, 8192, %s220, %s209, 128, 128, 8
        $region24: #{mlp_forward.1} parent=15 // pred_fallthru
          _
        // Predicated region
        $region25: #{mlp_forward.1} parent=15 // pred_check
          %p226 = pneg %p106
        $region26: #{mlp_forward.1} parent=15 // pred_check_branch
          %228 = sbr.rel (%p226) target = $region28
        $region27: #{mlp_forward.1} parent=15 // pred_region
          %s229 = sand.u32 %s22, 1
          %s230 = scalar_lea.sflag [#allocation7], %s229
          %s231 = sand.u32 %s96, 1
          %s232 = smul.addr %s231, 512
          %s233 = scalar_lea.vmem [#allocation8], %s232
          %s235 = ssub.s32 8192, 8192
          %236 = vsyncadd %s230, %s235
          %s237 = smul.addr %s30, 128
          %s238 = smul.addr %s237, 64
          %s239 = scalar_lea.hbm %s2, %s238
          %s240 = sshll.u32 %s233, 4
          %s241 = int_to_ptr.vmem [resolvable:$true] %s240
          %246 = dma.hbm_to_vmem [thread:$0]  %s239, 8192, %s241, %s230, 128, 128, 8
        $region28: #{mlp_forward.1} parent=15 // pred_fallthru
          _
        // Predicated region
        $region29: #{mlp_forward.1} parent=15 // pred_check
          %p247 = pneg %p132
        $region30: #{mlp_forward.1} parent=15 // pred_check_branch
          %249 = sbr.rel (%p247) target = $region32
        $region31: #{mlp_forward.1} parent=15 // pred_region
          %s250 = sand.u32 %s122, 1
          %s251 = scalar_lea.sflag [#allocation10], %s250
          %s252 = sand.u32 %s122, 1
          %s253 = smul.addr %s252, 512
          %s254 = scalar_lea.vmem [#allocation9], %s253
          %s255 = smul.u32 32, %s30
          %s257 = ssub.s32 8192, 8192
          %258 = vsyncadd %s251, %s257
          %s259 = smul.addr %s255, 4
          %s260 = smul.addr %s259, 64
          %s261 = scalar_lea.hbm %s3, %s260
          %s262 = sshll.u32 %s254, 4
          %s263 = int_to_ptr.vmem [resolvable:$true] %s262
          %268 = dma.hbm_to_vmem [thread:$0]  %s261, 8192, %s263, %s251, 256, 256, 16
        $region32: #{mlp_forward.1} parent=15 // pred_fallthru
          _
      $region16: #{mlp_forward.1} parent=5 // pred_fallthru
        _
      %p269 = scmp.le.s32.totalorder 1, %s22
      %p270 = scmp.lt.s32.totalorder %s22, 9
      %p271 = pnand %p269, %p270
      %p272 = pneg %p271
      // Predicated region
      $region33: #{mlp_forward.1} parent=5 // pred_check
        _
      $region34: #{mlp_forward.1} parent=5 // pred_check_branch
        %274 = sbr.rel (%p271) target = $region36
      $region35: #{mlp_forward.1} parent=5 // pred_region
        %s275 = ssub.s32 %s22, 1
        %s276 = sand.u32 %s47, 1
        %s277 = scalar_lea.sflag [#allocation4], %s276
        %s278 = sand.u32 %s47, 1
        %s279 = smul.addr %s278, 256
        %s280 = scalar_lea.vmem [#allocation3], %s279
        // Predicated region
        $region37: #{mlp_forward.1} parent=35 // pred_check
          %p281 = pneg %p60
        $region38: #{mlp_forward.1} parent=35 // pred_check_branch
          %283 = sbr.rel (%p281) target = $region40
        $region39: #{mlp_forward.1} parent=35 // pred_region
          %284 = dma.done %s277, 4096
        $region40: #{mlp_forward.1} parent=35 // pred_fallthru
          _
        %s285 = sand.u32 %s27, 1
        %s286 = scalar_lea.sflag [#allocation7], %s285
        %s287 = sand.u32 %s73, 1
        %s288 = smul.addr %s287, 512
        %s289 = scalar_lea.vmem [#allocation6], %s288
        // Predicated region
        $region41: #{mlp_forward.1} parent=35 // pred_check
          %p290 = pneg %p86
        $region42: #{mlp_forward.1} parent=35 // pred_check_branch
          %292 = sbr.rel (%p290) target = $region44
        $region43: #{mlp_forward.1} parent=35 // pred_region
          %293 = dma.done %s286, 8192
        $region44: #{mlp_forward.1} parent=35 // pred_fallthru
          _
        %s294 = sand.u32 %s27, 1
        %s295 = scalar_lea.sflag [#allocation7], %s294
        %s296 = sand.u32 %s99, 1
        %s297 = smul.addr %s296, 512
        %s298 = scalar_lea.vmem [#allocation8], %s297
        // Predicated region
        $region45: #{mlp_forward.1} parent=35 // pred_check
          %p299 = pneg %p112
        $region46: #{mlp_forward.1} parent=35 // pred_check_branch
          %301 = sbr.rel (%p299) target = $region48
        $region47: #{mlp_forward.1} parent=35 // pred_region
          %302 = dma.done %s295, 8192
        $region48: #{mlp_forward.1} parent=35 // pred_fallthru
          _
        %s303 = sand.u32 %s125, 1
        %s304 = scalar_lea.sflag [#allocation10], %s303
        %s305 = sand.u32 %s125, 1
        %s306 = smul.addr %s305, 512
        %s307 = scalar_lea.vmem [#allocation9], %s306
        // Predicated region
        $region49: #{mlp_forward.1} parent=35 // pred_check
          %p308 = pneg %p138
        $region50: #{mlp_forward.1} parent=35 // pred_check_branch
          %310 = sbr.rel (%p308) target = $region52
        $region51: #{mlp_forward.1} parent=35 // pred_region
          %311 = dma.done %s304, 8192
        $region52: #{mlp_forward.1} parent=35 // pred_fallthru
          _
        %s312 = sand.u32 %s47, 1
        %s313 = scalar_lea.sflag [#allocation4], %s312
        %s314 = sand.u32 %s47, 1
        %s315 = smul.addr %s314, 256
        %s316 = scalar_lea.vmem [#allocation3], %s315
        %p317 = pneg %p60
        %p318 = pneg %p57
        %s319 = sand.u32 %s27, 1
        %s320 = scalar_lea.sflag [#allocation7], %s319
        %s321 = sand.u32 %s73, 1
        %s322 = smul.addr %s321, 512
        %s323 = scalar_lea.vmem [#allocation6], %s322
        %p324 = pneg %p86
        %p325 = pneg %p83
        %s326 = sand.u32 %s27, 1
        %s327 = scalar_lea.sflag [#allocation7], %s326
        %s328 = sand.u32 %s99, 1
        %s329 = smul.addr %s328, 512
        %s330 = scalar_lea.vmem [#allocation8], %s329
        %p331 = pneg %p112
        %p332 = pneg %p109
        %s333 = sand.u32 %s125, 1
        %s334 = scalar_lea.sflag [#allocation10], %s333
        %s335 = sand.u32 %s125, 1
        %s336 = smul.addr %s335, 512
        %s337 = scalar_lea.vmem [#allocation9], %s336
        %p338 = pneg %p138
        %p339 = pneg %p135
        %p340 = pneg %p164
        %p341 = pneg %p161
        %s342 = sand.u32 %s151, 1
        %s343 = scalar_lea.sflag [#allocation5], %s342
        %s344 = sand.u32 %s151, 1
        %s345 = smul.addr %s344, 256
        %s346 = scalar_lea.vmem [#allocation11], %s345
        %s347 = smul.u32 16, %s31
        %s348 = smul.u32 32, %s32
        %s349 = smul.u32 16, %s31
        %v350 = vld [vmem:[%s280] sm:$0xff]
        %v351 = vld [vmem:[%s280 + $0x8] sm:$0xff]
        %v352 = vld [vmem:[%s280 + $0x10] sm:$0xff]
        %v353 = vld [vmem:[%s280 + $0x18] sm:$0xff]
        %v354 = vld [vmem:[%s280 + $0x20] sm:$0xff]
        %v355 = vld [vmem:[%s280 + $0x28] sm:$0xff]
        %v356 = vld [vmem:[%s280 + $0x30] sm:$0xff]
        %v357 = vld [vmem:[%s280 + $0x38] sm:$0xff]
        %v358 = vld [vmem:[%s280 + $0x40] sm:$0xff]
        %v359 = vld [vmem:[%s280 + $0x48] sm:$0xff]
        %v360 = vld [vmem:[%s280 + $0x50] sm:$0xff]
        %v361 = vld [vmem:[%s280 + $0x58] sm:$0xff]
        %v362 = vld [vmem:[%s280 + $0x60] sm:$0xff]
        %v363 = vld [vmem:[%s280 + $0x68] sm:$0xff]
        %v364 = vld [vmem:[%s280 + $0x70] sm:$0xff]
        %v365 = vld [vmem:[%s280 + $0x78] sm:$0xff]
        %v366 = vld [vmem:[%s280 + $0x80] sm:$0xff]
        %v367 = vld [vmem:[%s280 + $0x88] sm:$0xff]
        %v368 = vld [vmem:[%s280 + $0x90] sm:$0xff]
        %v369 = vld [vmem:[%s280 + $0x98] sm:$0xff]
        %v370 = vld [vmem:[%s280 + $0xa0] sm:$0xff]
        %v371 = vld [vmem:[%s280 + $0xa8] sm:$0xff]
        %v372 = vld [vmem:[%s280 + $0xb0] sm:$0xff]
        %v373 = vld [vmem:[%s280 + $0xb8] sm:$0xff]
        %v374 = vld [vmem:[%s280 + $0xc0] sm:$0xff]
        %v375 = vld [vmem:[%s280 + $0xc8] sm:$0xff]
        %v376 = vld [vmem:[%s280 + $0xd0] sm:$0xff]
        %v377 = vld [vmem:[%s280 + $0xd8] sm:$0xff]
        %v378 = vld [vmem:[%s280 + $0xe0] sm:$0xff]
        %v379 = vld [vmem:[%s280 + $0xe8] sm:$0xff]
        %v380 = vld [vmem:[%s280 + $0xf0] sm:$0xff]
        %v381 = vld [vmem:[%s280 + $0xf8] sm:$0xff]
        %v382 = vld [vmem:[%s289] sm:$0xff]
        %v383 = vld [vmem:[%s289 + $0x8] sm:$0xff]
        %v384 = vld [vmem:[%s289 + $0x10] sm:$0xff]
        %v385 = vld [vmem:[%s289 + $0x18] sm:$0xff]
        %v386 = vld [vmem:[%s289 + $0x20] sm:$0xff]
        %v387 = vld [vmem:[%s289 + $0x28] sm:$0xff]
        %v388 = vld [vmem:[%s289 + $0x30] sm:$0xff]
        %v389 = vld [vmem:[%s289 + $0x38] sm:$0xff]
        %v390 = vld [vmem:[%s289 + $0x40] sm:$0xff]
        %v391 = vld [vmem:[%s289 + $0x48] sm:$0xff]
        %v392 = vld [vmem:[%s289 + $0x50] sm:$0xff]
        %v393 = vld [vmem:[%s289 + $0x58] sm:$0xff]
        %v394 = vld [vmem:[%s289 + $0x60] sm:$0xff]
        %v395 = vld [vmem:[%s289 + $0x68] sm:$0xff]
        %v396 = vld [vmem:[%s289 + $0x70] sm:$0xff]
        %v397 = vld [vmem:[%s289 + $0x78] sm:$0xff]
        %v398 = vld [vmem:[%s289 + $0x80] sm:$0xff]
        %v399 = vld [vmem:[%s289 + $0x88] sm:$0xff]
        %v400 = vld [vmem:[%s289 + $0x90] sm:$0xff]
        %v401 = vld [vmem:[%s289 + $0x98] sm:$0xff]
        %v402 = vld [vmem:[%s289 + $0xa0] sm:$0xff]
        %v403 = vld [vmem:[%s289 + $0xa8] sm:$0xff]
        %v404 = vld [vmem:[%s289 + $0xb0] sm:$0xff]
        %v405 = vld [vmem:[%s289 + $0xb8] sm:$0xff]
        %v406 = vld [vmem:[%s289 + $0xc0] sm:$0xff]
        %v407 = vld [vmem:[%s289 + $0xc8] sm:$0xff]
        %v408 = vld [vmem:[%s289 + $0xd0] sm:$0xff]
        %v409 = vld [vmem:[%s289 + $0xd8] sm:$0xff]
        %v410 = vld [vmem:[%s289 + $0xe0] sm:$0xff]
        %v411 = vld [vmem:[%s289 + $0xe8] sm:$0xff]
        %v412 = vld [vmem:[%s289 + $0xf0] sm:$0xff]
        %v413 = vld [vmem:[%s289 + $0xf8] sm:$0xff]
        %v414 = vld [vmem:[%s289 + $0x100] sm:$0xff]
        %v415 = vld [vmem:[%s289 + $0x108] sm:$0xff]
        %v416 = vld [vmem:[%s289 + $0x110] sm:$0xff]
        %v417 = vld [vmem:[%s289 + $0x118] sm:$0xff]
        %v418 = vld [vmem:[%s289 + $0x120] sm:$0xff]
        %v419 = vld [vmem:[%s289 + $0x128] sm:$0xff]
        %v420 = vld [vmem:[%s289 + $0x130] sm:$0xff]
        %v421 = vld [vmem:[%s289 + $0x138] sm:$0xff]
        %v422 = vld [vmem:[%s289 + $0x140] sm:$0xff]
        %v423 = vld [vmem:[%s289 + $0x148] sm:$0xff]
        %v424 = vld [vmem:[%s289 + $0x150] sm:$0xff]
        %v425 = vld [vmem:[%s289 + $0x158] sm:$0xff]
        %v426 = vld [vmem:[%s289 + $0x160] sm:$0xff]
        %v427 = vld [vmem:[%s289 + $0x168] sm:$0xff]
        %v428 = vld [vmem:[%s289 + $0x170] sm:$0xff]
        %v429 = vld [vmem:[%s289 + $0x178] sm:$0xff]
        %v430 = vld [vmem:[%s289 + $0x180] sm:$0xff]
        %v431 = vld [vmem:[%s289 + $0x188] sm:$0xff]
        %v432 = vld [vmem:[%s289 + $0x190] sm:$0xff]
        %v433 = vld [vmem:[%s289 + $0x198] sm:$0xff]
        %v434 = vld [vmem:[%s289 + $0x1a0] sm:$0xff]
        %v435 = vld [vmem:[%s289 + $0x1a8] sm:$0xff]
        %v436 = vld [vmem:[%s289 + $0x1b0] sm:$0xff]
        %v437 = vld [vmem:[%s289 + $0x1b8] sm:$0xff]
        %v438 = vld [vmem:[%s289 + $0x1c0] sm:$0xff]
        %v439 = vld [vmem:[%s289 + $0x1c8] sm:$0xff]
        %v440 = vld [vmem:[%s289 + $0x1d0] sm:$0xff]
        %v441 = vld [vmem:[%s289 + $0x1d8] sm:$0xff]
        %v442 = vld [vmem:[%s289 + $0x1e0] sm:$0xff]
        %v443 = vld [vmem:[%s289 + $0x1e8] sm:$0xff]
        %v444 = vld [vmem:[%s289 + $0x1f0] sm:$0xff]
        %v445 = vld [vmem:[%s289 + $0x1f8] sm:$0xff]
        %v478 = vunpack.c.l.b16 %v350
        %v479 = vunpack.c.h.b16 %v350
        %v480 = vunpack.c.l.b16 %v351
        %v481 = vunpack.c.h.b16 %v351
        %v482 = vunpack.c.l.b16 %v352
        %v483 = vunpack.c.h.b16 %v352
        %v484 = vunpack.c.l.b16 %v353
        %v485 = vunpack.c.h.b16 %v353
        %v486 = vunpack.c.l.b16 %v354
        %v487 = vunpack.c.h.b16 %v354
        %v488 = vunpack.c.l.b16 %v355
        %v489 = vunpack.c.h.b16 %v355
        %v490 = vunpack.c.l.b16 %v356
        %v491 = vunpack.c.h.b16 %v356
        %v492 = vunpack.c.l.b16 %v357
        %v493 = vunpack.c.h.b16 %v357
        %v494 = vunpack.c.l.b16 %v358
        %v495 = vunpack.c.h.b16 %v358
        %v496 = vunpack.c.l.b16 %v359
        %v497 = vunpack.c.h.b16 %v359
        %v498 = vunpack.c.l.b16 %v360
        %v499 = vunpack.c.h.b16 %v360
        %v500 = vunpack.c.l.b16 %v361
        %v501 = vunpack.c.h.b16 %v361
        %v502 = vunpack.c.l.b16 %v362
        %v503 = vunpack.c.h.b16 %v362
        %v504 = vunpack.c.l.b16 %v363
        %v505 = vunpack.c.h.b16 %v363
        %v506 = vunpack.c.l.b16 %v364
        %v507 = vunpack.c.h.b16 %v364
        %v508 = vunpack.c.l.b16 %v365
        %v509 = vunpack.c.h.b16 %v365
        %v510 = vunpack.c.l.b16 %v366
        %v511 = vunpack.c.h.b16 %v366
        %v512 = vunpack.c.l.b16 %v367
        %v513 = vunpack.c.h.b16 %v367
        %v514 = vunpack.c.l.b16 %v368
        %v515 = vunpack.c.h.b16 %v368
        %v516 = vunpack.c.l.b16 %v369
        %v517 = vunpack.c.h.b16 %v369
        %v518 = vunpack.c.l.b16 %v370
        %v519 = vunpack.c.h.b16 %v370
        %v520 = vunpack.c.l.b16 %v371
        %v521 = vunpack.c.h.b16 %v371
        %v522 = vunpack.c.l.b16 %v372
        %v523 = vunpack.c.h.b16 %v372
        %v524 = vunpack.c.l.b16 %v373
        %v525 = vunpack.c.h.b16 %v373
        %v526 = vunpack.c.l.b16 %v374
        %v527 = vunpack.c.h.b16 %v374
        %v528 = vunpack.c.l.b16 %v375
        %v529 = vunpack.c.h.b16 %v375
        %v530 = vunpack.c.l.b16 %v376
        %v531 = vunpack.c.h.b16 %v376
        %v532 = vunpack.c.l.b16 %v377
        %v533 = vunpack.c.h.b16 %v377
        %v534 = vunpack.c.l.b16 %v378
        %v535 = vunpack.c.h.b16 %v378
        %v536 = vunpack.c.l.b16 %v379
        %v537 = vunpack.c.h.b16 %v379
        %v538 = vunpack.c.l.b16 %v380
        %v539 = vunpack.c.h.b16 %v380
        %v540 = vunpack.c.l.b16 %v381
        %v541 = vunpack.c.h.b16 %v381
        %v542 = vpack.c.b16 %v482, %v478
        %v543 = vpack.c.b16 %v483, %v479
        %v544 = vpack.c.b16 %v484, %v480
        %v545 = vpack.c.b16 %v485, %v481
        %v546 = vpack.c.b16 %v490, %v486
        %v547 = vpack.c.b16 %v491, %v487
        %v548 = vpack.c.b16 %v492, %v488
        %v549 = vpack.c.b16 %v493, %v489
        %v550 = vpack.c.b16 %v498, %v494
        %v551 = vpack.c.b16 %v499, %v495
        %v552 = vpack.c.b16 %v500, %v496
        %v553 = vpack.c.b16 %v501, %v497
        %v554 = vpack.c.b16 %v506, %v502
        %v555 = vpack.c.b16 %v507, %v503
        %v556 = vpack.c.b16 %v508, %v504
        %v557 = vpack.c.b16 %v509, %v505
        %v558 = vpack.c.b16 %v514, %v510
        %v559 = vpack.c.b16 %v515, %v511
        %v560 = vpack.c.b16 %v516, %v512
        %v561 = vpack.c.b16 %v517, %v513
        %v562 = vpack.c.b16 %v522, %v518
        %v563 = vpack.c.b16 %v523, %v519
        %v564 = vpack.c.b16 %v524, %v520
        %v565 = vpack.c.b16 %v525, %v521
        %v566 = vpack.c.b16 %v530, %v526
        %v567 = vpack.c.b16 %v531, %v527
        %v568 = vpack.c.b16 %v532, %v528
        %v569 = vpack.c.b16 %v533, %v529
        %v570 = vpack.c.b16 %v538, %v534
        %v571 = vpack.c.b16 %v539, %v535
        %v572 = vpack.c.b16 %v540, %v536
        %v573 = vpack.c.b16 %v541, %v537
        %v670 = vunpack.c.l.b16 %v382
        %v671 = vunpack.c.h.b16 %v382
        %v672 = vunpack.c.l.b16 %v383
        %v673 = vunpack.c.h.b16 %v383
        %v674 = vunpack.c.l.b16 %v384
        %v675 = vunpack.c.h.b16 %v384
        %v676 = vunpack.c.l.b16 %v385
        %v677 = vunpack.c.h.b16 %v385
        %v678 = vunpack.c.l.b16 %v386
        %v679 = vunpack.c.h.b16 %v386
        %v680 = vunpack.c.l.b16 %v387
        %v681 = vunpack.c.h.b16 %v387
        %v682 = vunpack.c.l.b16 %v388
        %v683 = vunpack.c.h.b16 %v388
        %v684 = vunpack.c.l.b16 %v389
        %v685 = vunpack.c.h.b16 %v389
        %v686 = vunpack.c.l.b16 %v390
        %v687 = vunpack.c.h.b16 %v390
        %v688 = vunpack.c.l.b16 %v391
        %v689 = vunpack.c.h.b16 %v391
        %v690 = vunpack.c.l.b16 %v392
        %v691 = vunpack.c.h.b16 %v392
        %v692 = vunpack.c.l.b16 %v393
        %v693 = vunpack.c.h.b16 %v393
        %v694 = vunpack.c.l.b16 %v394
        %v695 = vunpack.c.h.b16 %v394
        %v696 = vunpack.c.l.b16 %v395
        %v697 = vunpack.c.h.b16 %v395
        %v698 = vunpack.c.l.b16 %v396
        %v699 = vunpack.c.h.b16 %v396
        %v700 = vunpack.c.l.b16 %v397
        %v701 = vunpack.c.h.b16 %v397
        %v702 = vunpack.c.l.b16 %v398
        %v703 = vunpack.c.h.b16 %v398
        %v704 = vunpack.c.l.b16 %v399
        %v705 = vunpack.c.h.b16 %v399
        %v706 = vunpack.c.l.b16 %v400
        %v707 = vunpack.c.h.b16 %v400
        %v708 = vunpack.c.l.b16 %v401
        %v709 = vunpack.c.h.b16 %v401
        %v710 = vunpack.c.l.b16 %v402
        %v711 = vunpack.c.h.b16 %v402
        %v712 = vunpack.c.l.b16 %v403
        %v713 = vunpack.c.h.b16 %v403
        %v714 = vunpack.c.l.b16 %v404
        %v715 = vunpack.c.h.b16 %v404
        %v716 = vunpack.c.l.b16 %v405
        %v717 = vunpack.c.h.b16 %v405
        %v718 = vunpack.c.l.b16 %v406
        %v719 = vunpack.c.h.b16 %v406
        %v720 = vunpack.c.l.b16 %v407
        %v721 = vunpack.c.h.b16 %v407
        %v722 = vunpack.c.l.b16 %v408
        %v723 = vunpack.c.h.b16 %v408
        %v724 = vunpack.c.l.b16 %v409
        %v725 = vunpack.c.h.b16 %v409
        %v726 = vunpack.c.l.b16 %v410
        %v727 = vunpack.c.h.b16 %v410
        %v728 = vunpack.c.l.b16 %v411
        %v729 = vunpack.c.h.b16 %v411
        %v730 = vunpack.c.l.b16 %v412
        %v731 = vunpack.c.h.b16 %v412
        %v732 = vunpack.c.l.b16 %v413
        %v733 = vunpack.c.h.b16 %v413
        %v734 = vunpack.c.l.b16 %v414
        %v735 = vunpack.c.h.b16 %v414
        %v736 = vunpack.c.l.b16 %v415
        %v737 = vunpack.c.h.b16 %v415
        %v738 = vunpack.c.l.b16 %v416
        %v739 = vunpack.c.h.b16 %v416
        %v740 = vunpack.c.l.b16 %v417
        %v741 = vunpack.c.h.b16 %v417
        %v742 = vunpack.c.l.b16 %v418
        %v743 = vunpack.c.h.b16 %v418
        %v744 = vunpack.c.l.b16 %v419
        %v745 = vunpack.c.h.b16 %v419
        %v746 = vunpack.c.l.b16 %v420
        %v747 = vunpack.c.h.b16 %v420
        %v748 = vunpack.c.l.b16 %v421
        %v749 = vunpack.c.h.b16 %v421
        %v750 = vunpack.c.l.b16 %v422
        %v751 = vunpack.c.h.b16 %v422
        %v752 = vunpack.c.l.b16 %v423
        %v753 = vunpack.c.h.b16 %v423
        %v754 = vunpack.c.l.b16 %v424
        %v755 = vunpack.c.h.b16 %v424
        %v756 = vunpack.c.l.b16 %v425
        %v757 = vunpack.c.h.b16 %v425
        %v758 = vunpack.c.l.b16 %v426
        %v759 = vunpack.c.h.b16 %v426
        %v760 = vunpack.c.l.b16 %v427
        %v761 = vunpack.c.h.b16 %v427
        %v762 = vunpack.c.l.b16 %v428
        %v763 = vunpack.c.h.b16 %v428
        %v764 = vunpack.c.l.b16 %v429
        %v765 = vunpack.c.h.b16 %v429
        %v766 = vunpack.c.l.b16 %v430
        %v767 = vunpack.c.h.b16 %v430
        %v768 = vunpack.c.l.b16 %v431
        %v769 = vunpack.c.h.b16 %v431
        %v770 = vunpack.c.l.b16 %v432
        %v771 = vunpack.c.h.b16 %v432
        %v772 = vunpack.c.l.b16 %v433
        %v773 = vunpack.c.h.b16 %v433
        %v774 = vunpack.c.l.b16 %v434
        %v775 = vunpack.c.h.b16 %v434
        %v776 = vunpack.c.l.b16 %v435
        %v777 = vunpack.c.h.b16 %v435
        %v778 = vunpack.c.l.b16 %v436
        %v779 = vunpack.c.h.b16 %v436
        %v780 = vunpack.c.l.b16 %v437
        %v781 = vunpack.c.h.b16 %v437
        %v782 = vunpack.c.l.b16 %v438
        %v783 = vunpack.c.h.b16 %v438
        %v784 = vunpack.c.l.b16 %v439
        %v785 = vunpack.c.h.b16 %v439
        %v786 = vunpack.c.l.b16 %v440
        %v787 = vunpack.c.h.b16 %v440
        %v788 = vunpack.c.l.b16 %v441
        %v789 = vunpack.c.h.b16 %v441
        %v790 = vunpack.c.l.b16 %v442
        %v791 = vunpack.c.h.b16 %v442
        %v792 = vunpack.c.l.b16 %v443
        %v793 = vunpack.c.h.b16 %v443
        %v794 = vunpack.c.l.b16 %v444
        %v795 = vunpack.c.h.b16 %v444
        %v796 = vunpack.c.l.b16 %v445
        %v797 = vunpack.c.h.b16 %v445
        %v798 = vpack.c.b16 %v672, %v670
        %v799 = vpack.c.b16 %v673, %v671
        %v800 = vpack.c.b16 %v676, %v674
        %v801 = vpack.c.b16 %v677, %v675
        %v802 = vpack.c.b16 %v680, %v678
        %v803 = vpack.c.b16 %v681, %v679
        %v804 = vpack.c.b16 %v684, %v682
        %v805 = vpack.c.b16 %v685, %v683
        %v806 = vpack.c.b16 %v688, %v686
        %v807 = vpack.c.b16 %v689, %v687
        %v808 = vpack.c.b16 %v692, %v690
        %v809 = vpack.c.b16 %v693, %v691
        %v810 = vpack.c.b16 %v696, %v694
        %v811 = vpack.c.b16 %v697, %v695
        %v812 = vpack.c.b16 %v700, %v698
        %v813 = vpack.c.b16 %v701, %v699
        %v814 = vpack.c.b16 %v704, %v702
        %v815 = vpack.c.b16 %v705, %v703
        %v816 = vpack.c.b16 %v708, %v706
        %v817 = vpack.c.b16 %v709, %v707
        %v818 = vpack.c.b16 %v712, %v710
        %v819 = vpack.c.b16 %v713, %v711
        %v820 = vpack.c.b16 %v716, %v714
        %v821 = vpack.c.b16 %v717, %v715
        %v822 = vpack.c.b16 %v720, %v718
        %v823 = vpack.c.b16 %v721, %v719
        %v824 = vpack.c.b16 %v724, %v722
        %v825 = vpack.c.b16 %v725, %v723
        %v826 = vpack.c.b16 %v728, %v726
        %v827 = vpack.c.b16 %v729, %v727
        %v828 = vpack.c.b16 %v732, %v730
        %v829 = vpack.c.b16 %v733, %v731
        %v830 = vpack.c.b16 %v736, %v734
        %v831 = vpack.c.b16 %v737, %v735
        %v832 = vpack.c.b16 %v740, %v738
        %v833 = vpack.c.b16 %v741, %v739
        %v834 = vpack.c.b16 %v744, %v742
        %v835 = vpack.c.b16 %v745, %v743
        %v836 = vpack.c.b16 %v748, %v746
        %v837 = vpack.c.b16 %v749, %v747
        %v838 = vpack.c.b16 %v752, %v750
        %v839 = vpack.c.b16 %v753, %v751
        %v840 = vpack.c.b16 %v756, %v754
        %v841 = vpack.c.b16 %v757, %v755
        %v842 = vpack.c.b16 %v760, %v758
        %v843 = vpack.c.b16 %v761, %v759
        %v844 = vpack.c.b16 %v764, %v762
        %v845 = vpack.c.b16 %v765, %v763
        %v846 = vpack.c.b16 %v768, %v766
        %v847 = vpack.c.b16 %v769, %v767
        %v848 = vpack.c.b16 %v772, %v770
        %v849 = vpack.c.b16 %v773, %v771
        %v850 = vpack.c.b16 %v776, %v774
        %v851 = vpack.c.b16 %v777, %v775
        %v852 = vpack.c.b16 %v780, %v778
        %v853 = vpack.c.b16 %v781, %v779
        %v854 = vpack.c.b16 %v784, %v782
        %v855 = vpack.c.b16 %v785, %v783
        %v856 = vpack.c.b16 %v788, %v786
        %v857 = vpack.c.b16 %v789, %v787
        %v858 = vpack.c.b16 %v792, %v790
        %v859 = vpack.c.b16 %v793, %v791
        %v860 = vpack.c.b16 %v796, %v794
        %v861 = vpack.c.b16 %v797, %v795
        %926 = vmatprep.subr.bf16.mxu0 %v799
        %927 = vmatpush1.bf16.msra.mxu0 %v798
        %928 = vmatprep.subr.bf16.mxu0 %v801
        %929 = vmatpush1.bf16.msra.mxu0 %v800
        %930 = vmatprep.subr.bf16.mxu0 %v803
        %931 = vmatpush1.bf16.msra.mxu0 %v802
        %932 = vmatprep.subr.bf16.mxu0 %v805
        %933 = vmatpush1.bf16.msra.mxu0 %v804
        %934 = vmatprep.subr.bf16.mxu0 %v807
        %935 = vmatpush1.bf16.msra.mxu0 %v806
        %936 = vmatprep.subr.bf16.mxu0 %v809
        %937 = vmatpush1.bf16.msra.mxu0 %v808
        %938 = vmatprep.subr.bf16.mxu0 %v811
        %939 = vmatpush1.bf16.msra.mxu0 %v810
        %940 = vmatprep.subr.bf16.mxu0 %v813
        %941 = vmatpush1.bf16.msra.mxu0 %v812
        %942 = vmatprep.subr.bf16.mxu0 %v815
        %943 = vmatpush1.bf16.msra.mxu0 %v814
        %944 = vmatprep.subr.bf16.mxu0 %v817
        %945 = vmatpush1.bf16.msra.mxu0 %v816
        %946 = vmatprep.subr.bf16.mxu0 %v819
        %947 = vmatpush1.bf16.msra.mxu0 %v818
        %948 = vmatprep.subr.bf16.mxu0 %v821
        %949 = vmatpush1.bf16.msra.mxu0 %v820
        %950 = vmatprep.subr.bf16.mxu0 %v823
        %951 = vmatpush1.bf16.msra.mxu0 %v822
        %952 = vmatprep.subr.bf16.mxu0 %v825
        %953 = vmatpush1.bf16.msra.mxu0 %v824
        %954 = vmatprep.subr.bf16.mxu0 %v827
        %955 = vmatpush1.bf16.msra.mxu0 %v826
        %956 = vmatprep.subr.bf16.mxu0 %v829
        %957 = vmatpush1.bf16.msra.mxu0 %v828
        %958 = vmatprep.mubr.bf16.mxu0 %v543
        %959 = vmatmul.mubr.bf16.gmra.mrb[0].mxu0 %v542
        %v960 = vpop.f32.mrb[0].mxu0
        %v961 = vadd.f32 0.0, %v960
        %v962 = vpop.f32.mrb[0].mxu0
        %v963 = vadd.f32 0.0, %v962
        %v964 = vpop.f32.mrb[0].mxu0
        %v965 = vadd.f32 0.0, %v964
        %v966 = vpop.f32.mrb[0].mxu0
        %v967 = vadd.f32 0.0, %v966
        %968 = vmatprep.mubr.bf16.mxu0 %v547
        %969 = vmatmul.mubr.bf16.gmra.mrb[0].mxu0 %v546
        %v970 = vpop.f32.mrb[0].mxu0
        %v971 = vadd.f32 0.0, %v970
        %v972 = vpop.f32.mrb[0].mxu0
        %v973 = vadd.f32 0.0, %v972
        %v974 = vpop.f32.mrb[0].mxu0
        %v975 = vadd.f32 0.0, %v974
        %v976 = vpop.f32.mrb[0].mxu0
        %v977 = vadd.f32 0.0, %v976
        %978 = vmatprep.mubr.bf16.mxu0 %v551
        %979 = vmatmul.mubr.bf16.gmra.mrb[0].mxu0 %v550
        %v980 = vpop.f32.mrb[0].mxu0
        %v981 = vadd.f32 0.0, %v980
        %v982 = vpop.f32.mrb[0].mxu0
        %v983 = vadd.f32 0.0, %v982
        %v984 = vpop.f32.mrb[0].mxu0
        %v985 = vadd.f32 0.0, %v984
        %v986 = vpop.f32.mrb[0].mxu0
        %v987 = vadd.f32 0.0, %v986
        %988 = vmatprep.mubr.bf16.mxu0 %v555
        %989 = vmatmul.mubr.bf16.gmra.mrb[0].mxu0 %v554
        %v990 = vpop.f32.mrb[0].mxu0
        %v991 = vadd.f32 0.0, %v990
        %v992 = vpop.f32.mrb[0].mxu0
        %v993 = vadd.f32 0.0, %v992
        %v994 = vpop.f32.mrb[0].mxu0
        %v995 = vadd.f32 0.0, %v994
        %v996 = vpop.f32.mrb[0].mxu0
        %v997 = vadd.f32 0.0, %v996
        %998 = vmatprep.mubr.bf16.mxu0 %v559
        %999 = vmatmul.mubr.bf16.gmra.mrb[0].mxu0 %v558
        %v1000 = vpop.f32.mrb[0].mxu0
        %v1001 = vadd.f32 0.0, %v1000
        %v1002 = vpop.f32.mrb[0].mxu0
        %v1003 = vadd.f32 0.0, %v1002
        %v1004 = vpop.f32.mrb[0].mxu0
        %v1005 = vadd.f32 0.0, %v1004
        %v1006 = vpop.f32.mrb[0].mxu0
        %v1007 = vadd.f32 0.0, %v1006
        %1008 = vmatprep.mubr.bf16.mxu0 %v563
        %1009 = vmatmul.mubr.bf16.gmra.mrb[0].mxu0 %v562
        %v1010 = vpop.f32.mrb[0].mxu0
        %v1011 = vadd.f32 0.0, %v1010
        %v1012 = vpop.f32.mrb[0].mxu0
        %v1013 = vadd.f32 0.0, %v1012
        %v1014 = vpop.f32.mrb[0].mxu0
        %v1015 = vadd.f32 0.0, %v1014
        %v1016 = vpop.f32.mrb[0].mxu0
        %v1017 = vadd.f32 0.0, %v1016
        %1018 = vmatprep.mubr.bf16.mxu0 %v567
        %1019 = vmatmul.mubr.bf16.gmra.mrb[0].mxu0 %v566
        %v1020 = vpop.f32.mrb[0].mxu0
        %v1021 = vadd.f32 0.0, %v1020
        %v1022 = vpop.f32.mrb[0].mxu0
        %v1023 = vadd.f32 0.0, %v1022
        %v1024 = vpop.f32.mrb[0].mxu0
        %v1025 = vadd.f32 0.0, %v1024
        %v1026 = vpop.f32.mrb[0].mxu0
        %v1027 = vadd.f32 0.0, %v1026
        %1028 = vmatprep.mubr.bf16.mxu0 %v571
        %1029 = vmatmul.mubr.bf16.gmra.mrb[0].mxu0 %v570
        %v1030 = vpop.f32.mrb[0].mxu0
        %v1031 = vadd.f32 0.0, %v1030
        %v1032 = vpop.f32.mrb[0].mxu0
        %v1033 = vadd.f32 0.0, %v1032
        %v1034 = vpop.f32.mrb[0].mxu0
        %v1035 = vadd.f32 0.0, %v1034
        %v1036 = vpop.f32.mrb[0].mxu0
        %v1037 = vadd.f32 0.0, %v1036
        %1038 = vdwg.mxu0
        %1039 = vmatprep.subr.bf16.mxu0 %v831
        %1040 = vmatpush1.bf16.msra.mxu0 %v830
        %1041 = vmatprep.subr.bf16.mxu0 %v833
        %1042 = vmatpush1.bf16.msra.mxu0 %v832
        %1043 = vmatprep.subr.bf16.mxu0 %v835
        %1044 = vmatpush1.bf16.msra.mxu0 %v834
        %1045 = vmatprep.subr.bf16.mxu0 %v837
        %1046 = vmatpush1.bf16.msra.mxu0 %v836
        %1047 = vmatprep.subr.bf16.mxu0 %v839
        %1048 = vmatpush1.bf16.msra.mxu0 %v838
        %1049 = vmatprep.subr.bf16.mxu0 %v841
        %1050 = vmatpush1.bf16.msra.mxu0 %v840
        %1051 = vmatprep.subr.bf16.mxu0 %v843
        %1052 = vmatpush1.bf16.msra.mxu0 %v842
        %1053 = vmatprep.subr.bf16.mxu0 %v845
        %1054 = vmatpush1.bf16.msra.mxu0 %v844
        %1055 = vmatprep.subr.bf16.mxu0 %v847
        %1056 = vmatpush1.bf16.msra.mxu0 %v846
        %1057 = vmatprep.subr.bf16.mxu0 %v849
        %1058 = vmatpush1.bf16.msra.mxu0 %v848
        %1059 = vmatprep.subr.bf16.mxu0 %v851
        %1060 = vmatpush1.bf16.msra.mxu0 %v850
        %1061 = vmatprep.subr.bf16.mxu0 %v853
        %1062 = vmatpush1.bf16.msra.mxu0 %v852
        %1063 = vmatprep.subr.bf16.mxu0 %v855
        %1064 = vmatpush1.bf16.msra.mxu0 %v854
        %1065 = vmatprep.subr.bf16.mxu0 %v857
        %1066 = vmatpush1.bf16.msra.mxu0 %v856
        %1067 = vmatprep.subr.bf16.mxu0 %v859
        %1068 = vmatpush1.bf16.msra.mxu0 %v858
        %1069 = vmatprep.subr.bf16.mxu0 %v861
        %1070 = vmatpush1.bf16.msra.mxu0 %v860
        %1071 = vmatprep.mubr.bf16.mxu0 %v545
        %1072 = vmatmul.mubr.bf16.gmra.mrb[0].mxu0 %v544
        %v1073 = vpop.f32.mrb[0].mxu0
        %v1074 = vadd.f32 %v961, %v1073
        %v1075 = vpop.f32.mrb[0].mxu0
        %v1076 = vadd.f32 %v963, %v1075
        %v1077 = vpop.f32.mrb[0].mxu0
        %v1078 = vadd.f32 %v965, %v1077
        %v1079 = vpop.f32.mrb[0].mxu0
        %v1080 = vadd.f32 %v967, %v1079
        %1081 = vmatprep.mubr.bf16.mxu0 %v549
        %1082 = vmatmul.mubr.bf16.gmra.mrb[0].mxu0 %v548
        %v1083 = vpop.f32.mrb[0].mxu0
        %v1084 = vadd.f32 %v971, %v1083
        %v1085 = vpop.f32.mrb[0].mxu0
        %v1086 = vadd.f32 %v973, %v1085
        %v1087 = vpop.f32.mrb[0].mxu0
        %v1088 = vadd.f32 %v975, %v1087
        %v1089 = vpop.f32.mrb[0].mxu0
        %v1090 = vadd.f32 %v977, %v1089
        %1091 = vmatprep.mubr.bf16.mxu0 %v553
        %1092 = vmatmul.mubr.bf16.gmra.mrb[0].mxu0 %v552
        %v1093 = vpop.f32.mrb[0].mxu0
        %v1094 = vadd.f32 %v981, %v1093
        %v1095 = vpop.f32.mrb[0].mxu0
        %v1096 = vadd.f32 %v983, %v1095
        %v1097 = vpop.f32.mrb[0].mxu0
        %v1098 = vadd.f32 %v985, %v1097
        %v1099 = vpop.f32.mrb[0].mxu0
        %v1100 = vadd.f32 %v987, %v1099
        %1101 = vmatprep.mubr.bf16.mxu0 %v557
        %1102 = vmatmul.mubr.bf16.gmra.mrb[0].mxu0 %v556
        %v1103 = vpop.f32.mrb[0].mxu0
        %v1104 = vadd.f32 %v991, %v1103
        %v1105 = vpop.f32.mrb[0].mxu0
        %v1106 = vadd.f32 %v993, %v1105
        %v1107 = vpop.f32.mrb[0].mxu0
        %v1108 = vadd.f32 %v995, %v1107
        %v1109 = vpop.f32.mrb[0].mxu0
        %v1110 = vadd.f32 %v997, %v1109
        %1111 = vmatprep.mubr.bf16.mxu0 %v561
        %1112 = vmatmul.mubr.bf16.gmra.mrb[0].mxu0 %v560
        %v1113 = vpop.f32.mrb[0].mxu0
        %v1114 = vadd.f32 %v1001, %v1113
        %v1115 = vpop.f32.mrb[0].mxu0
        %v1116 = vadd.f32 %v1003, %v1115
        %v1117 = vpop.f32.mrb[0].mxu0
        %v1118 = vadd.f32 %v1005, %v1117
        %v1119 = vpop.f32.mrb[0].mxu0
        %v1120 = vadd.f32 %v1007, %v1119
        %1121 = vmatprep.mubr.bf16.mxu0 %v565
        %1122 = vmatmul.mubr.bf16.gmra.mrb[0].mxu0 %v564
        %v1123 = vpop.f32.mrb[0].mxu0
        %v1124 = vadd.f32 %v1011, %v1123
        %v1125 = vpop.f32.mrb[0].mxu0
        %v1126 = vadd.f32 %v1013, %v1125
        %v1127 = vpop.f32.mrb[0].mxu0
        %v1128 = vadd.f32 %v1015, %v1127
        %v1129 = vpop.f32.mrb[0].mxu0
        %v1130 = vadd.f32 %v1017, %v1129
        %1131 = vmatprep.mubr.bf16.mxu0 %v569
        %1132 = vmatmul.mubr.bf16.gmra.mrb[0].mxu0 %v568
        %v1133 = vpop.f32.mrb[0].mxu0
        %v1134 = vadd.f32 %v1021, %v1133
        %v1135 = vpop.f32.mrb[0].mxu0
        %v1136 = vadd.f32 %v1023, %v1135
        %v1137 = vpop.f32.mrb[0].mxu0
        %v1138 = vadd.f32 %v1025, %v1137
        %v1139 = vpop.f32.mrb[0].mxu0
        %v1140 = vadd.f32 %v1027, %v1139
        %1141 = vmatprep.mubr.bf16.mxu0 %v573
        %1142 = vmatmul.mubr.bf16.gmra.mrb[0].mxu0 %v572
        %v1143 = vpop.f32.mrb[0].mxu0
        %v1144 = vadd.f32 %v1031, %v1143
        %v1145 = vpop.f32.mrb[0].mxu0
        %v1146 = vadd.f32 %v1033, %v1145
        %v1147 = vpop.f32.mrb[0].mxu0
        %v1148 = vadd.f32 %v1035, %v1147
        %v1149 = vpop.f32.mrb[0].mxu0
        %v1150 = vadd.f32 %v1037, %v1149
        %1151 = vdwg.mxu0
        %v1152 = vld [vmem:[%s298] sm:$0xff]
        %v1153 = vld [vmem:[%s298 + $0x8] sm:$0xff]
        %v1154 = vld [vmem:[%s298 + $0x10] sm:$0xff]
        %v1155 = vld [vmem:[%s298 + $0x18] sm:$0xff]
        %v1156 = vld [vmem:[%s298 + $0x20] sm:$0xff]
        %v1157 = vld [vmem:[%s298 + $0x28] sm:$0xff]
        %v1158 = vld [vmem:[%s298 + $0x30] sm:$0xff]
        %v1159 = vld [vmem:[%s298 + $0x38] sm:$0xff]
        %v1160 = vld [vmem:[%s298 + $0x40] sm:$0xff]
        %v1161 = vld [vmem:[%s298 + $0x48] sm:$0xff]
        %v1162 = vld [vmem:[%s298 + $0x50] sm:$0xff]
        %v1163 = vld [vmem:[%s298 + $0x58] sm:$0xff]
        %v1164 = vld [vmem:[%s298 + $0x60] sm:$0xff]
        %v1165 = vld [vmem:[%s298 + $0x68] sm:$0xff]
        %v1166 = vld [vmem:[%s298 + $0x70] sm:$0xff]
        %v1167 = vld [vmem:[%s298 + $0x78] sm:$0xff]
        %v1168 = vld [vmem:[%s298 + $0x80] sm:$0xff]
        %v1169 = vld [vmem:[%s298 + $0x88] sm:$0xff]
        %v1170 = vld [vmem:[%s298 + $0x90] sm:$0xff]
        %v1171 = vld [vmem:[%s298 + $0x98] sm:$0xff]
        %v1172 = vld [vmem:[%s298 + $0xa0] sm:$0xff]
        %v1173 = vld [vmem:[%s298 + $0xa8] sm:$0xff]
        %v1174 = vld [vmem:[%s298 + $0xb0] sm:$0xff]
        %v1175 = vld [vmem:[%s298 + $0xb8] sm:$0xff]
        %v1176 = vld [vmem:[%s298 + $0xc0] sm:$0xff]
        %v1177 = vld [vmem:[%s298 + $0xc8] sm:$0xff]
        %v1178 = vld [vmem:[%s298 + $0xd0] sm:$0xff]
        %v1179 = vld [vmem:[%s298 + $0xd8] sm:$0xff]
        %v1180 = vld [vmem:[%s298 + $0xe0] sm:$0xff]
        %v1181 = vld [vmem:[%s298 + $0xe8] sm:$0xff]
        %v1182 = vld [vmem:[%s298 + $0xf0] sm:$0xff]
        %v1183 = vld [vmem:[%s298 + $0xf8] sm:$0xff]
        %v1184 = vld [vmem:[%s298 + $0x100] sm:$0xff]
        %v1185 = vld [vmem:[%s298 + $0x108] sm:$0xff]
        %v1186 = vld [vmem:[%s298 + $0x110] sm:$0xff]
        %v1187 = vld [vmem:[%s298 + $0x118] sm:$0xff]
        %v1188 = vld [vmem:[%s298 + $0x120] sm:$0xff]
        %v1189 = vld [vmem:[%s298 + $0x128] sm:$0xff]
        %v1190 = vld [vmem:[%s298 + $0x130] sm:$0xff]
        %v1191 = vld [vmem:[%s298 + $0x138] sm:$0xff]
        %v1192 = vld [vmem:[%s298 + $0x140] sm:$0xff]
        %v1193 = vld [vmem:[%s298 + $0x148] sm:$0xff]
        %v1194 = vld [vmem:[%s298 + $0x150] sm:$0xff]
        %v1195 = vld [vmem:[%s298 + $0x158] sm:$0xff]
        %v1196 = vld [vmem:[%s298 + $0x160] sm:$0xff]
        %v1197 = vld [vmem:[%s298 + $0x168] sm:$0xff]
        %v1198 = vld [vmem:[%s298 + $0x170] sm:$0xff]
        %v1199 = vld [vmem:[%s298 + $0x178] sm:$0xff]
        %v1200 = vld [vmem:[%s298 + $0x180] sm:$0xff]
        %v1201 = vld [vmem:[%s298 + $0x188] sm:$0xff]
        %v1202 = vld [vmem:[%s298 + $0x190] sm:$0xff]
        %v1203 = vld [vmem:[%s298 + $0x198] sm:$0xff]
        %v1204 = vld [vmem:[%s298 + $0x1a0] sm:$0xff]
        %v1205 = vld [vmem:[%s298 + $0x1a8] sm:$0xff]
        %v1206 = vld [vmem:[%s298 + $0x1b0] sm:$0xff]
        %v1207 = vld [vmem:[%s298 + $0x1b8] sm:$0xff]
        %v1208 = vld [vmem:[%s298 + $0x1c0] sm:$0xff]
        %v1209 = vld [vmem:[%s298 + $0x1c8] sm:$0xff]
        %v1210 = vld [vmem:[%s298 + $0x1d0] sm:$0xff]
        %v1211 = vld [vmem:[%s298 + $0x1d8] sm:$0xff]
        %v1212 = vld [vmem:[%s298 + $0x1e0] sm:$0xff]
        %v1213 = vld [vmem:[%s298 + $0x1e8] sm:$0xff]
        %v1214 = vld [vmem:[%s298 + $0x1f0] sm:$0xff]
        %v1215 = vld [vmem:[%s298 + $0x1f8] sm:$0xff]
        %v1280 = vunpack.c.l.b16 %v1152
        %v1281 = vunpack.c.h.b16 %v1152
        %v1282 = vunpack.c.l.b16 %v1153
        %v1283 = vunpack.c.h.b16 %v1153
        %v1284 = vunpack.c.l.b16 %v1154
        %v1285 = vunpack.c.h.b16 %v1154
        %v1286 = vunpack.c.l.b16 %v1155
        %v1287 = vunpack.c.h.b16 %v1155
        %v1288 = vunpack.c.l.b16 %v1156
        %v1289 = vunpack.c.h.b16 %v1156
        %v1290 = vunpack.c.l.b16 %v1157
        %v1291 = vunpack.c.h.b16 %v1157
        %v1292 = vunpack.c.l.b16 %v1158
        %v1293 = vunpack.c.h.b16 %v1158
        %v1294 = vunpack.c.l.b16 %v1159
        %v1295 = vunpack.c.h.b16 %v1159
        %v1296 = vunpack.c.l.b16 %v1160
        %v1297 = vunpack.c.h.b16 %v1160
        %v1298 = vunpack.c.l.b16 %v1161
        %v1299 = vunpack.c.h.b16 %v1161
        %v1300 = vunpack.c.l.b16 %v1162
        %v1301 = vunpack.c.h.b16 %v1162
        %v1302 = vunpack.c.l.b16 %v1163
        %v1303 = vunpack.c.h.b16 %v1163
        %v1304 = vunpack.c.l.b16 %v1164
        %v1305 = vunpack.c.h.b16 %v1164
        %v1306 = vunpack.c.l.b16 %v1165
        %v1307 = vunpack.c.h.b16 %v1165
        %v1308 = vunpack.c.l.b16 %v1166
        %v1309 = vunpack.c.h.b16 %v1166
        %v1310 = vunpack.c.l.b16 %v1167
        %v1311 = vunpack.c.h.b16 %v1167
        %v1312 = vunpack.c.l.b16 %v1168
        %v1313 = vunpack.c.h.b16 %v1168
        %v1314 = vunpack.c.l.b16 %v1169
        %v1315 = vunpack.c.h.b16 %v1169
        %v1316 = vunpack.c.l.b16 %v1170
        %v1317 = vunpack.c.h.b16 %v1170
        %v1318 = vunpack.c.l.b16 %v1171
        %v1319 = vunpack.c.h.b16 %v1171
        %v1320 = vunpack.c.l.b16 %v1172
        %v1321 = vunpack.c.h.b16 %v1172
        %v1322 = vunpack.c.l.b16 %v1173
        %v1323 = vunpack.c.h.b16 %v1173
        %v1324 = vunpack.c.l.b16 %v1174
        %v1325 = vunpack.c.h.b16 %v1174
        %v1326 = vunpack.c.l.b16 %v1175
        %v1327 = vunpack.c.h.b16 %v1175
        %v1328 = vunpack.c.l.b16 %v1176
        %v1329 = vunpack.c.h.b16 %v1176
        %v1330 = vunpack.c.l.b16 %v1177
        %v1331 = vunpack.c.h.b16 %v1177
        %v1332 = vunpack.c.l.b16 %v1178
        %v1333 = vunpack.c.h.b16 %v1178
        %v1334 = vunpack.c.l.b16 %v1179
        %v1335 = vunpack.c.h.b16 %v1179
        %v1336 = vunpack.c.l.b16 %v1180
        %v1337 = vunpack.c.h.b16 %v1180
        %v1338 = vunpack.c.l.b16 %v1181
        %v1339 = vunpack.c.h.b16 %v1181
        %v1340 = vunpack.c.l.b16 %v1182
        %v1341 = vunpack.c.h.b16 %v1182
        %v1342 = vunpack.c.l.b16 %v1183
        %v1343 = vunpack.c.h.b16 %v1183
        %v1344 = vunpack.c.l.b16 %v1184
        %v1345 = vunpack.c.h.b16 %v1184
        %v1346 = vunpack.c.l.b16 %v1185
        %v1347 = vunpack.c.h.b16 %v1185
        %v1348 = vunpack.c.l.b16 %v1186
        %v1349 = vunpack.c.h.b16 %v1186
        %v1350 = vunpack.c.l.b16 %v1187
        %v1351 = vunpack.c.h.b16 %v1187
        %v1352 = vunpack.c.l.b16 %v1188
        %v1353 = vunpack.c.h.b16 %v1188
        %v1354 = vunpack.c.l.b16 %v1189
        %v1355 = vunpack.c.h.b16 %v1189
        %v1356 = vunpack.c.l.b16 %v1190
        %v1357 = vunpack.c.h.b16 %v1190
        %v1358 = vunpack.c.l.b16 %v1191
        %v1359 = vunpack.c.h.b16 %v1191
        %v1360 = vunpack.c.l.b16 %v1192
        %v1361 = vunpack.c.h.b16 %v1192
        %v1362 = vunpack.c.l.b16 %v1193
        %v1363 = vunpack.c.h.b16 %v1193
        %v1364 = vunpack.c.l.b16 %v1194
        %v1365 = vunpack.c.h.b16 %v1194
        %v1366 = vunpack.c.l.b16 %v1195
        %v1367 = vunpack.c.h.b16 %v1195
        %v1368 = vunpack.c.l.b16 %v1196
        %v1369 = vunpack.c.h.b16 %v1196
        %v1370 = vunpack.c.l.b16 %v1197
        %v1371 = vunpack.c.h.b16 %v1197
        %v1372 = vunpack.c.l.b16 %v1198
        %v1373 = vunpack.c.h.b16 %v1198
        %v1374 = vunpack.c.l.b16 %v1199
        %v1375 = vunpack.c.h.b16 %v1199
        %v1376 = vunpack.c.l.b16 %v1200
        %v1377 = vunpack.c.h.b16 %v1200
        %v1378 = vunpack.c.l.b16 %v1201
        %v1379 = vunpack.c.h.b16 %v1201
        %v1380 = vunpack.c.l.b16 %v1202
        %v1381 = vunpack.c.h.b16 %v1202
        %v1382 = vunpack.c.l.b16 %v1203
        %v1383 = vunpack.c.h.b16 %v1203
        %v1384 = vunpack.c.l.b16 %v1204
        %v1385 = vunpack.c.h.b16 %v1204
        %v1386 = vunpack.c.l.b16 %v1205
        %v1387 = vunpack.c.h.b16 %v1205
        %v1388 = vunpack.c.l.b16 %v1206
        %v1389 = vunpack.c.h.b16 %v1206
        %v1390 = vunpack.c.l.b16 %v1207
        %v1391 = vunpack.c.h.b16 %v1207
        %v1392 = vunpack.c.l.b16 %v1208
        %v1393 = vunpack.c.h.b16 %v1208
        %v1394 = vunpack.c.l.b16 %v1209
        %v1395 = vunpack.c.h.b16 %v1209
        %v1396 = vunpack.c.l.b16 %v1210
        %v1397 = vunpack.c.h.b16 %v1210
        %v1398 = vunpack.c.l.b16 %v1211
        %v1399 = vunpack.c.h.b16 %v1211
        %v1400 = vunpack.c.l.b16 %v1212
        %v1401 = vunpack.c.h.b16 %v1212
        %v1402 = vunpack.c.l.b16 %v1213
        %v1403 = vunpack.c.h.b16 %v1213
        %v1404 = vunpack.c.l.b16 %v1214
        %v1405 = vunpack.c.h.b16 %v1214
        %v1406 = vunpack.c.l.b16 %v1215
        %v1407 = vunpack.c.h.b16 %v1215
        %v1408 = vpack.c.b16 %v1282, %v1280
        %v1409 = vpack.c.b16 %v1283, %v1281
        %v1410 = vpack.c.b16 %v1286, %v1284
        %v1411 = vpack.c.b16 %v1287, %v1285
        %v1412 = vpack.c.b16 %v1290, %v1288
        %v1413 = vpack.c.b16 %v1291, %v1289
        %v1414 = vpack.c.b16 %v1294, %v1292
        %v1415 = vpack.c.b16 %v1295, %v1293
        %v1416 = vpack.c.b16 %v1298, %v1296
        %v1417 = vpack.c.b16 %v1299, %v1297
        %v1418 = vpack.c.b16 %v1302, %v1300
        %v1419 = vpack.c.b16 %v1303, %v1301
        %v1420 = vpack.c.b16 %v1306, %v1304
        %v1421 = vpack.c.b16 %v1307, %v1305
        %v1422 = vpack.c.b16 %v1310, %v1308
        %v1423 = vpack.c.b16 %v1311, %v1309
        %v1424 = vpack.c.b16 %v1314, %v1312
        %v1425 = vpack.c.b16 %v1315, %v1313
        %v1426 = vpack.c.b16 %v1318, %v1316
        %v1427 = vpack.c.b16 %v1319, %v1317
        %v1428 = vpack.c.b16 %v1322, %v1320
        %v1429 = vpack.c.b16 %v1323, %v1321
        %v1430 = vpack.c.b16 %v1326, %v1324
        %v1431 = vpack.c.b16 %v1327, %v1325
        %v1432 = vpack.c.b16 %v1330, %v1328
        %v1433 = vpack.c.b16 %v1331, %v1329
        %v1434 = vpack.c.b16 %v1334, %v1332
        %v1435 = vpack.c.b16 %v1335, %v1333
        %v1436 = vpack.c.b16 %v1338, %v1336
        %v1437 = vpack.c.b16 %v1339, %v1337
        %v1438 = vpack.c.b16 %v1342, %v1340
        %v1439 = vpack.c.b16 %v1343, %v1341
        %v1440 = vpack.c.b16 %v1346, %v1344
        %v1441 = vpack.c.b16 %v1347, %v1345
        %v1442 = vpack.c.b16 %v1350, %v1348
        %v1443 = vpack.c.b16 %v1351, %v1349
        %v1444 = vpack.c.b16 %v1354, %v1352
        %v1445 = vpack.c.b16 %v1355, %v1353
        %v1446 = vpack.c.b16 %v1358, %v1356
        %v1447 = vpack.c.b16 %v1359, %v1357
        %v1448 = vpack.c.b16 %v1362, %v1360
        %v1449 = vpack.c.b16 %v1363, %v1361
        %v1450 = vpack.c.b16 %v1366, %v1364
        %v1451 = vpack.c.b16 %v1367, %v1365
        %v1452 = vpack.c.b16 %v1370, %v1368
        %v1453 = vpack.c.b16 %v1371, %v1369
        %v1454 = vpack.c.b16 %v1374, %v1372
        %v1455 = vpack.c.b16 %v1375, %v1373
        %v1456 = vpack.c.b16 %v1378, %v1376
        %v1457 = vpack.c.b16 %v1379, %v1377
        %v1458 = vpack.c.b16 %v1382, %v1380
        %v1459 = vpack.c.b16 %v1383, %v1381
        %v1460 = vpack.c.b16 %v1386, %v1384
        %v1461 = vpack.c.b16 %v1387, %v1385
        %v1462 = vpack.c.b16 %v1390, %v1388
        %v1463 = vpack.c.b16 %v1391, %v1389
        %v1464 = vpack.c.b16 %v1394, %v1392
        %v1465 = vpack.c.b16 %v1395, %v1393
        %v1466 = vpack.c.b16 %v1398, %v1396
        %v1467 = vpack.c.b16 %v1399, %v1397
        %v1468 = vpack.c.b16 %v1402, %v1400
        %v1469 = vpack.c.b16 %v1403, %v1401
        %v1470 = vpack.c.b16 %v1406, %v1404
        %v1471 = vpack.c.b16 %v1407, %v1405
        %1536 = vmatprep.subr.bf16.mxu0 %v1409
        %1537 = vmatpush1.bf16.msra.mxu0 %v1408
        %1538 = vmatprep.subr.bf16.mxu0 %v1411
        %1539 = vmatpush1.bf16.msra.mxu0 %v1410
        %1540 = vmatprep.subr.bf16.mxu0 %v1413
        %1541 = vmatpush1.bf16.msra.mxu0 %v1412
        %1542 = vmatprep.subr.bf16.mxu0 %v1415
        %1543 = vmatpush1.bf16.msra.mxu0 %v1414
        %1544 = vmatprep.subr.bf16.mxu0 %v1417
        %1545 = vmatpush1.bf16.msra.mxu0 %v1416
        %1546 = vmatprep.subr.bf16.mxu0 %v1419
        %1547 = vmatpush1.bf16.msra.mxu0 %v1418
        %1548 = vmatprep.subr.bf16.mxu0 %v1421
        %1549 = vmatpush1.bf16.msra.mxu0 %v1420
        %1550 = vmatprep.subr.bf16.mxu0 %v1423
        %1551 = vmatpush1.bf16.msra.mxu0 %v1422
        %1552 = vmatprep.subr.bf16.mxu0 %v1425
        %1553 = vmatpush1.bf16.msra.mxu0 %v1424
        %1554 = vmatprep.subr.bf16.mxu0 %v1427
        %1555 = vmatpush1.bf16.msra.mxu0 %v1426
        %1556 = vmatprep.subr.bf16.mxu0 %v1429
        %1557 = vmatpush1.bf16.msra.mxu0 %v1428
        %1558 = vmatprep.subr.bf16.mxu0 %v1431
        %1559 = vmatpush1.bf16.msra.mxu0 %v1430
        %1560 = vmatprep.subr.bf16.mxu0 %v1433
        %1561 = vmatpush1.bf16.msra.mxu0 %v1432
        %1562 = vmatprep.subr.bf16.mxu0 %v1435
        %1563 = vmatpush1.bf16.msra.mxu0 %v1434
        %1564 = vmatprep.subr.bf16.mxu0 %v1437
        %1565 = vmatpush1.bf16.msra.mxu0 %v1436
        %1566 = vmatprep.subr.bf16.mxu0 %v1439
        %1567 = vmatpush1.bf16.msra.mxu0 %v1438
        %1568 = vmatprep.mubr.bf16.mxu0 %v543
        %1569 = vmatmul.mubr.bf16.gmra.mrb[0].mxu0 %v542
        %v1570 = vpop.f32.mrb[0].mxu0
        %v1571 = vadd.f32 0.0, %v1570
        %v1572 = vpop.f32.mrb[0].mxu0
        %v1573 = vadd.f32 0.0, %v1572
        %v1574 = vpop.f32.mrb[0].mxu0
        %v1575 = vadd.f32 0.0, %v1574
        %v1576 = vpop.f32.mrb[0].mxu0
        %v1577 = vadd.f32 0.0, %v1576
        %1578 = vmatprep.mubr.bf16.mxu0 %v547
        %1579 = vmatmul.mubr.bf16.gmra.mrb[0].mxu0 %v546
        %v1580 = vpop.f32.mrb[0].mxu0
        %v1581 = vadd.f32 0.0, %v1580
        %v1582 = vpop.f32.mrb[0].mxu0
        %v1583 = vadd.f32 0.0, %v1582
        %v1584 = vpop.f32.mrb[0].mxu0
        %v1585 = vadd.f32 0.0, %v1584
        %v1586 = vpop.f32.mrb[0].mxu0
        %v1587 = vadd.f32 0.0, %v1586
        %1588 = vmatprep.mubr.bf16.mxu0 %v551
        %1589 = vmatmul.mubr.bf16.gmra.mrb[0].mxu0 %v550
        %v1590 = vpop.f32.mrb[0].mxu0
        %v1591 = vadd.f32 0.0, %v1590
        %v1592 = vpop.f32.mrb[0].mxu0
        %v1593 = vadd.f32 0.0, %v1592
        %v1594 = vpop.f32.mrb[0].mxu0
        %v1595 = vadd.f32 0.0, %v1594
        %v1596 = vpop.f32.mrb[0].mxu0
        %v1597 = vadd.f32 0.0, %v1596
        %1598 = vmatprep.mubr.bf16.mxu0 %v555
        %1599 = vmatmul.mubr.bf16.gmra.mrb[0].mxu0 %v554
        %v1600 = vpop.f32.mrb[0].mxu0
        %v1601 = vadd.f32 0.0, %v1600
        %v1602 = vpop.f32.mrb[0].mxu0
        %v1603 = vadd.f32 0.0, %v1602
        %v1604 = vpop.f32.mrb[0].mxu0
        %v1605 = vadd.f32 0.0, %v1604
        %v1606 = vpop.f32.mrb[0].mxu0
        %v1607 = vadd.f32 0.0, %v1606
        %1608 = vmatprep.mubr.bf16.mxu0 %v559
        %1609 = vmatmul.mubr.bf16.gmra.mrb[0].mxu0 %v558
        %v1610 = vpop.f32.mrb[0].mxu0
        %v1611 = vadd.f32 0.0, %v1610
        %v1612 = vpop.f32.mrb[0].mxu0
        %v1613 = vadd.f32 0.0, %v1612
        %v1614 = vpop.f32.mrb[0].mxu0
        %v1615 = vadd.f32 0.0, %v1614
        %v1616 = vpop.f32.mrb[0].mxu0
        %v1617 = vadd.f32 0.0, %v1616
        %1618 = vmatprep.mubr.bf16.mxu0 %v563
        %1619 = vmatmul.mubr.bf16.gmra.mrb[0].mxu0 %v562
        %v1620 = vpop.f32.mrb[0].mxu0
        %v1621 = vadd.f32 0.0, %v1620
        %v1622 = vpop.f32.mrb[0].mxu0
        %v1623 = vadd.f32 0.0, %v1622
        %v1624 = vpop.f32.mrb[0].mxu0
        %v1625 = vadd.f32 0.0, %v1624
        %v1626 = vpop.f32.mrb[0].mxu0
        %v1627 = vadd.f32 0.0, %v1626
        %1628 = vmatprep.mubr.bf16.mxu0 %v567
        %1629 = vmatmul.mubr.bf16.gmra.mrb[0].mxu0 %v566
        %v1630 = vpop.f32.mrb[0].mxu0
        %v1631 = vadd.f32 0.0, %v1630
        %v1632 = vpop.f32.mrb[0].mxu0
        %v1633 = vadd.f32 0.0, %v1632
        %v1634 = vpop.f32.mrb[0].mxu0
        %v1635 = vadd.f32 0.0, %v1634
        %v1636 = vpop.f32.mrb[0].mxu0
        %v1637 = vadd.f32 0.0, %v1636
        %1638 = vmatprep.mubr.bf16.mxu0 %v571
        %1639 = vmatmul.mubr.bf16.gmra.mrb[0].mxu0 %v570
        %v1640 = vpop.f32.mrb[0].mxu0
        %v1641 = vadd.f32 0.0, %v1640
        %v1642 = vpop.f32.mrb[0].mxu0
        %v1643 = vadd.f32 0.0, %v1642
        %v1644 = vpop.f32.mrb[0].mxu0
        %v1645 = vadd.f32 0.0, %v1644
        %v1646 = vpop.f32.mrb[0].mxu0
        %v1647 = vadd.f32 0.0, %v1646
        %1648 = vdwg.mxu0
        %1649 = vmatprep.subr.bf16.mxu0 %v1441
        %1650 = vmatpush1.bf16.msra.mxu0 %v1440
        %1651 = vmatprep.subr.bf16.mxu0 %v1443
        %1652 = vmatpush1.bf16.msra.mxu0 %v1442
        %1653 = vmatprep.subr.bf16.mxu0 %v1445
        %1654 = vmatpush1.bf16.msra.mxu0 %v1444
        %1655 = vmatprep.subr.bf16.mxu0 %v1447
        %1656 = vmatpush1.bf16.msra.mxu0 %v1446
        %1657 = vmatprep.subr.bf16.mxu0 %v1449
        %1658 = vmatpush1.bf16.msra.mxu0 %v1448
        %1659 = vmatprep.subr.bf16.mxu0 %v1451
        %1660 = vmatpush1.bf16.msra.mxu0 %v1450
        %1661 = vmatprep.subr.bf16.mxu0 %v1453
        %1662 = vmatpush1.bf16.msra.mxu0 %v1452
        %1663 = vmatprep.subr.bf16.mxu0 %v1455
        %1664 = vmatpush1.bf16.msra.mxu0 %v1454
        %1665 = vmatprep.subr.bf16.mxu0 %v1457
        %1666 = vmatpush1.bf16.msra.mxu0 %v1456
        %1667 = vmatprep.subr.bf16.mxu0 %v1459
        %1668 = vmatpush1.bf16.msra.mxu0 %v1458
        %1669 = vmatprep.subr.bf16.mxu0 %v1461
        %1670 = vmatpush1.bf16.msra.mxu0 %v1460
        %1671 = vmatprep.subr.bf16.mxu0 %v1463
        %1672 = vmatpush1.bf16.msra.mxu0 %v1462
        %1673 = vmatprep.subr.bf16.mxu0 %v1465
        %1674 = vmatpush1.bf16.msra.mxu0 %v1464
        %1675 = vmatprep.subr.bf16.mxu0 %v1467
        %1676 = vmatpush1.bf16.msra.mxu0 %v1466
        %1677 = vmatprep.subr.bf16.mxu0 %v1469
        %1678 = vmatpush1.bf16.msra.mxu0 %v1468
        %1679 = vmatprep.subr.bf16.mxu0 %v1471
        %1680 = vmatpush1.bf16.msra.mxu0 %v1470
        %1681 = vmatprep.mubr.bf16.mxu0 %v545
        %1682 = vmatmul.mubr.bf16.gmra.mrb[0].mxu0 %v544
        %v1683 = vpop.f32.mrb[0].mxu0
        %v1684 = vadd.f32 %v1571, %v1683
        %v1685 = vpop.f32.mrb[0].mxu0
        %v1686 = vadd.f32 %v1573, %v1685
        %v1687 = vpop.f32.mrb[0].mxu0
        %v1688 = vadd.f32 %v1575, %v1687
        %v1689 = vpop.f32.mrb[0].mxu0
        %v1690 = vadd.f32 %v1577, %v1689
        %1691 = vmatprep.mubr.bf16.mxu0 %v549
        %1692 = vmatmul.mubr.bf16.gmra.mrb[0].mxu0 %v548
        %v1693 = vpop.f32.mrb[0].mxu0
        %v1694 = vadd.f32 %v1581, %v1693
        %v1695 = vpop.f32.mrb[0].mxu0
        %v1696 = vadd.f32 %v1583, %v1695
        %v1697 = vpop.f32.mrb[0].mxu0
        %v1698 = vadd.f32 %v1585, %v1697
        %v1699 = vpop.f32.mrb[0].mxu0
        %v1700 = vadd.f32 %v1587, %v1699
        %1701 = vmatprep.mubr.bf16.mxu0 %v553
        %1702 = vmatmul.mubr.bf16.gmra.mrb[0].mxu0 %v552
        %v1703 = vpop.f32.mrb[0].mxu0
        %v1704 = vadd.f32 %v1591, %v1703
        %v1705 = vpop.f32.mrb[0].mxu0
        %v1706 = vadd.f32 %v1593, %v1705
        %v1707 = vpop.f32.mrb[0].mxu0
        %v1708 = vadd.f32 %v1595, %v1707
        %v1709 = vpop.f32.mrb[0].mxu0
        %v1710 = vadd.f32 %v1597, %v1709
        %1711 = vmatprep.mubr.bf16.mxu0 %v557
        %1712 = vmatmul.mubr.bf16.gmra.mrb[0].mxu0 %v556
        %v1713 = vpop.f32.mrb[0].mxu0
        %v1714 = vadd.f32 %v1601, %v1713
        %v1715 = vpop.f32.mrb[0].mxu0
        %v1716 = vadd.f32 %v1603, %v1715
        %v1717 = vpop.f32.mrb[0].mxu0
        %v1718 = vadd.f32 %v1605, %v1717
        %v1719 = vpop.f32.mrb[0].mxu0
        %v1720 = vadd.f32 %v1607, %v1719
        %1721 = vmatprep.mubr.bf16.mxu0 %v561
        %1722 = vmatmul.mubr.bf16.gmra.mrb[0].mxu0 %v560
        %v1723 = vpop.f32.mrb[0].mxu0
        %v1724 = vadd.f32 %v1611, %v1723
        %v1725 = vpop.f32.mrb[0].mxu0
        %v1726 = vadd.f32 %v1613, %v1725
        %v1727 = vpop.f32.mrb[0].mxu0
        %v1728 = vadd.f32 %v1615, %v1727
        %v1729 = vpop.f32.mrb[0].mxu0
        %v1730 = vadd.f32 %v1617, %v1729
        %1731 = vmatprep.mubr.bf16.mxu0 %v565
        %1732 = vmatmul.mubr.bf16.gmra.mrb[0].mxu0 %v564
        %v1733 = vpop.f32.mrb[0].mxu0
        %v1734 = vadd.f32 %v1621, %v1733
        %v1735 = vpop.f32.mrb[0].mxu0
        %v1736 = vadd.f32 %v1623, %v1735
        %v1737 = vpop.f32.mrb[0].mxu0
        %v1738 = vadd.f32 %v1625, %v1737
        %v1739 = vpop.f32.mrb[0].mxu0
        %v1740 = vadd.f32 %v1627, %v1739
        %1741 = vmatprep.mubr.bf16.mxu0 %v569
        %1742 = vmatmul.mubr.bf16.gmra.mrb[0].mxu0 %v568
        %v1743 = vpop.f32.mrb[0].mxu0
        %v1744 = vadd.f32 %v1631, %v1743
        %v1745 = vpop.f32.mrb[0].mxu0
        %v1746 = vadd.f32 %v1633, %v1745
        %v1747 = vpop.f32.mrb[0].mxu0
        %v1748 = vadd.f32 %v1635, %v1747
        %v1749 = vpop.f32.mrb[0].mxu0
        %v1750 = vadd.f32 %v1637, %v1749
        %1751 = vmatprep.mubr.bf16.mxu0 %v573
        %1752 = vmatmul.mubr.bf16.gmra.mrb[0].mxu0 %v572
        %v1753 = vpop.f32.mrb[0].mxu0
        %v1754 = vadd.f32 %v1641, %v1753
        %v1755 = vpop.f32.mrb[0].mxu0
        %v1756 = vadd.f32 %v1643, %v1755
        %v1757 = vpop.f32.mrb[0].mxu0
        %v1758 = vadd.f32 %v1645, %v1757
        %v1759 = vpop.f32.mrb[0].mxu0
        %v1760 = vadd.f32 %v1647, %v1759
        %1761 = vdwg.mxu0
        %v1762 = vxor.u32 %v1074, 2147483648
        %v1763 = vxor.u32 %v1076, 2147483648
        %v1764 = vxor.u32 %v1078, 2147483648
        %v1765 = vxor.u32 %v1080, 2147483648
        %v1766 = vxor.u32 %v1084, 2147483648
        %v1767 = vxor.u32 %v1086, 2147483648
        %v1768 = vxor.u32 %v1088, 2147483648
        %v1769 = vxor.u32 %v1090, 2147483648
        %v1770 = vxor.u32 %v1094, 2147483648
        %v1771 = vxor.u32 %v1096, 2147483648
        %v1772 = vxor.u32 %v1098, 2147483648
        %v1773 = vxor.u32 %v1100, 2147483648
        %v1774 = vxor.u32 %v1104, 2147483648
        %v1775 = vxor.u32 %v1106, 2147483648
        %v1776 = vxor.u32 %v1108, 2147483648
        %v1777 = vxor.u32 %v1110, 2147483648
        %v1778 = vxor.u32 %v1114, 2147483648
        %v1779 = vxor.u32 %v1116, 2147483648
        %v1780 = vxor.u32 %v1118, 2147483648
        %v1781 = vxor.u32 %v1120, 2147483648
        %v1782 = vxor.u32 %v1124, 2147483648
        %v1783 = vxor.u32 %v1126, 2147483648
        %v1784 = vxor.u32 %v1128, 2147483648
        %v1785 = vxor.u32 %v1130, 2147483648
        %v1786 = vxor.u32 %v1134, 2147483648
        %v1787 = vxor.u32 %v1136, 2147483648
        %v1788 = vxor.u32 %v1138, 2147483648
        %v1789 = vxor.u32 %v1140, 2147483648
        %v1790 = vxor.u32 %v1144, 2147483648
        %v1791 = vxor.u32 %v1146, 2147483648
        %v1792 = vxor.u32 %v1148, 2147483648
        %v1793 = vxor.u32 %v1150, 2147483648
        %v1794 = vmul.f32 %v1762, 1.442695
        %v1795 = vpow.pop %v1794
        %v1796 = vmul.f32 %v1763, 1.442695
        %v1797 = vpow.pop %v1796
        %v1798 = vmul.f32 %v1764, 1.442695
        %v1799 = vpow.pop %v1798
        %v1800 = vmul.f32 %v1765, 1.442695
        %v1801 = vpow.pop %v1800
        %v1802 = vmul.f32 %v1766, 1.442695
        %v1803 = vpow.pop %v1802
        %v1804 = vmul.f32 %v1767, 1.442695
        %v1805 = vpow.pop %v1804
        %v1806 = vmul.f32 %v1768, 1.442695
        %v1807 = vpow.pop %v1806
        %v1808 = vmul.f32 %v1769, 1.442695
        %v1809 = vpow.pop %v1808
        %v1810 = vmul.f32 %v1770, 1.442695
        %v1811 = vpow.pop %v1810
        %v1812 = vmul.f32 %v1771, 1.442695
        %v1813 = vpow.pop %v1812
        %v1814 = vmul.f32 %v1772, 1.442695
        %v1815 = vpow.pop %v1814
        %v1816 = vmul.f32 %v1773, 1.442695
        %v1817 = vpow.pop %v1816
        %v1818 = vmul.f32 %v1774, 1.442695
        %v1819 = vpow.pop %v1818
        %v1820 = vmul.f32 %v1775, 1.442695
        %v1821 = vpow.pop %v1820
        %v1822 = vmul.f32 %v1776, 1.442695
        %v1823 = vpow.pop %v1822
        %v1824 = vmul.f32 %v1777, 1.442695
        %v1825 = vpow.pop %v1824
        %v1826 = vmul.f32 %v1778, 1.442695
        %v1827 = vpow.pop %v1826
        %v1828 = vmul.f32 %v1779, 1.442695
        %v1829 = vpow.pop %v1828
        %v1830 = vmul.f32 %v1780, 1.442695
        %v1831 = vpow.pop %v1830
        %v1832 = vmul.f32 %v1781, 1.442695
        %v1833 = vpow.pop %v1832
        %v1834 = vmul.f32 %v1782, 1.442695
        %v1835 = vpow.pop %v1834
        %v1836 = vmul.f32 %v1783, 1.442695
        %v1837 = vpow.pop %v1836
        %v1838 = vmul.f32 %v1784, 1.442695
        %v1839 = vpow.pop %v1838
        %v1840 = vmul.f32 %v1785, 1.442695
        %v1841 = vpow.pop %v1840
        %v1842 = vmul.f32 %v1786, 1.442695
        %v1843 = vpow.pop %v1842
        %v1844 = vmul.f32 %v1787, 1.442695
        %v1845 = vpow.pop %v1844
        %v1846 = vmul.f32 %v1788, 1.442695
        %v1847 = vpow.pop %v1846
        %v1848 = vmul.f32 %v1789, 1.442695
        %v1849 = vpow.pop %v1848
        %v1850 = vmul.f32 %v1790, 1.442695
        %v1851 = vpow.pop %v1850
        %v1852 = vmul.f32 %v1791, 1.442695
        %v1853 = vpow.pop %v1852
        %v1854 = vmul.f32 %v1792, 1.442695
        %v1855 = vpow.pop %v1854
        %v1856 = vmul.f32 %v1793, 1.442695
        %v1857 = vpow.pop %v1856
        %v1858 = vadd.f32 %v1795, 1.0
        %v1859 = vadd.f32 %v1797, 1.0
        %v1860 = vadd.f32 %v1799, 1.0
        %v1861 = vadd.f32 %v1801, 1.0
        %v1862 = vadd.f32 %v1803, 1.0
        %v1863 = vadd.f32 %v1805, 1.0
        %v1864 = vadd.f32 %v1807, 1.0
        %v1865 = vadd.f32 %v1809, 1.0
        %v1866 = vadd.f32 %v1811, 1.0
        %v1867 = vadd.f32 %v1813, 1.0
        %v1868 = vadd.f32 %v1815, 1.0
        %v1869 = vadd.f32 %v1817, 1.0
        %v1870 = vadd.f32 %v1819, 1.0
        %v1871 = vadd.f32 %v1821, 1.0
        %v1872 = vadd.f32 %v1823, 1.0
        %v1873 = vadd.f32 %v1825, 1.0
        %v1874 = vadd.f32 %v1827, 1.0
        %v1875 = vadd.f32 %v1829, 1.0
        %v1876 = vadd.f32 %v1831, 1.0
        %v1877 = vadd.f32 %v1833, 1.0
        %v1878 = vadd.f32 %v1835, 1.0
        %v1879 = vadd.f32 %v1837, 1.0
        %v1880 = vadd.f32 %v1839, 1.0
        %v1881 = vadd.f32 %v1841, 1.0
        %v1882 = vadd.f32 %v1843, 1.0
        %v1883 = vadd.f32 %v1845, 1.0
        %v1884 = vadd.f32 %v1847, 1.0
        %v1885 = vadd.f32 %v1849, 1.0
        %v1886 = vadd.f32 %v1851, 1.0
        %v1887 = vadd.f32 %v1853, 1.0
        %v1888 = vadd.f32 %v1855, 1.0
        %v1889 = vadd.f32 %v1857, 1.0
        %v1890 = vrcp.pop %v1858
        %v1891 = vmul.f32 1.0, %v1890
        %v1892 = vrcp.pop %v1859
        %v1893 = vmul.f32 1.0, %v1892
        %v1894 = vrcp.pop %v1860
        %v1895 = vmul.f32 1.0, %v1894
        %v1896 = vrcp.pop %v1861
        %v1897 = vmul.f32 1.0, %v1896
        %v1898 = vrcp.pop %v1862
        %v1899 = vmul.f32 1.0, %v1898
        %v1900 = vrcp.pop %v1863
        %v1901 = vmul.f32 1.0, %v1900
        %v1902 = vrcp.pop %v1864
        %v1903 = vmul.f32 1.0, %v1902
        %v1904 = vrcp.pop %v1865
        %v1905 = vmul.f32 1.0, %v1904
        %v1906 = vrcp.pop %v1866
        %v1907 = vmul.f32 1.0, %v1906
        %v1908 = vrcp.pop %v1867
        %v1909 = vmul.f32 1.0, %v1908
        %v1910 = vrcp.pop %v1868
        %v1911 = vmul.f32 1.0, %v1910
        %v1912 = vrcp.pop %v1869
        %v1913 = vmul.f32 1.0, %v1912
        %v1914 = vrcp.pop %v1870
        %v1915 = vmul.f32 1.0, %v1914
        %v1916 = vrcp.pop %v1871
        %v1917 = vmul.f32 1.0, %v1916
        %v1918 = vrcp.pop %v1872
        %v1919 = vmul.f32 1.0, %v1918
        %v1920 = vrcp.pop %v1873
        %v1921 = vmul.f32 1.0, %v1920
        %v1922 = vrcp.pop %v1874
        %v1923 = vmul.f32 1.0, %v1922
        %v1924 = vrcp.pop %v1875
        %v1925 = vmul.f32 1.0, %v1924
        %v1926 = vrcp.pop %v1876
        %v1927 = vmul.f32 1.0, %v1926
        %v1928 = vrcp.pop %v1877
        %v1929 = vmul.f32 1.0, %v1928
        %v1930 = vrcp.pop %v1878
        %v1931 = vmul.f32 1.0, %v1930
        %v1932 = vrcp.pop %v1879
        %v1933 = vmul.f32 1.0, %v1932
        %v1934 = vrcp.pop %v1880
        %v1935 = vmul.f32 1.0, %v1934
        %v1936 = vrcp.pop %v1881
        %v1937 = vmul.f32 1.0, %v1936
        %v1938 = vrcp.pop %v1882
        %v1939 = vmul.f32 1.0, %v1938
        %v1940 = vrcp.pop %v1883
        %v1941 = vmul.f32 1.0, %v1940
        %v1942 = vrcp.pop %v1884
        %v1943 = vmul.f32 1.0, %v1942
        %v1944 = vrcp.pop %v1885
        %v1945 = vmul.f32 1.0, %v1944
        %v1946 = vrcp.pop %v1886
        %v1947 = vmul.f32 1.0, %v1946
        %v1948 = vrcp.pop %v1887
        %v1949 = vmul.f32 1.0, %v1948
        %v1950 = vrcp.pop %v1888
        %v1951 = vmul.f32 1.0, %v1950
        %v1952 = vrcp.pop %v1889
        %v1953 = vmul.f32 1.0, %v1952
        %v1954 = vmul.f32 %v1074, %v1891
        %v1955 = vmul.f32 %v1076, %v1893
        %v1956 = vmul.f32 %v1078, %v1895
        %v1957 = vmul.f32 %v1080, %v1897
        %v1958 = vmul.f32 %v1084, %v1899
        %v1959 = vmul.f32 %v1086, %v1901
        %v1960 = vmul.f32 %v1088, %v1903
        %v1961 = vmul.f32 %v1090, %v1905
        %v1962 = vmul.f32 %v1094, %v1907
        %v1963 = vmul.f32 %v1096, %v1909
        %v1964 = vmul.f32 %v1098, %v1911
        %v1965 = vmul.f32 %v1100, %v1913
        %v1966 = vmul.f32 %v1104, %v1915
        %v1967 = vmul.f32 %v1106, %v1917
        %v1968 = vmul.f32 %v1108, %v1919
        %v1969 = vmul.f32 %v1110, %v1921
        %v1970 = vmul.f32 %v1114, %v1923
        %v1971 = vmul.f32 %v1116, %v1925
        %v1972 = vmul.f32 %v1118, %v1927
        %v1973 = vmul.f32 %v1120, %v1929
        %v1974 = vmul.f32 %v1124, %v1931
        %v1975 = vmul.f32 %v1126, %v1933
        %v1976 = vmul.f32 %v1128, %v1935
        %v1977 = vmul.f32 %v1130, %v1937
        %v1978 = vmul.f32 %v1134, %v1939
        %v1979 = vmul.f32 %v1136, %v1941
        %v1980 = vmul.f32 %v1138, %v1943
        %v1981 = vmul.f32 %v1140, %v1945
        %v1982 = vmul.f32 %v1144, %v1947
        %v1983 = vmul.f32 %v1146, %v1949
        %v1984 = vmul.f32 %v1148, %v1951
        %v1985 = vmul.f32 %v1150, %v1953
        %v1986 = vmul.f32 %v1954, %v1684
        %v1987 = vmul.f32 %v1955, %v1686
        %v1988 = vmul.f32 %v1956, %v1688
        %v1989 = vmul.f32 %v1957, %v1690
        %v1990 = vmul.f32 %v1958, %v1694
        %v1991 = vmul.f32 %v1959, %v1696
        %v1992 = vmul.f32 %v1960, %v1698
        %v1993 = vmul.f32 %v1961, %v1700
        %v1994 = vmul.f32 %v1962, %v1704
        %v1995 = vmul.f32 %v1963, %v1706
        %v1996 = vmul.f32 %v1964, %v1708
        %v1997 = vmul.f32 %v1965, %v1710
        %v1998 = vmul.f32 %v1966, %v1714
        %v1999 = vmul.f32 %v1967, %v1716
        %v2000 = vmul.f32 %v1968, %v1718
        %v2001 = vmul.f32 %v1969, %v1720
        %v2002 = vmul.f32 %v1970, %v1724
        %v2003 = vmul.f32 %v1971, %v1726
        %v2004 = vmul.f32 %v1972, %v1728
        %v2005 = vmul.f32 %v1973, %v1730
        %v2006 = vmul.f32 %v1974, %v1734
        %v2007 = vmul.f32 %v1975, %v1736
        %v2008 = vmul.f32 %v1976, %v1738
        %v2009 = vmul.f32 %v1977, %v1740
        %v2010 = vmul.f32 %v1978, %v1744
        %v2011 = vmul.f32 %v1979, %v1746
        %v2012 = vmul.f32 %v1980, %v1748
        %v2013 = vmul.f32 %v1981, %v1750
        %v2014 = vmul.f32 %v1982, %v1754
        %v2015 = vmul.f32 %v1983, %v1756
        %v2016 = vmul.f32 %v1984, %v1758
        %v2017 = vmul.f32 %v1985, %v1760
        %v2018 = vpack.c.bf16 %v1988, %v1986
        %v2019 = vpack.c.bf16 %v1989, %v1987
        %v2020 = vpack.c.bf16 %v1992, %v1990
        %v2021 = vpack.c.bf16 %v1993, %v1991
        %v2022 = vpack.c.bf16 %v1996, %v1994
        %v2023 = vpack.c.bf16 %v1997, %v1995
        %v2024 = vpack.c.bf16 %v2000, %v1998
        %v2025 = vpack.c.bf16 %v2001, %v1999
        %v2026 = vpack.c.bf16 %v2004, %v2002
        %v2027 = vpack.c.bf16 %v2005, %v2003
        %v2028 = vpack.c.bf16 %v2008, %v2006
        %v2029 = vpack.c.bf16 %v2009, %v2007
        %v2030 = vpack.c.bf16 %v2012, %v2010
        %v2031 = vpack.c.bf16 %v2013, %v2011
        %v2032 = vpack.c.bf16 %v2016, %v2014
        %v2033 = vpack.c.bf16 %v2017, %v2015
        %v2034 = vld [vmem:[%s307] sm:$0xff]
        %v2035 = vld [vmem:[%s307 + $0x8] sm:$0xff]
        %v2036 = vld [vmem:[%s307 + $0x10] sm:$0xff]
        %v2037 = vld [vmem:[%s307 + $0x18] sm:$0xff]
        %v2038 = vld [vmem:[%s307 + $0x20] sm:$0xff]
        %v2039 = vld [vmem:[%s307 + $0x28] sm:$0xff]
        %v2040 = vld [vmem:[%s307 + $0x30] sm:$0xff]
        %v2041 = vld [vmem:[%s307 + $0x38] sm:$0xff]
        %v2042 = vld [vmem:[%s307 + $0x40] sm:$0xff]
        %v2043 = vld [vmem:[%s307 + $0x48] sm:$0xff]
        %v2044 = vld [vmem:[%s307 + $0x50] sm:$0xff]
        %v2045 = vld [vmem:[%s307 + $0x58] sm:$0xff]
        %v2046 = vld [vmem:[%s307 + $0x60] sm:$0xff]
        %v2047 = vld [vmem:[%s307 + $0x68] sm:$0xff]
        %v2048 = vld [vmem:[%s307 + $0x70] sm:$0xff]
        %v2049 = vld [vmem:[%s307 + $0x78] sm:$0xff]
        %v2050 = vld [vmem:[%s307 + $0x80] sm:$0xff]
        %v2051 = vld [vmem:[%s307 + $0x88] sm:$0xff]
        %v2052 = vld [vmem:[%s307 + $0x90] sm:$0xff]
        %v2053 = vld [vmem:[%s307 + $0x98] sm:$0xff]
        %v2054 = vld [vmem:[%s307 + $0xa0] sm:$0xff]
        %v2055 = vld [vmem:[%s307 + $0xa8] sm:$0xff]
        %v2056 = vld [vmem:[%s307 + $0xb0] sm:$0xff]
        %v2057 = vld [vmem:[%s307 + $0xb8] sm:$0xff]
        %v2058 = vld [vmem:[%s307 + $0xc0] sm:$0xff]
        %v2059 = vld [vmem:[%s307 + $0xc8] sm:$0xff]
        %v2060 = vld [vmem:[%s307 + $0xd0] sm:$0xff]
        %v2061 = vld [vmem:[%s307 + $0xd8] sm:$0xff]
        %v2062 = vld [vmem:[%s307 + $0xe0] sm:$0xff]
        %v2063 = vld [vmem:[%s307 + $0xe8] sm:$0xff]
        %v2064 = vld [vmem:[%s307 + $0xf0] sm:$0xff]
        %v2065 = vld [vmem:[%s307 + $0xf8] sm:$0xff]
        %v2066 = vld [vmem:[%s307 + $0x100] sm:$0xff]
        %v2067 = vld [vmem:[%s307 + $0x108] sm:$0xff]
        %v2068 = vld [vmem:[%s307 + $0x110] sm:$0xff]
        %v2069 = vld [vmem:[%s307 + $0x118] sm:$0xff]
        %v2070 = vld [vmem:[%s307 + $0x120] sm:$0xff]
        %v2071 = vld [vmem:[%s307 + $0x128] sm:$0xff]
        %v2072 = vld [vmem:[%s307 + $0x130] sm:$0xff]
        %v2073 = vld [vmem:[%s307 + $0x138] sm:$0xff]
        %v2074 = vld [vmem:[%s307 + $0x140] sm:$0xff]
        %v2075 = vld [vmem:[%s307 + $0x148] sm:$0xff]
        %v2076 = vld [vmem:[%s307 + $0x150] sm:$0xff]
        %v2077 = vld [vmem:[%s307 + $0x158] sm:$0xff]
        %v2078 = vld [vmem:[%s307 + $0x160] sm:$0xff]
        %v2079 = vld [vmem:[%s307 + $0x168] sm:$0xff]
        %v2080 = vld [vmem:[%s307 + $0x170] sm:$0xff]
        %v2081 = vld [vmem:[%s307 + $0x178] sm:$0xff]
        %v2082 = vld [vmem:[%s307 + $0x180] sm:$0xff]
        %v2083 = vld [vmem:[%s307 + $0x188] sm:$0xff]
        %v2084 = vld [vmem:[%s307 + $0x190] sm:$0xff]
        %v2085 = vld [vmem:[%s307 + $0x198] sm:$0xff]
        %v2086 = vld [vmem:[%s307 + $0x1a0] sm:$0xff]
        %v2087 = vld [vmem:[%s307 + $0x1a8] sm:$0xff]
        %v2088 = vld [vmem:[%s307 + $0x1b0] sm:$0xff]
        %v2089 = vld [vmem:[%s307 + $0x1b8] sm:$0xff]
        %v2090 = vld [vmem:[%s307 + $0x1c0] sm:$0xff]
        %v2091 = vld [vmem:[%s307 + $0x1c8] sm:$0xff]
        %v2092 = vld [vmem:[%s307 + $0x1d0] sm:$0xff]
        %v2093 = vld [vmem:[%s307 + $0x1d8] sm:$0xff]
        %v2094 = vld [vmem:[%s307 + $0x1e0] sm:$0xff]
        %v2095 = vld [vmem:[%s307 + $0x1e8] sm:$0xff]
        %v2096 = vld [vmem:[%s307 + $0x1f0] sm:$0xff]
        %v2097 = vld [vmem:[%s307 + $0x1f8] sm:$0xff]
        %v2162 = vunpack.c.l.b16 %v2034
        %v2163 = vunpack.c.h.b16 %v2034
        %v2164 = vunpack.c.l.b16 %v2035
        %v2165 = vunpack.c.h.b16 %v2035
        %v2166 = vunpack.c.l.b16 %v2036
        %v2167 = vunpack.c.h.b16 %v2036
        %v2168 = vunpack.c.l.b16 %v2037
        %v2169 = vunpack.c.h.b16 %v2037
        %v2170 = vunpack.c.l.b16 %v2038
        %v2171 = vunpack.c.h.b16 %v2038
        %v2172 = vunpack.c.l.b16 %v2039
        %v2173 = vunpack.c.h.b16 %v2039
        %v2174 = vunpack.c.l.b16 %v2040
        %v2175 = vunpack.c.h.b16 %v2040
        %v2176 = vunpack.c.l.b16 %v2041
        %v2177 = vunpack.c.h.b16 %v2041
        %v2178 = vunpack.c.l.b16 %v2042
        %v2179 = vunpack.c.h.b16 %v2042
        %v2180 = vunpack.c.l.b16 %v2043
        %v2181 = vunpack.c.h.b16 %v2043
        %v2182 = vunpack.c.l.b16 %v2044
        %v2183 = vunpack.c.h.b16 %v2044
        %v2184 = vunpack.c.l.b16 %v2045
        %v2185 = vunpack.c.h.b16 %v2045
        %v2186 = vunpack.c.l.b16 %v2046
        %v2187 = vunpack.c.h.b16 %v2046
        %v2188 = vunpack.c.l.b16 %v2047
        %v2189 = vunpack.c.h.b16 %v2047
        %v2190 = vunpack.c.l.b16 %v2048
        %v2191 = vunpack.c.h.b16 %v2048
        %v2192 = vunpack.c.l.b16 %v2049
        %v2193 = vunpack.c.h.b16 %v2049
        %v2194 = vunpack.c.l.b16 %v2050
        %v2195 = vunpack.c.h.b16 %v2050
        %v2196 = vunpack.c.l.b16 %v2051
        %v2197 = vunpack.c.h.b16 %v2051
        %v2198 = vunpack.c.l.b16 %v2052
        %v2199 = vunpack.c.h.b16 %v2052
        %v2200 = vunpack.c.l.b16 %v2053
        %v2201 = vunpack.c.h.b16 %v2053
        %v2202 = vunpack.c.l.b16 %v2054
        %v2203 = vunpack.c.h.b16 %v2054
        %v2204 = vunpack.c.l.b16 %v2055
        %v2205 = vunpack.c.h.b16 %v2055
        %v2206 = vunpack.c.l.b16 %v2056
        %v2207 = vunpack.c.h.b16 %v2056
        %v2208 = vunpack.c.l.b16 %v2057
        %v2209 = vunpack.c.h.b16 %v2057
        %v2210 = vunpack.c.l.b16 %v2058
        %v2211 = vunpack.c.h.b16 %v2058
        %v2212 = vunpack.c.l.b16 %v2059
        %v2213 = vunpack.c.h.b16 %v2059
        %v2214 = vunpack.c.l.b16 %v2060
        %v2215 = vunpack.c.h.b16 %v2060
        %v2216 = vunpack.c.l.b16 %v2061
        %v2217 = vunpack.c.h.b16 %v2061
        %v2218 = vunpack.c.l.b16 %v2062
        %v2219 = vunpack.c.h.b16 %v2062
        %v2220 = vunpack.c.l.b16 %v2063
        %v2221 = vunpack.c.h.b16 %v2063
        %v2222 = vunpack.c.l.b16 %v2064
        %v2223 = vunpack.c.h.b16 %v2064
        %v2224 = vunpack.c.l.b16 %v2065
        %v2225 = vunpack.c.h.b16 %v2065
        %v2226 = vunpack.c.l.b16 %v2066
        %v2227 = vunpack.c.h.b16 %v2066
        %v2228 = vunpack.c.l.b16 %v2067
        %v2229 = vunpack.c.h.b16 %v2067
        %v2230 = vunpack.c.l.b16 %v2068
        %v2231 = vunpack.c.h.b16 %v2068
        %v2232 = vunpack.c.l.b16 %v2069
        %v2233 = vunpack.c.h.b16 %v2069
        %v2234 = vunpack.c.l.b16 %v2070
        %v2235 = vunpack.c.h.b16 %v2070
        %v2236 = vunpack.c.l.b16 %v2071
        %v2237 = vunpack.c.h.b16 %v2071
        %v2238 = vunpack.c.l.b16 %v2072
        %v2239 = vunpack.c.h.b16 %v2072
        %v2240 = vunpack.c.l.b16 %v2073
        %v2241 = vunpack.c.h.b16 %v2073
        %v2242 = vunpack.c.l.b16 %v2074
        %v2243 = vunpack.c.h.b16 %v2074
        %v2244 = vunpack.c.l.b16 %v2075
        %v2245 = vunpack.c.h.b16 %v2075
        %v2246 = vunpack.c.l.b16 %v2076
        %v2247 = vunpack.c.h.b16 %v2076
        %v2248 = vunpack.c.l.b16 %v2077
        %v2249 = vunpack.c.h.b16 %v2077
        %v2250 = vunpack.c.l.b16 %v2078
        %v2251 = vunpack.c.h.b16 %v2078
        %v2252 = vunpack.c.l.b16 %v2079
        %v2253 = vunpack.c.h.b16 %v2079
        %v2254 = vunpack.c.l.b16 %v2080
        %v2255 = vunpack.c.h.b16 %v2080
        %v2256 = vunpack.c.l.b16 %v2081
        %v2257 = vunpack.c.h.b16 %v2081
        %v2258 = vunpack.c.l.b16 %v2082
        %v2259 = vunpack.c.h.b16 %v2082
        %v2260 = vunpack.c.l.b16 %v2083
        %v2261 = vunpack.c.h.b16 %v2083
        %v2262 = vunpack.c.l.b16 %v2084
        %v2263 = vunpack.c.h.b16 %v2084
        %v2264 = vunpack.c.l.b16 %v2085
        %v2265 = vunpack.c.h.b16 %v2085
        %v2266 = vunpack.c.l.b16 %v2086
        %v2267 = vunpack.c.h.b16 %v2086
        %v2268 = vunpack.c.l.b16 %v2087
        %v2269 = vunpack.c.h.b16 %v2087
        %v2270 = vunpack.c.l.b16 %v2088
        %v2271 = vunpack.c.h.b16 %v2088
        %v2272 = vunpack.c.l.b16 %v2089
        %v2273 = vunpack.c.h.b16 %v2089
        %v2274 = vunpack.c.l.b16 %v2090
        %v2275 = vunpack.c.h.b16 %v2090
        %v2276 = vunpack.c.l.b16 %v2091
        %v2277 = vunpack.c.h.b16 %v2091
        %v2278 = vunpack.c.l.b16 %v2092
        %v2279 = vunpack.c.h.b16 %v2092
        %v2280 = vunpack.c.l.b16 %v2093
        %v2281 = vunpack.c.h.b16 %v2093
        %v2282 = vunpack.c.l.b16 %v2094
        %v2283 = vunpack.c.h.b16 %v2094
        %v2284 = vunpack.c.l.b16 %v2095
        %v2285 = vunpack.c.h.b16 %v2095
        %v2286 = vunpack.c.l.b16 %v2096
        %v2287 = vunpack.c.h.b16 %v2096
        %v2288 = vunpack.c.l.b16 %v2097
        %v2289 = vunpack.c.h.b16 %v2097
        %v2290 = vpack.c.b16 %v2166, %v2162
        %v2291 = vpack.c.b16 %v2167, %v2163
        %v2292 = vpack.c.b16 %v2168, %v2164
        %v2293 = vpack.c.b16 %v2169, %v2165
        %v2294 = vpack.c.b16 %v2174, %v2170
        %v2295 = vpack.c.b16 %v2175, %v2171
        %v2296 = vpack.c.b16 %v2176, %v2172
        %v2297 = vpack.c.b16 %v2177, %v2173
        %v2298 = vpack.c.b16 %v2182, %v2178
        %v2299 = vpack.c.b16 %v2183, %v2179
        %v2300 = vpack.c.b16 %v2184, %v2180
        %v2301 = vpack.c.b16 %v2185, %v2181
        %v2302 = vpack.c.b16 %v2190, %v2186
        %v2303 = vpack.c.b16 %v2191, %v2187
        %v2304 = vpack.c.b16 %v2192, %v2188
        %v2305 = vpack.c.b16 %v2193, %v2189
        %v2306 = vpack.c.b16 %v2198, %v2194
        %v2307 = vpack.c.b16 %v2199, %v2195
        %v2308 = vpack.c.b16 %v2200, %v2196
        %v2309 = vpack.c.b16 %v2201, %v2197
        %v2310 = vpack.c.b16 %v2206, %v2202
        %v2311 = vpack.c.b16 %v2207, %v2203
        %v2312 = vpack.c.b16 %v2208, %v2204
        %v2313 = vpack.c.b16 %v2209, %v2205
        %v2314 = vpack.c.b16 %v2214, %v2210
        %v2315 = vpack.c.b16 %v2215, %v2211
        %v2316 = vpack.c.b16 %v2216, %v2212
        %v2317 = vpack.c.b16 %v2217, %v2213
        %v2318 = vpack.c.b16 %v2222, %v2218
        %v2319 = vpack.c.b16 %v2223, %v2219
        %v2320 = vpack.c.b16 %v2224, %v2220
        %v2321 = vpack.c.b16 %v2225, %v2221
        %v2322 = vpack.c.b16 %v2230, %v2226
        %v2323 = vpack.c.b16 %v2231, %v2227
        %v2324 = vpack.c.b16 %v2232, %v2228
        %v2325 = vpack.c.b16 %v2233, %v2229
        %v2326 = vpack.c.b16 %v2238, %v2234
        %v2327 = vpack.c.b16 %v2239, %v2235
        %v2328 = vpack.c.b16 %v2240, %v2236
        %v2329 = vpack.c.b16 %v2241, %v2237
        %v2330 = vpack.c.b16 %v2246, %v2242
        %v2331 = vpack.c.b16 %v2247, %v2243
        %v2332 = vpack.c.b16 %v2248, %v2244
        %v2333 = vpack.c.b16 %v2249, %v2245
        %v2334 = vpack.c.b16 %v2254, %v2250
        %v2335 = vpack.c.b16 %v2255, %v2251
        %v2336 = vpack.c.b16 %v2256, %v2252
        %v2337 = vpack.c.b16 %v2257, %v2253
        %v2338 = vpack.c.b16 %v2262, %v2258
        %v2339 = vpack.c.b16 %v2263, %v2259
        %v2340 = vpack.c.b16 %v2264, %v2260
        %v2341 = vpack.c.b16 %v2265, %v2261
        %v2342 = vpack.c.b16 %v2270, %v2266
        %v2343 = vpack.c.b16 %v2271, %v2267
        %v2344 = vpack.c.b16 %v2272, %v2268
        %v2345 = vpack.c.b16 %v2273, %v2269
        %v2346 = vpack.c.b16 %v2278, %v2274
        %v2347 = vpack.c.b16 %v2279, %v2275
        %v2348 = vpack.c.b16 %v2280, %v2276
        %v2349 = vpack.c.b16 %v2281, %v2277
        %v2350 = vpack.c.b16 %v2286, %v2282
        %v2351 = vpack.c.b16 %v2287, %v2283
        %v2352 = vpack.c.b16 %v2288, %v2284
        %v2353 = vpack.c.b16 %v2289, %v2285
        %2418 = vmatprep.subr.bf16.mxu0 %v2291
        %2419 = vmatpush1.bf16.msra.mxu0 %v2290
        %2420 = vmatprep.subr.bf16.mxu0 %v2295
        %2421 = vmatpush1.bf16.msra.mxu0 %v2294
        %2422 = vmatprep.subr.bf16.mxu0 %v2299
        %2423 = vmatpush1.bf16.msra.mxu0 %v2298
        %2424 = vmatprep.subr.bf16.mxu0 %v2303
        %2425 = vmatpush1.bf16.msra.mxu0 %v2302
        %2426 = vmatprep.subr.bf16.mxu0 %v2307
        %2427 = vmatpush1.bf16.msra.mxu0 %v2306
        %2428 = vmatprep.subr.bf16.mxu0 %v2311
        %2429 = vmatpush1.bf16.msra.mxu0 %v2310
        %2430 = vmatprep.subr.bf16.mxu0 %v2315
        %2431 = vmatpush1.bf16.msra.mxu0 %v2314
        %2432 = vmatprep.subr.bf16.mxu0 %v2319
        %2433 = vmatpush1.bf16.msra.mxu0 %v2318
        %2434 = vmatprep.subr.bf16.mxu0 %v2323
        %2435 = vmatpush1.bf16.msra.mxu0 %v2322
        %2436 = vmatprep.subr.bf16.mxu0 %v2327
        %2437 = vmatpush1.bf16.msra.mxu0 %v2326
        %2438 = vmatprep.subr.bf16.mxu0 %v2331
        %2439 = vmatpush1.bf16.msra.mxu0 %v2330
        %2440 = vmatprep.subr.bf16.mxu0 %v2335
        %2441 = vmatpush1.bf16.msra.mxu0 %v2334
        %2442 = vmatprep.subr.bf16.mxu0 %v2339
        %2443 = vmatpush1.bf16.msra.mxu0 %v2338
        %2444 = vmatprep.subr.bf16.mxu0 %v2343
        %2445 = vmatpush1.bf16.msra.mxu0 %v2342
        %2446 = vmatprep.subr.bf16.mxu0 %v2347
        %2447 = vmatpush1.bf16.msra.mxu0 %v2346
        %2448 = vmatprep.subr.bf16.mxu0 %v2351
        %2449 = vmatpush1.bf16.msra.mxu0 %v2350
        %2450 = vmatprep.mubr.bf16.mxu0 %v2019
        %2451 = vmatmul.mubr.bf16.gmra.mrb[0].mxu0 %v2018
        %v2452 = vpop.f32.mrb[0].mxu0
        %v2453 = vadd.f32 0.0, %v2452
        %v2454 = vpop.f32.mrb[0].mxu0
        %v2455 = vadd.f32 0.0, %v2454
        %v2456 = vpop.f32.mrb[0].mxu0
        %v2457 = vadd.f32 0.0, %v2456
        %v2458 = vpop.f32.mrb[0].mxu0
        %v2459 = vadd.f32 0.0, %v2458
        %2460 = vmatprep.mubr.bf16.mxu0 %v2021
        %2461 = vmatmul.mubr.bf16.gmra.mrb[0].mxu0 %v2020
        %v2462 = vpop.f32.mrb[0].mxu0
        %v2463 = vadd.f32 0.0, %v2462
        %v2464 = vpop.f32.mrb[0].mxu0
        %v2465 = vadd.f32 0.0, %v2464
        %v2466 = vpop.f32.mrb[0].mxu0
        %v2467 = vadd.f32 0.0, %v2466
        %v2468 = vpop.f32.mrb[0].mxu0
        %v2469 = vadd.f32 0.0, %v2468
        %2470 = vmatprep.mubr.bf16.mxu0 %v2023
        %2471 = vmatmul.mubr.bf16.gmra.mrb[0].mxu0 %v2022
        %v2472 = vpop.f32.mrb[0].mxu0
        %v2473 = vadd.f32 0.0, %v2472
        %v2474 = vpop.f32.mrb[0].mxu0
        %v2475 = vadd.f32 0.0, %v2474
        %v2476 = vpop.f32.mrb[0].mxu0
        %v2477 = vadd.f32 0.0, %v2476
        %v2478 = vpop.f32.mrb[0].mxu0
        %v2479 = vadd.f32 0.0, %v2478
        %2480 = vmatprep.mubr.bf16.mxu0 %v2025
        %2481 = vmatmul.mubr.bf16.gmra.mrb[0].mxu0 %v2024
        %v2482 = vpop.f32.mrb[0].mxu0
        %v2483 = vadd.f32 0.0, %v2482
        %v2484 = vpop.f32.mrb[0].mxu0
        %v2485 = vadd.f32 0.0, %v2484
        %v2486 = vpop.f32.mrb[0].mxu0
        %v2487 = vadd.f32 0.0, %v2486
        %v2488 = vpop.f32.mrb[0].mxu0
        %v2489 = vadd.f32 0.0, %v2488
        %2490 = vmatprep.mubr.bf16.mxu0 %v2027
        %2491 = vmatmul.mubr.bf16.gmra.mrb[0].mxu0 %v2026
        %v2492 = vpop.f32.mrb[0].mxu0
        %v2493 = vadd.f32 0.0, %v2492
        %v2494 = vpop.f32.mrb[0].mxu0
        %v2495 = vadd.f32 0.0, %v2494
        %v2496 = vpop.f32.mrb[0].mxu0
        %v2497 = vadd.f32 0.0, %v2496
        %v2498 = vpop.f32.mrb[0].mxu0
        %v2499 = vadd.f32 0.0, %v2498
        %2500 = vmatprep.mubr.bf16.mxu0 %v2029
        %2501 = vmatmul.mubr.bf16.gmra.mrb[0].mxu0 %v2028
        %v2502 = vpop.f32.mrb[0].mxu0
        %v2503 = vadd.f32 0.0, %v2502
        %v2504 = vpop.f32.mrb[0].mxu0
        %v2505 = vadd.f32 0.0, %v2504
        %v2506 = vpop.f32.mrb[0].mxu0
        %v2507 = vadd.f32 0.0, %v2506
        %v2508 = vpop.f32.mrb[0].mxu0
        %v2509 = vadd.f32 0.0, %v2508
        %2510 = vmatprep.mubr.bf16.mxu0 %v2031
        %2511 = vmatmul.mubr.bf16.gmra.mrb[0].mxu0 %v2030
        %v2512 = vpop.f32.mrb[0].mxu0
        %v2513 = vadd.f32 0.0, %v2512
        %v2514 = vpop.f32.mrb[0].mxu0
        %v2515 = vadd.f32 0.0, %v2514
        %v2516 = vpop.f32.mrb[0].mxu0
        %v2517 = vadd.f32 0.0, %v2516
        %v2518 = vpop.f32.mrb[0].mxu0
        %v2519 = vadd.f32 0.0, %v2518
        %2520 = vmatprep.mubr.bf16.mxu0 %v2033
        %2521 = vmatmul.mubr.bf16.gmra.mrb[0].mxu0 %v2032
        %v2522 = vpop.f32.mrb[0].mxu0
        %v2523 = vadd.f32 0.0, %v2522
        %v2524 = vpop.f32.mrb[0].mxu0
        %v2525 = vadd.f32 0.0, %v2524
        %v2526 = vpop.f32.mrb[0].mxu0
        %v2527 = vadd.f32 0.0, %v2526
        %v2528 = vpop.f32.mrb[0].mxu0
        %v2529 = vadd.f32 0.0, %v2528
        %2530 = vdwg.mxu0
        %2531 = vmatprep.subr.bf16.mxu0 %v2293
        %2532 = vmatpush1.bf16.msra.mxu0 %v2292
        %2533 = vmatprep.subr.bf16.mxu0 %v2297
        %2534 = vmatpush1.bf16.msra.mxu0 %v2296
        %2535 = vmatprep.subr.bf16.mxu0 %v2301
        %2536 = vmatpush1.bf16.msra.mxu0 %v2300
        %2537 = vmatprep.subr.bf16.mxu0 %v2305
        %2538 = vmatpush1.bf16.msra.mxu0 %v2304
        %2539 = vmatprep.subr.bf16.mxu0 %v2309
        %2540 = vmatpush1.bf16.msra.mxu0 %v2308
        %2541 = vmatprep.subr.bf16.mxu0 %v2313
        %2542 = vmatpush1.bf16.msra.mxu0 %v2312
        %2543 = vmatprep.subr.bf16.mxu0 %v2317
        %2544 = vmatpush1.bf16.msra.mxu0 %v2316
        %2545 = vmatprep.subr.bf16.mxu0 %v2321
        %2546 = vmatpush1.bf16.msra.mxu0 %v2320
        %2547 = vmatprep.subr.bf16.mxu0 %v2325
        %2548 = vmatpush1.bf16.msra.mxu0 %v2324
        %2549 = vmatprep.subr.bf16.mxu0 %v2329
        %2550 = vmatpush1.bf16.msra.mxu0 %v2328
        %2551 = vmatprep.subr.bf16.mxu0 %v2333
        %2552 = vmatpush1.bf16.msra.mxu0 %v2332
        %2553 = vmatprep.subr.bf16.mxu0 %v2337
        %2554 = vmatpush1.bf16.msra.mxu0 %v2336
        %2555 = vmatprep.subr.bf16.mxu0 %v2341
        %2556 = vmatpush1.bf16.msra.mxu0 %v2340
        %2557 = vmatprep.subr.bf16.mxu0 %v2345
        %2558 = vmatpush1.bf16.msra.mxu0 %v2344
        %2559 = vmatprep.subr.bf16.mxu0 %v2349
        %2560 = vmatpush1.bf16.msra.mxu0 %v2348
        %2561 = vmatprep.subr.bf16.mxu0 %v2353
        %2562 = vmatpush1.bf16.msra.mxu0 %v2352
        %2563 = vmatprep.mubr.bf16.mxu0 %v2019
        %2564 = vmatmul.mubr.bf16.gmra.mrb[0].mxu0 %v2018
        %v2565 = vpop.f32.mrb[0].mxu0
        %v2566 = vadd.f32 0.0, %v2565
        %v2567 = vpop.f32.mrb[0].mxu0
        %v2568 = vadd.f32 0.0, %v2567
        %v2569 = vpop.f32.mrb[0].mxu0
        %v2570 = vadd.f32 0.0, %v2569
        %v2571 = vpop.f32.mrb[0].mxu0
        %v2572 = vadd.f32 0.0, %v2571
        %2573 = vmatprep.mubr.bf16.mxu0 %v2021
        %2574 = vmatmul.mubr.bf16.gmra.mrb[0].mxu0 %v2020
        %v2575 = vpop.f32.mrb[0].mxu0
        %v2576 = vadd.f32 0.0, %v2575
        %v2577 = vpop.f32.mrb[0].mxu0
        %v2578 = vadd.f32 0.0, %v2577
        %v2579 = vpop.f32.mrb[0].mxu0
        %v2580 = vadd.f32 0.0, %v2579
        %v2581 = vpop.f32.mrb[0].mxu0
        %v2582 = vadd.f32 0.0, %v2581
        %2583 = vmatprep.mubr.bf16.mxu0 %v2023
        %2584 = vmatmul.mubr.bf16.gmra.mrb[0].mxu0 %v2022
        %v2585 = vpop.f32.mrb[0].mxu0
        %v2586 = vadd.f32 0.0, %v2585
        %v2587 = vpop.f32.mrb[0].mxu0
        %v2588 = vadd.f32 0.0, %v2587
        %v2589 = vpop.f32.mrb[0].mxu0
        %v2590 = vadd.f32 0.0, %v2589
        %v2591 = vpop.f32.mrb[0].mxu0
        %v2592 = vadd.f32 0.0, %v2591
        %2593 = vmatprep.mubr.bf16.mxu0 %v2025
        %2594 = vmatmul.mubr.bf16.gmra.mrb[0].mxu0 %v2024
        %v2595 = vpop.f32.mrb[0].mxu0
        %v2596 = vadd.f32 0.0, %v2595
        %v2597 = vpop.f32.mrb[0].mxu0
        %v2598 = vadd.f32 0.0, %v2597
        %v2599 = vpop.f32.mrb[0].mxu0
        %v2600 = vadd.f32 0.0, %v2599
        %v2601 = vpop.f32.mrb[0].mxu0
        %v2602 = vadd.f32 0.0, %v2601
        %2603 = vmatprep.mubr.bf16.mxu0 %v2027
        %2604 = vmatmul.mubr.bf16.gmra.mrb[0].mxu0 %v2026
        %v2605 = vpop.f32.mrb[0].mxu0
        %v2606 = vadd.f32 0.0, %v2605
        %v2607 = vpop.f32.mrb[0].mxu0
        %v2608 = vadd.f32 0.0, %v2607
        %v2609 = vpop.f32.mrb[0].mxu0
        %v2610 = vadd.f32 0.0, %v2609
        %v2611 = vpop.f32.mrb[0].mxu0
        %v2612 = vadd.f32 0.0, %v2611
        %2613 = vmatprep.mubr.bf16.mxu0 %v2029
        %2614 = vmatmul.mubr.bf16.gmra.mrb[0].mxu0 %v2028
        %v2615 = vpop.f32.mrb[0].mxu0
        %v2616 = vadd.f32 0.0, %v2615
        %v2617 = vpop.f32.mrb[0].mxu0
        %v2618 = vadd.f32 0.0, %v2617
        %v2619 = vpop.f32.mrb[0].mxu0
        %v2620 = vadd.f32 0.0, %v2619
        %v2621 = vpop.f32.mrb[0].mxu0
        %v2622 = vadd.f32 0.0, %v2621
        %2623 = vmatprep.mubr.bf16.mxu0 %v2031
        %2624 = vmatmul.mubr.bf16.gmra.mrb[0].mxu0 %v2030
        %v2625 = vpop.f32.mrb[0].mxu0
        %v2626 = vadd.f32 0.0, %v2625
        %v2627 = vpop.f32.mrb[0].mxu0
        %v2628 = vadd.f32 0.0, %v2627
        %v2629 = vpop.f32.mrb[0].mxu0
        %v2630 = vadd.f32 0.0, %v2629
        %v2631 = vpop.f32.mrb[0].mxu0
        %v2632 = vadd.f32 0.0, %v2631
        %2633 = vmatprep.mubr.bf16.mxu0 %v2033
        %2634 = vmatmul.mubr.bf16.gmra.mrb[0].mxu0 %v2032
        %v2635 = vpop.f32.mrb[0].mxu0
        %v2636 = vadd.f32 0.0, %v2635
        %v2637 = vpop.f32.mrb[0].mxu0
        %v2638 = vadd.f32 0.0, %v2637
        %v2639 = vpop.f32.mrb[0].mxu0
        %v2640 = vadd.f32 0.0, %v2639
        %v2641 = vpop.f32.mrb[0].mxu0
        %v2642 = vadd.f32 0.0, %v2641
        %2643 = vdwg.mxu0
        %p2644 = scmp.eq.s32.totalorder %s32, 0
        // Predicated region
        $region53: #{mlp_forward.1} parent=35 // pred_check
          %p2645 = pneg %p2644
        $region54: #{mlp_forward.1} parent=35 // pred_check_branch
          %2647 = sbr.rel (%p2645) target = $region56
        $region55: #{mlp_forward.1} parent=35 // pred_region
          %2648 = vst [vmem:[#allocation2] sm:$0xff] %v2453
          %2649 = vst [vmem:[#allocation2 + $0x8] sm:$0xff] %v2455
          %2650 = vst [vmem:[#allocation2 + $0x10] sm:$0xff] %v2566
          %2651 = vst [vmem:[#allocation2 + $0x18] sm:$0xff] %v2568
          %2652 = vst [vmem:[#allocation2 + $0x20] sm:$0xff] %v2457
          %2653 = vst [vmem:[#allocation2 + $0x28] sm:$0xff] %v2459
          %2654 = vst [vmem:[#allocation2 + $0x30] sm:$0xff] %v2570
          %2655 = vst [vmem:[#allocation2 + $0x38] sm:$0xff] %v2572
          %2656 = vst [vmem:[#allocation2 + $0x40] sm:$0xff] %v2463
          %2657 = vst [vmem:[#allocation2 + $0x48] sm:$0xff] %v2465
          %2658 = vst [vmem:[#allocation2 + $0x50] sm:$0xff] %v2576
          %2659 = vst [vmem:[#allocation2 + $0x58] sm:$0xff] %v2578
          %2660 = vst [vmem:[#allocation2 + $0x60] sm:$0xff] %v2467
          %2661 = vst [vmem:[#allocation2 + $0x68] sm:$0xff] %v2469
          %2662 = vst [vmem:[#allocation2 + $0x70] sm:$0xff] %v2580
          %2663 = vst [vmem:[#allocation2 + $0x78] sm:$0xff] %v2582
          %2664 = vst [vmem:[#allocation2 + $0x80] sm:$0xff] %v2473
          %2665 = vst [vmem:[#allocation2 + $0x88] sm:$0xff] %v2475
          %2666 = vst [vmem:[#allocation2 + $0x90] sm:$0xff] %v2586
          %2667 = vst [vmem:[#allocation2 + $0x98] sm:$0xff] %v2588
          %2668 = vst [vmem:[#allocation2 + $0xa0] sm:$0xff] %v2477
          %2669 = vst [vmem:[#allocation2 + $0xa8] sm:$0xff] %v2479
          %2670 = vst [vmem:[#allocation2 + $0xb0] sm:$0xff] %v2590
          %2671 = vst [vmem:[#allocation2 + $0xb8] sm:$0xff] %v2592
          %2672 = vst [vmem:[#allocation2 + $0xc0] sm:$0xff] %v2483
          %2673 = vst [vmem:[#allocation2 + $0xc8] sm:$0xff] %v2485
          %2674 = vst [vmem:[#allocation2 + $0xd0] sm:$0xff] %v2596
          %2675 = vst [vmem:[#allocation2 + $0xd8] sm:$0xff] %v2598
          %2676 = vst [vmem:[#allocation2 + $0xe0] sm:$0xff] %v2487
          %2677 = vst [vmem:[#allocation2 + $0xe8] sm:$0xff] %v2489
          %2678 = vst [vmem:[#allocation2 + $0xf0] sm:$0xff] %v2600
          %2679 = vst [vmem:[#allocation2 + $0xf8] sm:$0xff] %v2602
          %2680 = vst [vmem:[#allocation2 + $0x100] sm:$0xff] %v2493
          %2681 = vst [vmem:[#allocation2 + $0x108] sm:$0xff] %v2495
          %2682 = vst [vmem:[#allocation2 + $0x110] sm:$0xff] %v2606
          %2683 = vst [vmem:[#allocation2 + $0x118] sm:$0xff] %v2608
          %2684 = vst [vmem:[#allocation2 + $0x120] sm:$0xff] %v2497
          %2685 = vst [vmem:[#allocation2 + $0x128] sm:$0xff] %v2499
          %2686 = vst [vmem:[#allocation2 + $0x130] sm:$0xff] %v2610
          %2687 = vst [vmem:[#allocation2 + $0x138] sm:$0xff] %v2612
          %2688 = vst [vmem:[#allocation2 + $0x140] sm:$0xff] %v2503
          %2689 = vst [vmem:[#allocation2 + $0x148] sm:$0xff] %v2505
          %2690 = vst [vmem:[#allocation2 + $0x150] sm:$0xff] %v2616
          %2691 = vst [vmem:[#allocation2 + $0x158] sm:$0xff] %v2618
          %2692 = vst [vmem:[#allocation2 + $0x160] sm:$0xff] %v2507
          %2693 = vst [vmem:[#allocation2 + $0x168] sm:$0xff] %v2509
          %2694 = vst [vmem:[#allocation2 + $0x170] sm:$0xff] %v2620
          %2695 = vst [vmem:[#allocation2 + $0x178] sm:$0xff] %v2622
          %2696 = vst [vmem:[#allocation2 + $0x180] sm:$0xff] %v2513
          %2697 = vst [vmem:[#allocation2 + $0x188] sm:$0xff] %v2515
          %2698 = vst [vmem:[#allocation2 + $0x190] sm:$0xff] %v2626
          %2699 = vst [vmem:[#allocation2 + $0x198] sm:$0xff] %v2628
          %2700 = vst [vmem:[#allocation2 + $0x1a0] sm:$0xff] %v2517
          %2701 = vst [vmem:[#allocation2 + $0x1a8] sm:$0xff] %v2519
          %2702 = vst [vmem:[#allocation2 + $0x1b0] sm:$0xff] %v2630
          %2703 = vst [vmem:[#allocation2 + $0x1b8] sm:$0xff] %v2632
          %2704 = vst [vmem:[#allocation2 + $0x1c0] sm:$0xff] %v2523
          %2705 = vst [vmem:[#allocation2 + $0x1c8] sm:$0xff] %v2525
          %2706 = vst [vmem:[#allocation2 + $0x1d0] sm:$0xff] %v2636
          %2707 = vst [vmem:[#allocation2 + $0x1d8] sm:$0xff] %v2638
          %2708 = vst [vmem:[#allocation2 + $0x1e0] sm:$0xff] %v2527
          %2709 = vst [vmem:[#allocation2 + $0x1e8] sm:$0xff] %v2529
          %2710 = vst [vmem:[#allocation2 + $0x1f0] sm:$0xff] %v2640
          %2711 = vst [vmem:[#allocation2 + $0x1f8] sm:$0xff] %v2642
        $region56: #{mlp_forward.1} parent=35 // pred_fallthru
          _
        %p2712 = scmp.gt.s32.totalorder %s32, 0
        %p2713 = scmp.lt.s32.totalorder %s32, 3
        %p2714 = pnand %p2712, %p2713
        %p2715 = pneg %p2714
        // Predicated region
        $region57: #{mlp_forward.1} parent=35 // pred_check
          _
        $region58: #{mlp_forward.1} parent=35 // pred_check_branch
          %2717 = sbr.rel (%p2714) target = $region60
        $region59: #{mlp_forward.1} parent=35 // pred_region
          %v2718 = vld [vmem:[#allocation2] sm:$0xff]
          %v2719 = vld [vmem:[#allocation2 + $0x8] sm:$0xff]
          %v2720 = vld [vmem:[#allocation2 + $0x10] sm:$0xff]
          %v2721 = vld [vmem:[#allocation2 + $0x18] sm:$0xff]
          %v2722 = vld [vmem:[#allocation2 + $0x20] sm:$0xff]
          %v2723 = vld [vmem:[#allocation2 + $0x28] sm:$0xff]
          %v2724 = vld [vmem:[#allocation2 + $0x30] sm:$0xff]
          %v2725 = vld [vmem:[#allocation2 + $0x38] sm:$0xff]
          %v2726 = vld [vmem:[#allocation2 + $0x40] sm:$0xff]
          %v2727 = vld [vmem:[#allocation2 + $0x48] sm:$0xff]
          %v2728 = vld [vmem:[#allocation2 + $0x50] sm:$0xff]
          %v2729 = vld [vmem:[#allocation2 + $0x58] sm:$0xff]
          %v2730 = vld [vmem:[#allocation2 + $0x60] sm:$0xff]
          %v2731 = vld [vmem:[#allocation2 + $0x68] sm:$0xff]
          %v2732 = vld [vmem:[#allocation2 + $0x70] sm:$0xff]
          %v2733 = vld [vmem:[#allocation2 + $0x78] sm:$0xff]
          %v2734 = vld [vmem:[#allocation2 + $0x80] sm:$0xff]
          %v2735 = vld [vmem:[#allocation2 + $0x88] sm:$0xff]
          %v2736 = vld [vmem:[#allocation2 + $0x90] sm:$0xff]
          %v2737 = vld [vmem:[#allocation2 + $0x98] sm:$0xff]
          %v2738 = vld [vmem:[#allocation2 + $0xa0] sm:$0xff]
          %v2739 = vld [vmem:[#allocation2 + $0xa8] sm:$0xff]
          %v2740 = vld [vmem:[#allocation2 + $0xb0] sm:$0xff]
          %v2741 = vld [vmem:[#allocation2 + $0xb8] sm:$0xff]
          %v2742 = vld [vmem:[#allocation2 + $0xc0] sm:$0xff]
          %v2743 = vld [vmem:[#allocation2 + $0xc8] sm:$0xff]
          %v2744 = vld [vmem:[#allocation2 + $0xd0] sm:$0xff]
          %v2745 = vld [vmem:[#allocation2 + $0xd8] sm:$0xff]
          %v2746 = vld [vmem:[#allocation2 + $0xe0] sm:$0xff]
          %v2747 = vld [vmem:[#allocation2 + $0xe8] sm:$0xff]
          %v2748 = vld [vmem:[#allocation2 + $0xf0] sm:$0xff]
          %v2749 = vld [vmem:[#allocation2 + $0xf8] sm:$0xff]
          %v2750 = vld [vmem:[#allocation2 + $0x100] sm:$0xff]
          %v2751 = vld [vmem:[#allocation2 + $0x108] sm:$0xff]
          %v2752 = vld [vmem:[#allocation2 + $0x110] sm:$0xff]
          %v2753 = vld [vmem:[#allocation2 + $0x118] sm:$0xff]
          %v2754 = vld [vmem:[#allocation2 + $0x120] sm:$0xff]
          %v2755 = vld [vmem:[#allocation2 + $0x128] sm:$0xff]
          %v2756 = vld [vmem:[#allocation2 + $0x130] sm:$0xff]
          %v2757 = vld [vmem:[#allocation2 + $0x138] sm:$0xff]
          %v2758 = vld [vmem:[#allocation2 + $0x140] sm:$0xff]
          %v2759 = vld [vmem:[#allocation2 + $0x148] sm:$0xff]
          %v2760 = vld [vmem:[#allocation2 + $0x150] sm:$0xff]
          %v2761 = vld [vmem:[#allocation2 + $0x158] sm:$0xff]
          %v2762 = vld [vmem:[#allocation2 + $0x160] sm:$0xff]
          %v2763 = vld [vmem:[#allocation2 + $0x168] sm:$0xff]
          %v2764 = vld [vmem:[#allocation2 + $0x170] sm:$0xff]
          %v2765 = vld [vmem:[#allocation2 + $0x178] sm:$0xff]
          %v2766 = vld [vmem:[#allocation2 + $0x180] sm:$0xff]
          %v2767 = vld [vmem:[#allocation2 + $0x188] sm:$0xff]
          %v2768 = vld [vmem:[#allocation2 + $0x190] sm:$0xff]
          %v2769 = vld [vmem:[#allocation2 + $0x198] sm:$0xff]
          %v2770 = vld [vmem:[#allocation2 + $0x1a0] sm:$0xff]
          %v2771 = vld [vmem:[#allocation2 + $0x1a8] sm:$0xff]
          %v2772 = vld [vmem:[#allocation2 + $0x1b0] sm:$0xff]
          %v2773 = vld [vmem:[#allocation2 + $0x1b8] sm:$0xff]
          %v2774 = vld [vmem:[#allocation2 + $0x1c0] sm:$0xff]
          %v2775 = vld [vmem:[#allocation2 + $0x1c8] sm:$0xff]
          %v2776 = vld [vmem:[#allocation2 + $0x1d0] sm:$0xff]
          %v2777 = vld [vmem:[#allocation2 + $0x1d8] sm:$0xff]
          %v2778 = vld [vmem:[#allocation2 + $0x1e0] sm:$0xff]
          %v2779 = vld [vmem:[#allocation2 + $0x1e8] sm:$0xff]
          %v2780 = vld [vmem:[#allocation2 + $0x1f0] sm:$0xff]
          %v2781 = vld [vmem:[#allocation2 + $0x1f8] sm:$0xff]
          %v2782 = vadd.f32 %v2718, %v2453
          %v2783 = vadd.f32 %v2719, %v2455
          %v2784 = vadd.f32 %v2720, %v2566
          %v2785 = vadd.f32 %v2721, %v2568
          %v2786 = vadd.f32 %v2722, %v2457
          %v2787 = vadd.f32 %v2723, %v2459
          %v2788 = vadd.f32 %v2724, %v2570
          %v2789 = vadd.f32 %v2725, %v2572
          %v2790 = vadd.f32 %v2726, %v2463
          %v2791 = vadd.f32 %v2727, %v2465
          %v2792 = vadd.f32 %v2728, %v2576
          %v2793 = vadd.f32 %v2729, %v2578
          %v2794 = vadd.f32 %v2730, %v2467
          %v2795 = vadd.f32 %v2731, %v2469
          %v2796 = vadd.f32 %v2732, %v2580
          %v2797 = vadd.f32 %v2733, %v2582
          %v2798 = vadd.f32 %v2734, %v2473
          %v2799 = vadd.f32 %v2735, %v2475
          %v2800 = vadd.f32 %v2736, %v2586
          %v2801 = vadd.f32 %v2737, %v2588
          %v2802 = vadd.f32 %v2738, %v2477
          %v2803 = vadd.f32 %v2739, %v2479
          %v2804 = vadd.f32 %v2740, %v2590
          %v2805 = vadd.f32 %v2741, %v2592
          %v2806 = vadd.f32 %v2742, %v2483
          %v2807 = vadd.f32 %v2743, %v2485
          %v2808 = vadd.f32 %v2744, %v2596
          %v2809 = vadd.f32 %v2745, %v2598
          %v2810 = vadd.f32 %v2746, %v2487
          %v2811 = vadd.f32 %v2747, %v2489
          %v2812 = vadd.f32 %v2748, %v2600
          %v2813 = vadd.f32 %v2749, %v2602
          %v2814 = vadd.f32 %v2750, %v2493
          %v2815 = vadd.f32 %v2751, %v2495
          %v2816 = vadd.f32 %v2752, %v2606
          %v2817 = vadd.f32 %v2753, %v2608
          %v2818 = vadd.f32 %v2754, %v2497
          %v2819 = vadd.f32 %v2755, %v2499
          %v2820 = vadd.f32 %v2756, %v2610
          %v2821 = vadd.f32 %v2757, %v2612
          %v2822 = vadd.f32 %v2758, %v2503
          %v2823 = vadd.f32 %v2759, %v2505
          %v2824 = vadd.f32 %v2760, %v2616
          %v2825 = vadd.f32 %v2761, %v2618
          %v2826 = vadd.f32 %v2762, %v2507
          %v2827 = vadd.f32 %v2763, %v2509
          %v2828 = vadd.f32 %v2764, %v2620
          %v2829 = vadd.f32 %v2765, %v2622
          %v2830 = vadd.f32 %v2766, %v2513
          %v2831 = vadd.f32 %v2767, %v2515
          %v2832 = vadd.f32 %v2768, %v2626
          %v2833 = vadd.f32 %v2769, %v2628
          %v2834 = vadd.f32 %v2770, %v2517
          %v2835 = vadd.f32 %v2771, %v2519
          %v2836 = vadd.f32 %v2772, %v2630
          %v2837 = vadd.f32 %v2773, %v2632
          %v2838 = vadd.f32 %v2774, %v2523
          %v2839 = vadd.f32 %v2775, %v2525
          %v2840 = vadd.f32 %v2776, %v2636
          %v2841 = vadd.f32 %v2777, %v2638
          %v2842 = vadd.f32 %v2778, %v2527
          %v2843 = vadd.f32 %v2779, %v2529
          %v2844 = vadd.f32 %v2780, %v2640
          %v2845 = vadd.f32 %v2781, %v2642
          %2846 = vst [vmem:[#allocation2] sm:$0xff] %v2782
          %2847 = vst [vmem:[#allocation2 + $0x8] sm:$0xff] %v2783
          %2848 = vst [vmem:[#allocation2 + $0x10] sm:$0xff] %v2784
          %2849 = vst [vmem:[#allocation2 + $0x18] sm:$0xff] %v2785
          %2850 = vst [vmem:[#allocation2 + $0x20] sm:$0xff] %v2786
          %2851 = vst [vmem:[#allocation2 + $0x28] sm:$0xff] %v2787
          %2852 = vst [vmem:[#allocation2 + $0x30] sm:$0xff] %v2788
          %2853 = vst [vmem:[#allocation2 + $0x38] sm:$0xff] %v2789
          %2854 = vst [vmem:[#allocation2 + $0x40] sm:$0xff] %v2790
          %2855 = vst [vmem:[#allocation2 + $0x48] sm:$0xff] %v2791
          %2856 = vst [vmem:[#allocation2 + $0x50] sm:$0xff] %v2792
          %2857 = vst [vmem:[#allocation2 + $0x58] sm:$0xff] %v2793
          %2858 = vst [vmem:[#allocation2 + $0x60] sm:$0xff] %v2794
          %2859 = vst [vmem:[#allocation2 + $0x68] sm:$0xff] %v2795
          %2860 = vst [vmem:[#allocation2 + $0x70] sm:$0xff] %v2796
          %2861 = vst [vmem:[#allocation2 + $0x78] sm:$0xff] %v2797
          %2862 = vst [vmem:[#allocation2 + $0x80] sm:$0xff] %v2798
          %2863 = vst [vmem:[#allocation2 + $0x88] sm:$0xff] %v2799
          %2864 = vst [vmem:[#allocation2 + $0x90] sm:$0xff] %v2800
          %2865 = vst [vmem:[#allocation2 + $0x98] sm:$0xff] %v2801
          %2866 = vst [vmem:[#allocation2 + $0xa0] sm:$0xff] %v2802
          %2867 = vst [vmem:[#allocation2 + $0xa8] sm:$0xff] %v2803
          %2868 = vst [vmem:[#allocation2 + $0xb0] sm:$0xff] %v2804
          %2869 = vst [vmem:[#allocation2 + $0xb8] sm:$0xff] %v2805
          %2870 = vst [vmem:[#allocation2 + $0xc0] sm:$0xff] %v2806
          %2871 = vst [vmem:[#allocation2 + $0xc8] sm:$0xff] %v2807
          %2872 = vst [vmem:[#allocation2 + $0xd0] sm:$0xff] %v2808
          %2873 = vst [vmem:[#allocation2 + $0xd8] sm:$0xff] %v2809
          %2874 = vst [vmem:[#allocation2 + $0xe0] sm:$0xff] %v2810
          %2875 = vst [vmem:[#allocation2 + $0xe8] sm:$0xff] %v2811
          %2876 = vst [vmem:[#allocation2 + $0xf0] sm:$0xff] %v2812
          %2877 = vst [vmem:[#allocation2 + $0xf8] sm:$0xff] %v2813
          %2878 = vst [vmem:[#allocation2 + $0x100] sm:$0xff] %v2814
          %2879 = vst [vmem:[#allocation2 + $0x108] sm:$0xff] %v2815
          %2880 = vst [vmem:[#allocation2 + $0x110] sm:$0xff] %v2816
          %2881 = vst [vmem:[#allocation2 + $0x118] sm:$0xff] %v2817
          %2882 = vst [vmem:[#allocation2 + $0x120] sm:$0xff] %v2818
          %2883 = vst [vmem:[#allocation2 + $0x128] sm:$0xff] %v2819
          %2884 = vst [vmem:[#allocation2 + $0x130] sm:$0xff] %v2820
          %2885 = vst [vmem:[#allocation2 + $0x138] sm:$0xff] %v2821
          %2886 = vst [vmem:[#allocation2 + $0x140] sm:$0xff] %v2822
          %2887 = vst [vmem:[#allocation2 + $0x148] sm:$0xff] %v2823
          %2888 = vst [vmem:[#allocation2 + $0x150] sm:$0xff] %v2824
          %2889 = vst [vmem:[#allocation2 + $0x158] sm:$0xff] %v2825
          %2890 = vst [vmem:[#allocation2 + $0x160] sm:$0xff] %v2826
          %2891 = vst [vmem:[#allocation2 + $0x168] sm:$0xff] %v2827
          %2892 = vst [vmem:[#allocation2 + $0x170] sm:$0xff] %v2828
          %2893 = vst [vmem:[#allocation2 + $0x178] sm:$0xff] %v2829
          %2894 = vst [vmem:[#allocation2 + $0x180] sm:$0xff] %v2830
          %2895 = vst [vmem:[#allocation2 + $0x188] sm:$0xff] %v2831
          %2896 = vst [vmem:[#allocation2 + $0x190] sm:$0xff] %v2832
          %2897 = vst [vmem:[#allocation2 + $0x198] sm:$0xff] %v2833
          %2898 = vst [vmem:[#allocation2 + $0x1a0] sm:$0xff] %v2834
          %2899 = vst [vmem:[#allocation2 + $0x1a8] sm:$0xff] %v2835
          %2900 = vst [vmem:[#allocation2 + $0x1b0] sm:$0xff] %v2836
          %2901 = vst [vmem:[#allocation2 + $0x1b8] sm:$0xff] %v2837
          %2902 = vst [vmem:[#allocation2 + $0x1c0] sm:$0xff] %v2838
          %2903 = vst [vmem:[#allocation2 + $0x1c8] sm:$0xff] %v2839
          %2904 = vst [vmem:[#allocation2 + $0x1d0] sm:$0xff] %v2840
          %2905 = vst [vmem:[#allocation2 + $0x1d8] sm:$0xff] %v2841
          %2906 = vst [vmem:[#allocation2 + $0x1e0] sm:$0xff] %v2842
          %2907 = vst [vmem:[#allocation2 + $0x1e8] sm:$0xff] %v2843
          %2908 = vst [vmem:[#allocation2 + $0x1f0] sm:$0xff] %v2844
          %2909 = vst [vmem:[#allocation2 + $0x1f8] sm:$0xff] %v2845
        $region60: #{mlp_forward.1} parent=35 // pred_fallthru
          _
        %p2910 = scmp.eq.s32.totalorder %s32, 3
        // Predicated region
        $region61: #{mlp_forward.1} parent=35 // pred_check
          %p2911 = pneg %p2910
        $region62: #{mlp_forward.1} parent=35 // pred_check_branch
          %2913 = sbr.rel (%p2911) target = $region64
        $region63: #{mlp_forward.1} parent=35 // pred_region
          %v2914 = vld [vmem:[#allocation2] sm:$0xff]
          %v2915 = vld [vmem:[#allocation2 + $0x8] sm:$0xff]
          %v2916 = vld [vmem:[#allocation2 + $0x10] sm:$0xff]
          %v2917 = vld [vmem:[#allocation2 + $0x18] sm:$0xff]
          %v2918 = vld [vmem:[#allocation2 + $0x20] sm:$0xff]
          %v2919 = vld [vmem:[#allocation2 + $0x28] sm:$0xff]
          %v2920 = vld [vmem:[#allocation2 + $0x30] sm:$0xff]
          %v2921 = vld [vmem:[#allocation2 + $0x38] sm:$0xff]
          %v2922 = vld [vmem:[#allocation2 + $0x40] sm:$0xff]
          %v2923 = vld [vmem:[#allocation2 + $0x48] sm:$0xff]
          %v2924 = vld [vmem:[#allocation2 + $0x50] sm:$0xff]
          %v2925 = vld [vmem:[#allocation2 + $0x58] sm:$0xff]
          %v2926 = vld [vmem:[#allocation2 + $0x60] sm:$0xff]
          %v2927 = vld [vmem:[#allocation2 + $0x68] sm:$0xff]
          %v2928 = vld [vmem:[#allocation2 + $0x70] sm:$0xff]
          %v2929 = vld [vmem:[#allocation2 + $0x78] sm:$0xff]
          %v2930 = vld [vmem:[#allocation2 + $0x80] sm:$0xff]
          %v2931 = vld [vmem:[#allocation2 + $0x88] sm:$0xff]
          %v2932 = vld [vmem:[#allocation2 + $0x90] sm:$0xff]
          %v2933 = vld [vmem:[#allocation2 + $0x98] sm:$0xff]
          %v2934 = vld [vmem:[#allocation2 + $0xa0] sm:$0xff]
          %v2935 = vld [vmem:[#allocation2 + $0xa8] sm:$0xff]
          %v2936 = vld [vmem:[#allocation2 + $0xb0] sm:$0xff]
          %v2937 = vld [vmem:[#allocation2 + $0xb8] sm:$0xff]
          %v2938 = vld [vmem:[#allocation2 + $0xc0] sm:$0xff]
          %v2939 = vld [vmem:[#allocation2 + $0xc8] sm:$0xff]
          %v2940 = vld [vmem:[#allocation2 + $0xd0] sm:$0xff]
          %v2941 = vld [vmem:[#allocation2 + $0xd8] sm:$0xff]
          %v2942 = vld [vmem:[#allocation2 + $0xe0] sm:$0xff]
          %v2943 = vld [vmem:[#allocation2 + $0xe8] sm:$0xff]
          %v2944 = vld [vmem:[#allocation2 + $0xf0] sm:$0xff]
          %v2945 = vld [vmem:[#allocation2 + $0xf8] sm:$0xff]
          %v2946 = vld [vmem:[#allocation2 + $0x100] sm:$0xff]
          %v2947 = vld [vmem:[#allocation2 + $0x108] sm:$0xff]
          %v2948 = vld [vmem:[#allocation2 + $0x110] sm:$0xff]
          %v2949 = vld [vmem:[#allocation2 + $0x118] sm:$0xff]
          %v2950 = vld [vmem:[#allocation2 + $0x120] sm:$0xff]
          %v2951 = vld [vmem:[#allocation2 + $0x128] sm:$0xff]
          %v2952 = vld [vmem:[#allocation2 + $0x130] sm:$0xff]
          %v2953 = vld [vmem:[#allocation2 + $0x138] sm:$0xff]
          %v2954 = vld [vmem:[#allocation2 + $0x140] sm:$0xff]
          %v2955 = vld [vmem:[#allocation2 + $0x148] sm:$0xff]
          %v2956 = vld [vmem:[#allocation2 + $0x150] sm:$0xff]
          %v2957 = vld [vmem:[#allocation2 + $0x158] sm:$0xff]
          %v2958 = vld [vmem:[#allocation2 + $0x160] sm:$0xff]
          %v2959 = vld [vmem:[#allocation2 + $0x168] sm:$0xff]
          %v2960 = vld [vmem:[#allocation2 + $0x170] sm:$0xff]
          %v2961 = vld [vmem:[#allocation2 + $0x178] sm:$0xff]
          %v2962 = vld [vmem:[#allocation2 + $0x180] sm:$0xff]
          %v2963 = vld [vmem:[#allocation2 + $0x188] sm:$0xff]
          %v2964 = vld [vmem:[#allocation2 + $0x190] sm:$0xff]
          %v2965 = vld [vmem:[#allocation2 + $0x198] sm:$0xff]
          %v2966 = vld [vmem:[#allocation2 + $0x1a0] sm:$0xff]
          %v2967 = vld [vmem:[#allocation2 + $0x1a8] sm:$0xff]
          %v2968 = vld [vmem:[#allocation2 + $0x1b0] sm:$0xff]
          %v2969 = vld [vmem:[#allocation2 + $0x1b8] sm:$0xff]
          %v2970 = vld [vmem:[#allocation2 + $0x1c0] sm:$0xff]
          %v2971 = vld [vmem:[#allocation2 + $0x1c8] sm:$0xff]
          %v2972 = vld [vmem:[#allocation2 + $0x1d0] sm:$0xff]
          %v2973 = vld [vmem:[#allocation2 + $0x1d8] sm:$0xff]
          %v2974 = vld [vmem:[#allocation2 + $0x1e0] sm:$0xff]
          %v2975 = vld [vmem:[#allocation2 + $0x1e8] sm:$0xff]
          %v2976 = vld [vmem:[#allocation2 + $0x1f0] sm:$0xff]
          %v2977 = vld [vmem:[#allocation2 + $0x1f8] sm:$0xff]
          %v2978 = vadd.f32 %v2914, %v2453
          %v2979 = vadd.f32 %v2915, %v2455
          %v2980 = vadd.f32 %v2916, %v2566
          %v2981 = vadd.f32 %v2917, %v2568
          %v2982 = vadd.f32 %v2918, %v2457
          %v2983 = vadd.f32 %v2919, %v2459
          %v2984 = vadd.f32 %v2920, %v2570
          %v2985 = vadd.f32 %v2921, %v2572
          %v2986 = vadd.f32 %v2922, %v2463
          %v2987 = vadd.f32 %v2923, %v2465
          %v2988 = vadd.f32 %v2924, %v2576
          %v2989 = vadd.f32 %v2925, %v2578
          %v2990 = vadd.f32 %v2926, %v2467
          %v2991 = vadd.f32 %v2927, %v2469
          %v2992 = vadd.f32 %v2928, %v2580
          %v2993 = vadd.f32 %v2929, %v2582
          %v2994 = vadd.f32 %v2930, %v2473
          %v2995 = vadd.f32 %v2931, %v2475
          %v2996 = vadd.f32 %v2932, %v2586
          %v2997 = vadd.f32 %v2933, %v2588
          %v2998 = vadd.f32 %v2934, %v2477
          %v2999 = vadd.f32 %v2935, %v2479
          %v3000 = vadd.f32 %v2936, %v2590
          %v3001 = vadd.f32 %v2937, %v2592
          %v3002 = vadd.f32 %v2938, %v2483
          %v3003 = vadd.f32 %v2939, %v2485
          %v3004 = vadd.f32 %v2940, %v2596
          %v3005 = vadd.f32 %v2941, %v2598
          %v3006 = vadd.f32 %v2942, %v2487
          %v3007 = vadd.f32 %v2943, %v2489
          %v3008 = vadd.f32 %v2944, %v2600
          %v3009 = vadd.f32 %v2945, %v2602
          %v3010 = vadd.f32 %v2946, %v2493
          %v3011 = vadd.f32 %v2947, %v2495
          %v3012 = vadd.f32 %v2948, %v2606
          %v3013 = vadd.f32 %v2949, %v2608
          %v3014 = vadd.f32 %v2950, %v2497
          %v3015 = vadd.f32 %v2951, %v2499
          %v3016 = vadd.f32 %v2952, %v2610
          %v3017 = vadd.f32 %v2953, %v2612
          %v3018 = vadd.f32 %v2954, %v2503
          %v3019 = vadd.f32 %v2955, %v2505
          %v3020 = vadd.f32 %v2956, %v2616
          %v3021 = vadd.f32 %v2957, %v2618
          %v3022 = vadd.f32 %v2958, %v2507
          %v3023 = vadd.f32 %v2959, %v2509
          %v3024 = vadd.f32 %v2960, %v2620
          %v3025 = vadd.f32 %v2961, %v2622
          %v3026 = vadd.f32 %v2962, %v2513
          %v3027 = vadd.f32 %v2963, %v2515
          %v3028 = vadd.f32 %v2964, %v2626
          %v3029 = vadd.f32 %v2965, %v2628
          %v3030 = vadd.f32 %v2966, %v2517
          %v3031 = vadd.f32 %v2967, %v2519
          %v3032 = vadd.f32 %v2968, %v2630
          %v3033 = vadd.f32 %v2969, %v2632
          %v3034 = vadd.f32 %v2970, %v2523
          %v3035 = vadd.f32 %v2971, %v2525
          %v3036 = vadd.f32 %v2972, %v2636
          %v3037 = vadd.f32 %v2973, %v2638
          %v3038 = vadd.f32 %v2974, %v2527
          %v3039 = vadd.f32 %v2975, %v2529
          %v3040 = vadd.f32 %v2976, %v2640
          %v3041 = vadd.f32 %v2977, %v2642
          %v3042 = vpack.c.bf16 %v2982, %v2978
          %v3043 = vpack.c.bf16 %v2983, %v2979
          %v3044 = vpack.c.bf16 %v2984, %v2980
          %v3045 = vpack.c.bf16 %v2985, %v2981
          %v3046 = vpack.c.bf16 %v2990, %v2986
          %v3047 = vpack.c.bf16 %v2991, %v2987
          %v3048 = vpack.c.bf16 %v2992, %v2988
          %v3049 = vpack.c.bf16 %v2993, %v2989
          %v3050 = vpack.c.bf16 %v2998, %v2994
          %v3051 = vpack.c.bf16 %v2999, %v2995
          %v3052 = vpack.c.bf16 %v3000, %v2996
          %v3053 = vpack.c.bf16 %v3001, %v2997
          %v3054 = vpack.c.bf16 %v3006, %v3002
          %v3055 = vpack.c.bf16 %v3007, %v3003
          %v3056 = vpack.c.bf16 %v3008, %v3004
          %v3057 = vpack.c.bf16 %v3009, %v3005
          %v3058 = vpack.c.bf16 %v3014, %v3010
          %v3059 = vpack.c.bf16 %v3015, %v3011
          %v3060 = vpack.c.bf16 %v3016, %v3012
          %v3061 = vpack.c.bf16 %v3017, %v3013
          %v3062 = vpack.c.bf16 %v3022, %v3018
          %v3063 = vpack.c.bf16 %v3023, %v3019
          %v3064 = vpack.c.bf16 %v3024, %v3020
          %v3065 = vpack.c.bf16 %v3025, %v3021
          %v3066 = vpack.c.bf16 %v3030, %v3026
          %v3067 = vpack.c.bf16 %v3031, %v3027
          %v3068 = vpack.c.bf16 %v3032, %v3028
          %v3069 = vpack.c.bf16 %v3033, %v3029
          %v3070 = vpack.c.bf16 %v3038, %v3034
          %v3071 = vpack.c.bf16 %v3039, %v3035
          %v3072 = vpack.c.bf16 %v3040, %v3036
          %v3073 = vpack.c.bf16 %v3041, %v3037
          %v3106 = vunpack.c.l.b16 %v3042
          %v3107 = vunpack.c.l.b16 %v3043
          %v3108 = vunpack.c.l.b16 %v3044
          %v3109 = vunpack.c.l.b16 %v3045
          %v3110 = vunpack.c.h.b16 %v3042
          %v3111 = vunpack.c.h.b16 %v3043
          %v3112 = vunpack.c.h.b16 %v3044
          %v3113 = vunpack.c.h.b16 %v3045
          %v3114 = vunpack.c.l.b16 %v3046
          %v3115 = vunpack.c.l.b16 %v3047
          %v3116 = vunpack.c.l.b16 %v3048
          %v3117 = vunpack.c.l.b16 %v3049
          %v3118 = vunpack.c.h.b16 %v3046
          %v3119 = vunpack.c.h.b16 %v3047
          %v3120 = vunpack.c.h.b16 %v3048
          %v3121 = vunpack.c.h.b16 %v3049
          %v3122 = vunpack.c.l.b16 %v3050
          %v3123 = vunpack.c.l.b16 %v3051
          %v3124 = vunpack.c.l.b16 %v3052
          %v3125 = vunpack.c.l.b16 %v3053
          %v3126 = vunpack.c.h.b16 %v3050
          %v3127 = vunpack.c.h.b16 %v3051
          %v3128 = vunpack.c.h.b16 %v3052
          %v3129 = vunpack.c.h.b16 %v3053
          %v3130 = vunpack.c.l.b16 %v3054
          %v3131 = vunpack.c.l.b16 %v3055
          %v3132 = vunpack.c.l.b16 %v3056
          %v3133 = vunpack.c.l.b16 %v3057
          %v3134 = vunpack.c.h.b16 %v3054
          %v3135 = vunpack.c.h.b16 %v3055
          %v3136 = vunpack.c.h.b16 %v3056
          %v3137 = vunpack.c.h.b16 %v3057
          %v3138 = vunpack.c.l.b16 %v3058
          %v3139 = vunpack.c.l.b16 %v3059
          %v3140 = vunpack.c.l.b16 %v3060
          %v3141 = vunpack.c.l.b16 %v3061
          %v3142 = vunpack.c.h.b16 %v3058
          %v3143 = vunpack.c.h.b16 %v3059
          %v3144 = vunpack.c.h.b16 %v3060
          %v3145 = vunpack.c.h.b16 %v3061
          %v3146 = vunpack.c.l.b16 %v3062
          %v3147 = vunpack.c.l.b16 %v3063
          %v3148 = vunpack.c.l.b16 %v3064
          %v3149 = vunpack.c.l.b16 %v3065
          %v3150 = vunpack.c.h.b16 %v3062
          %v3151 = vunpack.c.h.b16 %v3063
          %v3152 = vunpack.c.h.b16 %v3064
          %v3153 = vunpack.c.h.b16 %v3065
          %v3154 = vunpack.c.l.b16 %v3066
          %v3155 = vunpack.c.l.b16 %v3067
          %v3156 = vunpack.c.l.b16 %v3068
          %v3157 = vunpack.c.l.b16 %v3069
          %v3158 = vunpack.c.h.b16 %v3066
          %v3159 = vunpack.c.h.b16 %v3067
          %v3160 = vunpack.c.h.b16 %v3068
          %v3161 = vunpack.c.h.b16 %v3069
          %v3162 = vunpack.c.l.b16 %v3070
          %v3163 = vunpack.c.l.b16 %v3071
          %v3164 = vunpack.c.l.b16 %v3072
          %v3165 = vunpack.c.l.b16 %v3073
          %v3166 = vunpack.c.h.b16 %v3070
          %v3167 = vunpack.c.h.b16 %v3071
          %v3168 = vunpack.c.h.b16 %v3072
          %v3169 = vunpack.c.h.b16 %v3073
          %v3170 = vpack.c.b16 %v3107, %v3106
          %v3171 = vpack.c.b16 %v3109, %v3108
          %v3172 = vpack.c.b16 %v3111, %v3110
          %v3173 = vpack.c.b16 %v3113, %v3112
          %v3174 = vpack.c.b16 %v3115, %v3114
          %v3175 = vpack.c.b16 %v3117, %v3116
          %v3176 = vpack.c.b16 %v3119, %v3118
          %v3177 = vpack.c.b16 %v3121, %v3120
          %v3178 = vpack.c.b16 %v3123, %v3122
          %v3179 = vpack.c.b16 %v3125, %v3124
          %v3180 = vpack.c.b16 %v3127, %v3126
          %v3181 = vpack.c.b16 %v3129, %v3128
          %v3182 = vpack.c.b16 %v3131, %v3130
          %v3183 = vpack.c.b16 %v3133, %v3132
          %v3184 = vpack.c.b16 %v3135, %v3134
          %v3185 = vpack.c.b16 %v3137, %v3136
          %v3186 = vpack.c.b16 %v3139, %v3138
          %v3187 = vpack.c.b16 %v3141, %v3140
          %v3188 = vpack.c.b16 %v3143, %v3142
          %v3189 = vpack.c.b16 %v3145, %v3144
          %v3190 = vpack.c.b16 %v3147, %v3146
          %v3191 = vpack.c.b16 %v3149, %v3148
          %v3192 = vpack.c.b16 %v3151, %v3150
          %v3193 = vpack.c.b16 %v3153, %v3152
          %v3194 = vpack.c.b16 %v3155, %v3154
          %v3195 = vpack.c.b16 %v3157, %v3156
          %v3196 = vpack.c.b16 %v3159, %v3158
          %v3197 = vpack.c.b16 %v3161, %v3160
          %v3198 = vpack.c.b16 %v3163, %v3162
          %v3199 = vpack.c.b16 %v3165, %v3164
          %v3200 = vpack.c.b16 %v3167, %v3166
          %v3201 = vpack.c.b16 %v3169, %v3168
          %3234 = vst [vmem:[%s346] sm:$0xff] %v3170
          %3235 = vst [vmem:[%s346 + $0x8] sm:$0xff] %v3171
          %3236 = vst [vmem:[%s346 + $0x10] sm:$0xff] %v3172
          %3237 = vst [vmem:[%s346 + $0x18] sm:$0xff] %v3173
          %3238 = vst [vmem:[%s346 + $0x20] sm:$0xff] %v3174
          %3239 = vst [vmem:[%s346 + $0x28] sm:$0xff] %v3175
          %3240 = vst [vmem:[%s346 + $0x30] sm:$0xff] %v3176
          %3241 = vst [vmem:[%s346 + $0x38] sm:$0xff] %v3177
          %3242 = vst [vmem:[%s346 + $0x40] sm:$0xff] %v3178
          %3243 = vst [vmem:[%s346 + $0x48] sm:$0xff] %v3179
          %3244 = vst [vmem:[%s346 + $0x50] sm:$0xff] %v3180
          %3245 = vst [vmem:[%s346 + $0x58] sm:$0xff] %v3181
          %3246 = vst [vmem:[%s346 + $0x60] sm:$0xff] %v3182
          %3247 = vst [vmem:[%s346 + $0x68] sm:$0xff] %v3183
          %3248 = vst [vmem:[%s346 + $0x70] sm:$0xff] %v3184
          %3249 = vst [vmem:[%s346 + $0x78] sm:$0xff] %v3185
          %3250 = vst [vmem:[%s346 + $0x80] sm:$0xff] %v3186
          %3251 = vst [vmem:[%s346 + $0x88] sm:$0xff] %v3187
          %3252 = vst [vmem:[%s346 + $0x90] sm:$0xff] %v3188
          %3253 = vst [vmem:[%s346 + $0x98] sm:$0xff] %v3189
          %3254 = vst [vmem:[%s346 + $0xa0] sm:$0xff] %v3190
          %3255 = vst [vmem:[%s346 + $0xa8] sm:$0xff] %v3191
          %3256 = vst [vmem:[%s346 + $0xb0] sm:$0xff] %v3192
          %3257 = vst [vmem:[%s346 + $0xb8] sm:$0xff] %v3193
          %3258 = vst [vmem:[%s346 + $0xc0] sm:$0xff] %v3194
          %3259 = vst [vmem:[%s346 + $0xc8] sm:$0xff] %v3195
          %3260 = vst [vmem:[%s346 + $0xd0] sm:$0xff] %v3196
          %3261 = vst [vmem:[%s346 + $0xd8] sm:$0xff] %v3197
          %3262 = vst [vmem:[%s346 + $0xe0] sm:$0xff] %v3198
          %3263 = vst [vmem:[%s346 + $0xe8] sm:$0xff] %v3199
          %3264 = vst [vmem:[%s346 + $0xf0] sm:$0xff] %v3200
          %3265 = vst [vmem:[%s346 + $0xf8] sm:$0xff] %v3201
        $region64: #{mlp_forward.1} parent=35 // pred_fallthru
          _
        %s3266 = sand.u32 %s151, 1
        %s3267 = scalar_lea.sflag [#allocation5], %s3266
        %s3268 = sand.u32 %s151, 1
        %s3269 = smul.addr %s3268, 256
        %s3270 = scalar_lea.vmem [#allocation11], %s3269
        // Predicated region
        $region65: #{mlp_forward.1} parent=35 // pred_check
          %p3271 = pneg %p161
        $region66: #{mlp_forward.1} parent=35 // pred_check_branch
          %3273 = sbr.rel (%p3271) target = $region68
        $region67: #{mlp_forward.1} parent=35 // pred_region
          %s3274 = smul.u32 16, %s31
          %s3276 = ssub.s32 4096, 4096
          %3277 = vsyncadd %s3267, %s3276
          %s3278 = smul.addr %s3274, 4
          %s3279 = smul.addr %s3278, 64
          %s3280 = scalar_lea.hbm %s4, %s3279
          %s3281 = sshll.u32 %s3270, 4
          %s3282 = int_to_ptr.vmem [resolvable:$true] %s3281
          %3287 = dma.vmem_to_hbm [thread:$0]  %s3282, 4096, %s3280, %s3267, 256, 256, 16
        $region68: #{mlp_forward.1} parent=35 // pred_fallthru
          _
      $region36: #{mlp_forward.1} parent=5 // pred_fallthru
        _
      %p3288 = scmp.le.s32.totalorder 2, %s22
      // Predicated region
      $region69: #{mlp_forward.1} parent=5 // pred_check
        %p3289 = pneg %p3288
      $region70: #{mlp_forward.1} parent=5 // pred_check_branch
        %3291 = sbr.rel (%p3289) target = $region72
      $region71: #{mlp_forward.1} parent=5 // pred_region
        %s3292 = ssub.s32 %s22, 2
        // Predicated region
        $region73: #{mlp_forward.1} parent=71 // pred_check
          %p3293 = pneg %p167
        $region74: #{mlp_forward.1} parent=71 // pred_check_branch
          %3295 = sbr.rel (%p3293) target = $region76
        $region75: #{mlp_forward.1} parent=71 // pred_region
          %s3296 = sand.u32 %s152, 1
          %s3297 = scalar_lea.sflag [#allocation5], %s3296
          %s3298 = sand.u32 %s152, 1
          %s3299 = smul.addr %s3298, 256
          %s3300 = scalar_lea.vmem [#allocation11], %s3299
          %3301 = dma.done %s3297, 4096
        $region76: #{mlp_forward.1} parent=71 // pred_fallthru
          _
      $region72: #{mlp_forward.1} parent=5 // pred_fallthru
        _
    $region6: #{mlp_forward.1} parent=1 // loop_footer
      %s26 = sadd.s32 1, %s22
    $region7: #{mlp_forward.1} parent=1 // loop_footer_branch
      %21 = sbr.rel target = $region3
    $region8: #{mlp_forward.1} parent=1 // loop_exit
      _
    %3302 = vsyncpa [#allocation4], 1
    %s3303 = scalar_lea.sflag [#allocation4], 1
    %3304 = vsyncpa %s3303, 1
    %3305 = vsyncpa [#allocation7], 1
    %s3306 = scalar_lea.sflag [#allocation7], 1
    %3307 = vsyncpa %s3306, 1
    %3308 = vsyncpa [#allocation10], 1
    %s3309 = scalar_lea.sflag [#allocation10], 1
    %3310 = vsyncpa %s3309, 1
    %3311 = vsyncpa [#allocation5], 1
    %s3312 = scalar_lea.sflag [#allocation5], 1
    %3313 = vsyncpa %s3312, 1

</llo_original>
